<compile_context>
chip_gen: v6e
topology: v6e:2x2x1
jax: 0.10.0
libtpu: 0.0.40
codegen_flags: <defaults>
</compile_context>

<pallas_src>
import jax
import jax.numpy as jnp
from jax import lax
from jax.experimental import pallas as pl
from jax.experimental.pallas import tpu as pltpu


# ---------------------------------------------------------------------------
# Kernel 1: fused  BN1 -> ReLU -> Conv1(1x1x1 as matmul) -> BN2 -> ReLU
#   (BN1 applied as scale/shift s1,t1; BN2 pre-folded into w1p/b1p.)
#   Output is stored as bfloat16 to halve HBM traffic into stage 2.
# ---------------------------------------------------------------------------
def stage1_kernel(x_ref, s1_ref, t1_ref, w_ref, b_ref, o_ref):
    h = jnp.maximum(x_ref[...] * s1_ref[...] + t1_ref[...], 0.0)     # BN1 + ReLU (f32)
    y = jnp.dot(h.astype(jnp.bfloat16), w_ref[...],                  # 1x1x1 conv on MXU
                preferred_element_type=jnp.float32)
    y = jnp.maximum(y + b_ref[...], 0.0)                             # (+BN2 folded) + ReLU
    o_ref[...] = y.astype(jnp.bfloat16)


def run_stage1(x_flat, s1, t1, w1p, b1p, *, tm=2048):
    M, Cin = x_flat.shape
    C2 = w1p.shape[1]
    tm = min(tm, M)
    Mp = pl.cdiv(M, tm) * tm
    xp = x_flat if Mp == M else jnp.pad(x_flat, ((0, Mp - M), (0, 0)))
    out = pl.pallas_call(
        stage1_kernel,
        out_shape=jax.ShapeDtypeStruct((Mp, C2), jnp.bfloat16),
        grid_spec=pltpu.PrefetchScalarGridSpec(
            num_scalar_prefetch=0,
            grid=(Mp // tm,),
            in_specs=[
                pl.BlockSpec((tm, Cin), lambda i: (i, 0)),
                pl.BlockSpec((1, Cin), lambda i: (0, 0)),
                pl.BlockSpec((1, Cin), lambda i: (0, 0)),
                pl.BlockSpec((Cin, C2), lambda i: (0, 0)),
                pl.BlockSpec((1, C2), lambda i: (0, 0)),
            ],
            out_specs=pl.BlockSpec((tm, C2), lambda i: (i, 0)),
        ),
        compiler_params=pltpu.CompilerParams(dimension_semantics=("parallel",)),
    )(xp, s1, t1, w1p, b1p)
    return out if Mp == M else out[:M]


# ---------------------------------------------------------------------------
# Kernel 2: Conv3d 3x3x3 (padding=1) + fused channel-concat with the original x.
#   Grid = (N, D).  Each step receives the three padded activation planes
#   (d, d+1, d+2) of hp (same array passed three times with shifted index_maps),
#   builds the (H*W, 27*C2) im2col tile in VMEM, and does a single MXU matmul
#   against the VMEM-resident (27*C2, Cout) weight.  The output block is the
#   full (H, W, Cout+Cin) slab: conv result in the leading Cout channels and
#   the original input x in the trailing Cin channels (torch.cat fused).
# ---------------------------------------------------------------------------
def stage2_kernel(h0_ref, h1_ref, h2_ref, x_ref, w_ref, b_ref, o_ref):
    H, W, _ = x_ref.shape                       # static block dims
    Cout = w_ref.shape[1]

    planes = (h0_ref[...], h1_ref[...], h2_ref[...])   # each (H+2, W+2, C2) bf16
    cols = []
    for plane in planes:                        # kd-major tap order ...
        for kh in range(3):                     # ... then kh ...
            for kw in range(3):                 # ... then kw (matches weight reshape)
                cols.append(plane[kh:kh + H, kw:kw + W, :])
    col = jnp.concatenate(cols, axis=-1)        # (H, W, 27*C2) bf16, all in VMEM
    col2 = col.reshape(H * W, col.shape[-1])    # (H*W, 27*C2)

    y = jnp.dot(col2, w_ref[...], preferred_element_type=jnp.float32)
    y = y + b_ref[...]                          # (H*W, Cout) f32

    out = jnp.concatenate(
        [y.reshape(H, W, Cout), x_ref[...].astype(jnp.float32)], axis=-1)
    o_ref[...] = out                            # single full-block store


def run_stage2(hp, x5, w2col, b2):
    N, Dp2, Hp2, Wp2, C2 = hp.shape
    D, H, W = Dp2 - 2, Hp2 - 2, Wp2 - 2
    Cin = x5.shape[-1]
    Cout = w2col.shape[1]

    def hp_spec(kd):
        # Plane d+kd of the padded activation (block size 1 along D+2, so the
        # block index equals the element index -> no overlapping-window issue).
        return pl.BlockSpec((None, None, Hp2, Wp2, C2),
                            lambda n, d, kd=kd: (n, d + kd, 0, 0, 0))

    return pl.pallas_call(
        stage2_kernel,
        out_shape=jax.ShapeDtypeStruct((N, D, H, W, Cout + Cin), jnp.float32),
        grid_spec=pltpu.PrefetchScalarGridSpec(
            num_scalar_prefetch=0,
            grid=(N, D),
            in_specs=[
                hp_spec(0), hp_spec(1), hp_spec(2),
                pl.BlockSpec((None, None, H, W, Cin),
                             lambda n, d: (n, d, 0, 0, 0)),
                # weights / bias: constant index_map -> DMA'd once, VMEM-resident
                pl.BlockSpec((27 * C2, Cout), lambda n, d: (0, 0)),
                pl.BlockSpec((1, Cout), lambda n, d: (0, 0)),
            ],
            out_specs=pl.BlockSpec((None, None, H, W, Cout + Cin),
                                   lambda n, d: (n, d, 0, 0, 0)),
        ),
        compiler_params=pltpu.CompilerParams(
            dimension_semantics=("parallel", "parallel")),
    )(hp, hp, hp, x5, w2col, b2)


# ---------------------------------------------------------------------------
# Parameter init (deterministic, matching nn.Module shapes)
# ---------------------------------------------------------------------------
def init_params(key, in_channels, out_channels):
    C2 = 4 * out_channels
    ks = jax.random.split(key, 12)
    p = {
        "bn1_gamma": 1.0 + 0.1 * jax.random.normal(ks[0], (in_channels,), jnp.float32),
        "bn1_beta": 0.1 * jax.random.normal(ks[1], (in_channels,), jnp.float32),
        "bn1_mean": 0.1 * jax.random.normal(ks[2], (in_channels,), jnp.float32),
        "bn1_var": 1.0 + 0.1 * jnp.abs(jax.random.normal(ks[3], (in_channels,), jnp.float32)),
        "w1": 0.2 * jax.random.normal(ks[4], (C2, in_channels), jnp.float32),  # from (out,in,1,1,1)
        "b1": 0.1 * jax.random.normal(ks[5], (C2,), jnp.float32),
        "bn2_gamma": 1.0 + 0.1 * jax.random.normal(ks[6], (C2,), jnp.float32),
        "bn2_beta": 0.1 * jax.random.normal(ks[7], (C2,), jnp.float32),
        "bn2_mean": 0.1 * jax.random.normal(ks[8], (C2,), jnp.float32),
        "bn2_var": 1.0 + 0.1 * jnp.abs(jax.random.normal(ks[9], (C2,), jnp.float32)),
        "w2": 0.1 * jax.random.normal(ks[10], (out_channels, C2, 3, 3, 3), jnp.float32),
        "b2": 0.1 * jax.random.normal(ks[11], (out_channels,), jnp.float32),
    }
    return p


# ---------------------------------------------------------------------------
# Forward (Pallas path)
# ---------------------------------------------------------------------------
def bottleneck_forward(x_ncdhw, p, eps=1e-5):
    N, Cin, D, H, W = x_ncdhw.shape
    C2 = p["w1"].shape[0]
    Cout = p["w2"].shape[0]

    x = jnp.transpose(x_ncdhw, (0, 2, 3, 4, 1))            # NDHWC, f32

    # BN1 -> scale/shift
    s1 = p["bn1_gamma"] / jnp.sqrt(p["bn1_var"] + eps)
    t1 = p["bn1_beta"] - p["bn1_mean"] * s1
    # BN2 folded into conv1 weights/bias: relu(bn2(h@w1+b1)) == relu(h@w1p + b1p)
    s2 = p["bn2_gamma"] / jnp.sqrt(p["bn2_var"] + eps)
    t2 = p["bn2_beta"] - p["bn2_mean"] * s2
    w1p = (p["w1"].T * s2[None, :]).astype(jnp.bfloat16)   # (Cin, C2) bf16
    b1p = (p["b1"] * s2 + t2).reshape(1, C2)                # f32

    x_flat = x.reshape(-1, Cin)
    h = run_stage1(x_flat, s1.reshape(1, Cin), t1.reshape(1, Cin), w1p, b1p)
    h5 = h.reshape(N, D, H, W, C2)                          # bf16

    # Single zero-padded copy of the activation (the only extra pass; no
    # 27-way tap materialization).
    hp = jnp.pad(h5, ((0, 0), (1, 1), (1, 1), (1, 1), (0, 0)))

    # conv2 weights reshaped to (27*C2, Cout), row order (kd, kh, kw, cin).
    w2col = jnp.transpose(p["w2"], (2, 3, 4, 1, 0)).reshape(27 * C2, Cout)
    w2col = w2col.astype(jnp.bfloat16)
    b2 = p["b2"].reshape(1, Cout)

    out = run_stage2(hp, x, w2col, b2)                      # (N, D, H, W, Cout+Cin)
    return jnp.transpose(out, (0, 4, 1, 2, 3))              # back to NCDHW


# ---------------------------------------------------------------------------
# Pure-JAX reference (same bf16 quantization of intermediates, f32 accumulation)
# ---------------------------------------------------------------------------
def bottleneck_reference(x_ncdhw, p, eps=1e-5):
    N, Cin, D, H, W = x_ncdhw.shape
    C2 = p["w1"].shape[0]
    x = jnp.transpose(x_ncdhw, (0, 2, 3, 4, 1))
    s1 = p["bn1_gamma"] / jnp.sqrt(p["bn1_var"] + eps)
    t1 = p["bn1_beta"] - p["bn1_mean"] * s1
    s2 = p["bn2_gamma"] / jnp.sqrt(p["bn2_var"] + eps)
    t2 = p["bn2_beta"] - p["bn2_mean"] * s2
    hb = jnp.maximum(x * s1 + t1, 0.0)
    w1p = (p["w1"].T * s2[None, :]).astype(jnp.bfloat16)
    b1p = p["b1"] * s2 + t2
    y = jnp.dot(hb.reshape(-1, Cin).astype(jnp.bfloat16), w1p,
                preferred_element_type=jnp.float32) + b1p
    h = jnp.maximum(y, 0.0).astype(jnp.bfloat16).reshape(N, D, H, W, C2)
    w_dhwio = jnp.transpose(p["w2"], (2, 3, 4, 1, 0)).astype(jnp.bfloat16)
    out = lax.conv_general_dilated(
        h, w_dhwio, window_strides=(1, 1, 1),
        padding=((1, 1), (1, 1), (1, 1)),
        dimension_numbers=("NDHWC", "DHWIO", "NDHWC"),
        preferred_element_type=jnp.float32) + p["b2"]
    cat = jnp.concatenate([out, x], axis=-1)
    return jnp.transpose(cat, (0, 4, 1, 2, 3))


if __name__ == "__main__":
    key = jax.random.PRNGKey(0)
    kx, kp = jax.random.split(key)

    N, Cin, Cout = 2, 4, 4
    D = H = W = 8
    x = jax.random.normal(kx, (N, Cin, D, H, W), jnp.float32)   # NCDHW like PyTorch
    params = init_params(kp, Cin, Cout)

    fwd = jax.jit(bottleneck_forward)
    out = jax.block_until_ready(fwd(x, params))

    assert out.shape == (N, Cout + Cin, D, H, W), out.shape

    ref = jax.block_until_ready(bottleneck_reference(x, params))
    assert jnp.allclose(out, ref, rtol=2e-2, atol=2e-2), \
        float(jnp.max(jnp.abs(out - ref)))

    print("KERNEL_OK")
</pallas_src>

<mosaic_0001>
module attributes {stable_mosaic.version = 11 : i64} {
  func.func @stage1_kernel(%arg0: i32, %arg1: memref<1024x4xf32, #tpu.memory_space<vmem>>, %arg2: memref<1x4xf32, #tpu.memory_space<vmem>>, %arg3: memref<1x4xf32, #tpu.memory_space<vmem>>, %arg4: memref<4x16xbf16, #tpu.memory_space<vmem>>, %arg5: memref<1x16xf32, #tpu.memory_space<vmem>>, %arg6: memref<1024x16xbf16, #tpu.memory_space<vmem>>) attributes {dimension_semantics = [#tpu.dimension_semantics<parallel>], iteration_bounds = array<i64: 1>, scalar_prefetch = 0 : i64, scratch_operands = 0 : i64, tpu.core_type = #tpu.core_type<tc>, window_params = [{transform_indices = @transform_0, window_bounds = array<i64: 1024, 4>}, {pipeline_mode = #tpu.pipeline_mode<synchronous>, transform_indices = @transform_1, window_bounds = array<i64: 1, 4>}, {pipeline_mode = #tpu.pipeline_mode<synchronous>, transform_indices = @transform_2, window_bounds = array<i64: 1, 4>}, {pipeline_mode = #tpu.pipeline_mode<synchronous>, transform_indices = @transform_3, window_bounds = array<i64: 4, 16>}, {pipeline_mode = #tpu.pipeline_mode<synchronous>, transform_indices = @transform_4, window_bounds = array<i64: 1, 16>}, {transform_indices = @transform_5, window_bounds = array<i64: 1024, 16>}]} {
    %c0 = arith.constant 0 : index
    %c0_0 = arith.constant 0 : index
    %0 = vector.load %arg1[%c0, %c0_0] : memref<1024x4xf32, #tpu.memory_space<vmem>>, vector<1024x4xf32>
    %c0_1 = arith.constant 0 : index
    %c0_2 = arith.constant 0 : index
    %1 = vector.load %arg2[%c0_1, %c0_2] : memref<1x4xf32, #tpu.memory_space<vmem>>, vector<1x4xf32>
    %2 = vector.broadcast %1 : vector<1x4xf32> to vector<1024x4xf32>
    %3 = arith.mulf %0, %2 : vector<1024x4xf32>
    %c0_3 = arith.constant 0 : index
    %c0_4 = arith.constant 0 : index
    %4 = vector.load %arg3[%c0_3, %c0_4] : memref<1x4xf32, #tpu.memory_space<vmem>>, vector<1x4xf32>
    %5 = vector.broadcast %4 : vector<1x4xf32> to vector<1024x4xf32>
    %6 = arith.addf %3, %5 : vector<1024x4xf32>
    %cst = arith.constant 0.000000e+00 : f32
    %7 = vector.broadcast %cst : f32 to vector<1024x4xf32>
    %8 = arith.maximumf %6, %7 : vector<1024x4xf32>
    %9 = arith.truncf %8 : vector<1024x4xf32> to vector<1024x4xbf16>
    %c0_5 = arith.constant 0 : index
    %c0_6 = arith.constant 0 : index
    %10 = vector.load %arg4[%c0_5, %c0_6] : memref<4x16xbf16, #tpu.memory_space<vmem>>, vector<4x16xbf16>
    %cst_7 = arith.constant dense<0.000000e+00> : vector<1024x16xf32>
    %11 = tpu.matmul %9, %10, %cst_7 {dimension_numbers = #tpu.dot_dimension_numbers<[1], [0], [0], [1], [0, 0, 1, 1], [], []>} : vector<1024x4xbf16>, vector<4x16xbf16>, vector<1024x16xf32> -> vector<1024x16xf32>
    %c0_8 = arith.constant 0 : index
    %c0_9 = arith.constant 0 : index
    %12 = vector.load %arg5[%c0_8, %c0_9] : memref<1x16xf32, #tpu.memory_space<vmem>>, vector<1x16xf32>
    %13 = vector.broadcast %12 : vector<1x16xf32> to vector<1024x16xf32>
    %14 = arith.addf %11, %13 : vector<1024x16xf32>
    %cst_10 = arith.constant 0.000000e+00 : f32
    %15 = vector.broadcast %cst_10 : f32 to vector<1024x16xf32>
    %16 = arith.maximumf %14, %15 : vector<1024x16xf32>
    %17 = arith.truncf %16 : vector<1024x16xf32> to vector<1024x16xbf16>
    %c0_11 = arith.constant 0 : index
    %c0_12 = arith.constant 0 : index
    %18 = vector.load %arg6[%c0_11, %c0_12] : memref<1024x16xbf16, #tpu.memory_space<vmem>>, vector<1024x16xbf16>
    tpu.vector_store %arg6[%c0_11, %c0_12], %17 {strides = array<i32>} : memref<1024x16xbf16, #tpu.memory_space<vmem>>, vector<1024x16xbf16>,
    return
  }
  func.func @transform_0(%arg0: i32) -> (i32, i32) {
    %c0_i32 = arith.constant 0 : i32
    %c0_i32_0 = arith.constant 0 : i32
    return %arg0, %c0_i32 : i32, i32
  }
  func.func @transform_1(%arg0: i32) -> (i32, i32) {
    %c0_i32 = arith.constant 0 : i32
    %c0_i32_0 = arith.constant 0 : i32
    %c0_i32_1 = arith.constant 0 : i32
    return %c0_i32, %c0_i32_0 : i32, i32
  }
  func.func @transform_2(%arg0: i32) -> (i32, i32) {
    %c0_i32 = arith.constant 0 : i32
    %c0_i32_0 = arith.constant 0 : i32
    %c0_i32_1 = arith.constant 0 : i32
    return %c0_i32, %c0_i32_0 : i32, i32
  }
  func.func @transform_3(%arg0: i32) -> (i32, i32) {
    %c0_i32 = arith.constant 0 : i32
    %c0_i32_0 = arith.constant 0 : i32
    %c0_i32_1 = arith.constant 0 : i32
    return %c0_i32, %c0_i32_0 : i32, i32
  }
  func.func @transform_4(%arg0: i32) -> (i32, i32) {
    %c0_i32 = arith.constant 0 : i32
    %c0_i32_0 = arith.constant 0 : i32
    %c0_i32_1 = arith.constant 0 : i32
    return %c0_i32, %c0_i32_0 : i32, i32
  }
  func.func @transform_5(%arg0: i32) -> (i32, i32) {
    %c0_i32 = arith.constant 0 : i32
    %c0_i32_0 = arith.constant 0 : i32
    return %arg0, %c0_i32 : i32, i32
  }
}

module attributes {stable_mosaic.version = 11 : i64} {
  func.func @stage2_kernel(%arg0: i32, %arg1: i32, %arg2: memref<1x1x10x10x16xbf16, #tpu.memory_space<vmem>>, %arg3: memref<1x1x10x10x16xbf16, #tpu.memory_space<vmem>>, %arg4: memref<1x1x10x10x16xbf16, #tpu.memory_space<vmem>>, %arg5: memref<1x1x8x8x4xf32, #tpu.memory_space<vmem>>, %arg6: memref<432x4xbf16, #tpu.memory_space<vmem>>, %arg7: memref<1x4xf32, #tpu.memory_space<vmem>>, %arg8: memref<1x1x8x8x8xf32, #tpu.memory_space<vmem>>) attributes {dimension_semantics = [#tpu.dimension_semantics<parallel>, #tpu.dimension_semantics<parallel>], iteration_bounds = array<i64: 2, 8>, scalar_prefetch = 0 : i64, scratch_operands = 0 : i64, tpu.core_type = #tpu.core_type<tc>, window_params = [{transform_indices = @transform_0, window_bounds = array<i64: 1, 1, 10, 10, 16>}, {transform_indices = @transform_1, window_bounds = array<i64: 1, 1, 10, 10, 16>}, {transform_indices = @transform_2, window_bounds = array<i64: 1, 1, 10, 10, 16>}, {transform_indices = @transform_3, window_bounds = array<i64: 1, 1, 8, 8, 4>}, {pipeline_mode = #tpu.pipeline_mode<synchronous>, transform_indices = @transform_4, window_bounds = array<i64: 432, 4>}, {pipeline_mode = #tpu.pipeline_mode<synchronous>, transform_indices = @transform_5, window_bounds = array<i64: 1, 4>}, {transform_indices = @transform_6, window_bounds = array<i64: 1, 1, 8, 8, 8>}]} {
    %c0 = arith.constant 0 : index
    %c0_0 = arith.constant 0 : index
    %c0_1 = arith.constant 0 : index
    %c0_2 = arith.constant 0 : index
    %c0_3 = arith.constant 0 : index
    %0 = vector.load %arg2[%c0, %c0_0, %c0_1, %c0_2, %c0_3] : memref<1x1x10x10x16xbf16, #tpu.memory_space<vmem>>, vector<1x1x10x10x16xbf16>
    %1 = vector.shape_cast %0 : vector<1x1x10x10x16xbf16> to vector<10x10x16xbf16>
    %c0_4 = arith.constant 0 : index
    %c0_5 = arith.constant 0 : index
    %c0_6 = arith.constant 0 : index
    %c0_7 = arith.constant 0 : index
    %c0_8 = arith.constant 0 : index
    %2 = vector.load %arg3[%c0_4, %c0_5, %c0_6, %c0_7, %c0_8] : memref<1x1x10x10x16xbf16, #tpu.memory_space<vmem>>, vector<1x1x10x10x16xbf16>
    %3 = vector.shape_cast %2 : vector<1x1x10x10x16xbf16> to vector<10x10x16xbf16>
    %c0_9 = arith.constant 0 : index
    %c0_10 = arith.constant 0 : index
    %c0_11 = arith.constant 0 : index
    %c0_12 = arith.constant 0 : index
    %c0_13 = arith.constant 0 : index
    %4 = vector.load %arg4[%c0_9, %c0_10, %c0_11, %c0_12, %c0_13] : memref<1x1x10x10x16xbf16, #tpu.memory_space<vmem>>, vector<1x1x10x10x16xbf16>
    %5 = vector.shape_cast %4 : vector<1x1x10x10x16xbf16> to vector<10x10x16xbf16>
    %6 = vector.extract_strided_slice %1 {offsets = [0, 0, 0], sizes = [8, 8, 16], strides = [1, 1, 1]} : vector<10x10x16xbf16> to vector<8x8x16xbf16>
    %7 = vector.extract_strided_slice %1 {offsets = [0, 1, 0], sizes = [8, 8, 16], strides = [1, 1, 1]} : vector<10x10x16xbf16> to vector<8x8x16xbf16>
    %8 = vector.extract_strided_slice %1 {offsets = [0, 2, 0], sizes = [8, 8, 16], strides = [1, 1, 1]} : vector<10x10x16xbf16> to vector<8x8x16xbf16>
    %9 = vector.extract_strided_slice %1 {offsets = [1, 0, 0], sizes = [8, 8, 16], strides = [1, 1, 1]} : vector<10x10x16xbf16> to vector<8x8x16xbf16>
    %10 = vector.extract_strided_slice %1 {offsets = [1, 1, 0], sizes = [8, 8, 16], strides = [1, 1, 1]} : vector<10x10x16xbf16> to vector<8x8x16xbf16>
    %11 = vector.extract_strided_slice %1 {offsets = [1, 2, 0], sizes = [8, 8, 16], strides = [1, 1, 1]} : vector<10x10x16xbf16> to vector<8x8x16xbf16>
    %12 = vector.extract_strided_slice %1 {offsets = [2, 0, 0], sizes = [8, 8, 16], strides = [1, 1, 1]} : vector<10x10x16xbf16> to vector<8x8x16xbf16>
    %13 = vector.extract_strided_slice %1 {offsets = [2, 1, 0], sizes = [8, 8, 16], strides = [1, 1, 1]} : vector<10x10x16xbf16> to vector<8x8x16xbf16>
    %14 = vector.extract_strided_slice %1 {offsets = [2, 2, 0], sizes = [8, 8, 16], strides = [1, 1, 1]} : vector<10x10x16xbf16> to vector<8x8x16xbf16>
    %15 = vector.extract_strided_slice %3 {offsets = [0, 0, 0], sizes = [8, 8, 16], strides = [1, 1, 1]} : vector<10x10x16xbf16> to vector<8x8x16xbf16>
    %16 = vector.extract_strided_slice %3 {offsets = [0, 1, 0], sizes = [8, 8, 16], strides = [1, 1, 1]} : vector<10x10x16xbf16> to vector<8x8x16xbf16>
    %17 = vector.extract_strided_slice %3 {offsets = [0, 2, 0], sizes = [8, 8, 16], strides = [1, 1, 1]} : vector<10x10x16xbf16> to vector<8x8x16xbf16>
    %18 = vector.extract_strided_slice %3 {offsets = [1, 0, 0], sizes = [8, 8, 16], strides = [1, 1, 1]} : vector<10x10x16xbf16> to vector<8x8x16xbf16>
    %19 = vector.extract_strided_slice %3 {offsets = [1, 1, 0], sizes = [8, 8, 16], strides = [1, 1, 1]} : vector<10x10x16xbf16> to vector<8x8x16xbf16>
    %20 = vector.extract_strided_slice %3 {offsets = [1, 2, 0], sizes = [8, 8, 16], strides = [1, 1, 1]} : vector<10x10x16xbf16> to vector<8x8x16xbf16>
    %21 = vector.extract_strided_slice %3 {offsets = [2, 0, 0], sizes = [8, 8, 16], strides = [1, 1, 1]} : vector<10x10x16xbf16> to vector<8x8x16xbf16>
    %22 = vector.extract_strided_slice %3 {offsets = [2, 1, 0], sizes = [8, 8, 16], strides = [1, 1, 1]} : vector<10x10x16xbf16> to vector<8x8x16xbf16>
    %23 = vector.extract_strided_slice %3 {offsets = [2, 2, 0], sizes = [8, 8, 16], strides = [1, 1, 1]} : vector<10x10x16xbf16> to vector<8x8x16xbf16>
    %24 = vector.extract_strided_slice %5 {offsets = [0, 0, 0], sizes = [8, 8, 16], strides = [1, 1, 1]} : vector<10x10x16xbf16> to vector<8x8x16xbf16>
    %25 = vector.extract_strided_slice %5 {offsets = [0, 1, 0], sizes = [8, 8, 16], strides = [1, 1, 1]} : vector<10x10x16xbf16> to vector<8x8x16xbf16>
    %26 = vector.extract_strided_slice %5 {offsets = [0, 2, 0], sizes = [8, 8, 16], strides = [1, 1, 1]} : vector<10x10x16xbf16> to vector<8x8x16xbf16>
    %27 = vector.extract_strided_slice %5 {offsets = [1, 0, 0], sizes = [8, 8, 16], strides = [1, 1, 1]} : vector<10x10x16xbf16> to vector<8x8x16xbf16>
    %28 = vector.extract_strided_slice %5 {offsets = [1, 1, 0], sizes = [8, 8, 16], strides = [1, 1, 1]} : vector<10x10x16xbf16> to vector<8x8x16xbf16>
    %29 = vector.extract_strided_slice %5 {offsets = [1, 2, 0], sizes = [8, 8, 16], strides = [1, 1, 1]} : vector<10x10x16xbf16> to vector<8x8x16xbf16>
    %30 = vector.extract_strided_slice %5 {offsets = [2, 0, 0], sizes = [8, 8, 16], strides = [1, 1, 1]} : vector<10x10x16xbf16> to vector<8x8x16xbf16>
    %31 = vector.extract_strided_slice %5 {offsets = [2, 1, 0], sizes = [8, 8, 16], strides = [1, 1, 1]} : vector<10x10x16xbf16> to vector<8x8x16xbf16>
    %32 = vector.extract_strided_slice %5 {offsets = [2, 2, 0], sizes = [8, 8, 16], strides = [1, 1, 1]} : vector<10x10x16xbf16> to vector<8x8x16xbf16>
    %33 = tpu.concatenate %6, %7, %8, %9, %10, %11, %12, %13, %14, %15, %16, %17, %18, %19, %20, %21 in 2 : vector<8x8x16xbf16>, vector<8x8x16xbf16>, vector<8x8x16xbf16>, vector<8x8x16xbf16>, vector<8x8x16xbf16>, vector<8x8x16xbf16>, vector<8x8x16xbf16>, vector<8x8x16xbf16>, vector<8x8x16xbf16>, vector<8x8x16xbf16>, vector<8x8x16xbf16>, vector<8x8x16xbf16>, vector<8x8x16xbf16>, vector<8x8x16xbf16>, vector<8x8x16xbf16>, vector<8x8x16xbf16> -> vector<8x8x256xbf16>
    %34 = tpu.concatenate %22, %23, %24, %25, %26, %27, %28, %29, %30, %31, %32 in 2 : vector<8x8x16xbf16>, vector<8x8x16xbf16>, vector<8x8x16xbf16>, vector<8x8x16xbf16>, vector<8x8x16xbf16>, vector<8x8x16xbf16>, vector<8x8x16xbf16>, vector<8x8x16xbf16>, vector<8x8x16xbf16>, vector<8x8x16xbf16>, vector<8x8x16xbf16> -> vector<8x8x176xbf16>
    %35 = tpu.concatenate %33, %34 in 2 : vector<8x8x256xbf16>, vector<8x8x176xbf16> -> vector<8x8x432xbf16>
    %36 = vector.shape_cast %35 : vector<8x8x432xbf16> to vector<64x432xbf16>
    %c0_14 = arith.constant 0 : index
    %c0_15 = arith.constant 0 : index
    %37 = vector.load %arg6[%c0_14, %c0_15] : memref<432x4xbf16, #tpu.memory_space<vmem>>, vector<432x4xbf16>
    %cst = arith.constant dense<0.000000e+00> : vector<64x4xf32>
    %38 = tpu.matmul %36, %37, %cst {dimension_numbers = #tpu.dot_dimension_numbers<[1], [0], [0], [1], [0, 0, 1, 1], [], []>} : vector<64x432xbf16>, vector<432x4xbf16>, vector<64x4xf32> -> vector<64x4xf32>
    %c0_16 = arith.constant 0 : index
    %c0_17 = arith.constant 0 : index
    %39 = vector.load %arg7[%c0_16, %c0_17] : memref<1x4xf32, #tpu.memory_space<vmem>>, vector<1x4xf32>
    %40 = vector.broadcast %39 : vector<1x4xf32> to vector<64x4xf32>
    %41 = arith.addf %38, %40 : vector<64x4xf32>
    %42 = vector.shape_cast %41 : vector<64x4xf32> to vector<8x8x4xf32>
    %c0_18 = arith.constant 0 : index
    %c0_19 = arith.constant 0 : index
    %c0_20 = arith.constant 0 : index
    %c0_21 = arith.constant 0 : index
    %c0_22 = arith.constant 0 : index
    %43 = vector.load %arg5[%c0_18, %c0_19, %c0_20, %c0_21, %c0_22] : memref<1x1x8x8x4xf32, #tpu.memory_space<vmem>>, vector<1x1x8x8x4xf32>
    %44 = vector.shape_cast %43 : vector<1x1x8x8x4xf32> to vector<8x8x4xf32>
    %45 = tpu.concatenate %42, %44 in 2 : vector<8x8x4xf32>, vector<8x8x4xf32> -> vector<8x8x8xf32>
    %c0_23 = arith.constant 0 : index
    %c0_24 = arith.constant 0 : index
    %c0_25 = arith.constant 0 : index
    %c0_26 = arith.constant 0 : index
    %c0_27 = arith.constant 0 : index
    %46 = vector.load %arg8[%c0_23, %c0_24, %c0_25, %c0_26, %c0_27] : memref<1x1x8x8x8xf32, #tpu.memory_space<vmem>>, vector<1x1x8x8x8xf32>
    %47 = vector.shape_cast %46 : vector<1x1x8x8x8xf32> to vector<8x8x8xf32>
    %48 = vector.shape_cast %45 : vector<8x8x8xf32> to vector<1x1x8x8x8xf32>
    tpu.vector_store %arg8[%c0_23, %c0_24, %c0_25, %c0_26, %c0_27], %48 {strides = array<i32>} : memref<1x1x8x8x8xf32, #tpu.memory_space<vmem>>, vector<1x1x8x8x8xf32>,
    return
  }
  func.func @transform_0(%arg0: i32, %arg1: i32) -> (i32, i32, i32, i32, i32) {
    %c0_i32 = arith.constant 0 : i32
    %0 = arith.addi %arg1, %c0_i32 : i32
    %c0_i32_0 = arith.constant 0 : i32
    %c0_i32_1 = arith.constant 0 : i32
    %c0_i32_2 = arith.constant 0 : i32
    %c0_i32_3 = arith.constant 0 : i32
    return %arg0, %0, %c0_i32_0, %c0_i32_1, %c0_i32_2 : i32, i32, i32, i32, i32
  }
  func.func @transform_1(%arg0: i32, %arg1: i32) -> (i32, i32, i32, i32, i32) {
    %c1_i32 = arith.constant 1 : i32
    %0 = arith.addi %arg1, %c1_i32 : i32
    %c0_i32 = arith.constant 0 : i32
    %c0_i32_0 = arith.constant 0 : i32
    %c0_i32_1 = arith.constant 0 : i32
    %c0_i32_2 = arith.constant 0 : i32
    return %arg0, %0, %c0_i32, %c0_i32_0, %c0_i32_1 : i32, i32, i32, i32, i32
  }
  func.func @transform_2(%arg0: i32, %arg1: i32) -> (i32, i32, i32, i32, i32) {
    %c2_i32 = arith.constant 2 : i32
    %0 = arith.addi %arg1, %c2_i32 : i32
    %c0_i32 = arith.constant 0 : i32
    %c0_i32_0 = arith.constant 0 : i32
    %c0_i32_1 = arith.constant 0 : i32
    %c0_i32_2 = arith.constant 0 : i32
    return %arg0, %0, %c0_i32, %c0_i32_0, %c0_i32_1 : i32, i32, i32, i32, i32
  }
  func.func @transform_3(%arg0: i32, %arg1: i32) -> (i32, i32, i32, i32, i32) {
    %c0_i32 = arith.constant 0 : i32
    %c0_i32_0 = arith.constant 0 : i32
    %c0_i32_1 = arith.constant 0 : i32
    %c0_i32_2 = arith.constant 0 : i32
    return %arg0, %arg1, %c0_i32, %c0_i32_0, %c0_i32_1 : i32, i32, i32, i32, i32
  }
  func.func @transform_4(%arg0: i32, %arg1: i32) -> (i32, i32) {
    %c0_i32 = arith.constant 0 : i32
    %c0_i32_0 = arith.constant 0 : i32
    %c0_i32_1 = arith.constant 0 : i32
    return %c0_i32, %c0_i32_0 : i32, i32
  }
  func.func @transform_5(%arg0: i32, %arg1: i32) -> (i32, i32) {
    %c0_i32 = arith.constant 0 : i32
    %c0_i32_0 = arith.constant 0 : i32
    %c0_i32_1 = arith.constant 0 : i32
    return %c0_i32, %c0_i32_0 : i32, i32
  }
  func.func @transform_6(%arg0: i32, %arg1: i32) -> (i32, i32, i32, i32, i32) {
    %c0_i32 = arith.constant 0 : i32
    %c0_i32_0 = arith.constant 0 : i32
    %c0_i32_1 = arith.constant 0 : i32
    %c0_i32_2 = arith.constant 0 : i32
    return %arg0, %arg1, %c0_i32, %c0_i32_0, %c0_i32_1 : i32, i32, i32, i32, i32
  }
}

</mosaic_0001>

<llo_original>
// kernel: bottleneck_forward.2
$region0: #{bottleneck_forward.2}
  #allocation0 [shape = 'u32[]', space=smem, size = 0x4, offset = 0x4, fixed_abs, tag = 'smem constant byte address 0x4 - core index']
  #allocation1 [shape = 'u32[144,128]{1,0:T(1,128)}', space=vmem, size = 0x12000, scoped, tag = 'internal scratch']
  %s0 = inlined_call_operand.vmem [shape: f32[1024,4], index: 0, kind: input, shape index: {}]
  %s1 = inlined_call_operand.vmem [shape: f32[1,4], index: 1, kind: input, shape index: {}]
  %s2 = inlined_call_operand.vmem [shape: f32[1,4], index: 2, kind: input, shape index: {}]
  %s3 = inlined_call_operand.vmem [shape: bf16[4,16], index: 3, kind: input, shape index: {}]
  %s4 = inlined_call_operand.vmem [shape: f32[1,16], index: 4, kind: input, shape index: {}]
  %s5 = inlined_call_operand.vmem [shape: bf16[1024,16], index: 5, kind: output, shape index: {}]
  %s6 = sld [smem:[#allocation0]]
  $region30: #{bottleneck_forward.2} parent=0
    _
  %s8 = ssub.s32 1, %s6
  %s9 = scalar_select 0, %s8, %s6
  // Predicated region
  $region2: #{bottleneck_forward.2} parent=0 // pred_check
    _
  $region3: #{bottleneck_forward.2} parent=0 // pred_check_branch
    %11 = sbr.rel (0) target = $region5
  $region4: #{bottleneck_forward.2} parent=0 // pred_region
    _
  $region5: #{bottleneck_forward.2} parent=0 // pred_fallthru
    _
  // Predicated region
  $region6: #{bottleneck_forward.2} parent=0 // pred_check
    _
  $region7: #{bottleneck_forward.2} parent=0 // pred_check_branch
    %13 = sbr.rel (0) target = $region9
  $region8: #{bottleneck_forward.2} parent=0 // pred_region
    _
  $region9: #{bottleneck_forward.2} parent=0 // pred_fallthru
    _
  // Predicated region
  $region10: #{bottleneck_forward.2} parent=0 // pred_check
    _
  $region11: #{bottleneck_forward.2} parent=0 // pred_check_branch
    %15 = sbr.rel (0) target = $region13
  $region12: #{bottleneck_forward.2} parent=0 // pred_region
    _
  $region13: #{bottleneck_forward.2} parent=0 // pred_fallthru
    _
  // Predicated region
  $region14: #{bottleneck_forward.2} parent=0 // pred_check
    _
  $region15: #{bottleneck_forward.2} parent=0 // pred_check_branch
    %17 = sbr.rel (0) target = $region17
  $region16: #{bottleneck_forward.2} parent=0 // pred_region
    _
  $region17: #{bottleneck_forward.2} parent=0 // pred_fallthru
    _
  // Predicated region
  $region18: #{bottleneck_forward.2} parent=0 // pred_check
    _
  $region19: #{bottleneck_forward.2} parent=0 // pred_check_branch
    %19 = sbr.rel (0) target = $region21
  $region20: #{bottleneck_forward.2} parent=0 // pred_region
    _
  $region21: #{bottleneck_forward.2} parent=0 // pred_fallthru
    _
  %v21 = vld [vmem:[%s0] sm:$0xff]
  %v22 = vld [vmem:[%s0 + $0x8] sm:$0xff]
  %v23 = vld [vmem:[%s0 + $0x10] sm:$0xff]
  %v24 = vld [vmem:[%s0 + $0x18] sm:$0xff]
  %v25 = vld [vmem:[%s0 + $0x20] sm:$0xff]
  %v26 = vld [vmem:[%s0 + $0x28] sm:$0xff]
  %v27 = vld [vmem:[%s0 + $0x30] sm:$0xff]
  %v28 = vld [vmem:[%s0 + $0x38] sm:$0xff]
  %v29 = vld [vmem:[%s0 + $0x40] sm:$0xff]
  %v30 = vld [vmem:[%s0 + $0x48] sm:$0xff]
  %v31 = vld [vmem:[%s0 + $0x50] sm:$0xff]
  %v32 = vld [vmem:[%s0 + $0x58] sm:$0xff]
  %v33 = vld [vmem:[%s0 + $0x60] sm:$0xff]
  %v34 = vld [vmem:[%s0 + $0x68] sm:$0xff]
  %v35 = vld [vmem:[%s0 + $0x70] sm:$0xff]
  %v36 = vld [vmem:[%s0 + $0x78] sm:$0xff]
  %v37 = vld [vmem:[%s0 + $0x80] sm:$0xff]
  %v38 = vld [vmem:[%s0 + $0x88] sm:$0xff]
  %v39 = vld [vmem:[%s0 + $0x90] sm:$0xff]
  %v40 = vld [vmem:[%s0 + $0x98] sm:$0xff]
  %v41 = vld [vmem:[%s0 + $0xa0] sm:$0xff]
  %v42 = vld [vmem:[%s0 + $0xa8] sm:$0xff]
  %v43 = vld [vmem:[%s0 + $0xb0] sm:$0xff]
  %v44 = vld [vmem:[%s0 + $0xb8] sm:$0xff]
  %v45 = vld [vmem:[%s0 + $0xc0] sm:$0xff]
  %v46 = vld [vmem:[%s0 + $0xc8] sm:$0xff]
  %v47 = vld [vmem:[%s0 + $0xd0] sm:$0xff]
  %v48 = vld [vmem:[%s0 + $0xd8] sm:$0xff]
  %v49 = vld [vmem:[%s0 + $0xe0] sm:$0xff]
  %v50 = vld [vmem:[%s0 + $0xe8] sm:$0xff]
  %v51 = vld [vmem:[%s0 + $0xf0] sm:$0xff]
  %v52 = vld [vmem:[%s0 + $0xf8] sm:$0xff]
  %v53 = vld [vmem:[%s0 + $0x100] sm:$0xff]
  %v54 = vld [vmem:[%s0 + $0x108] sm:$0xff]
  %v55 = vld [vmem:[%s0 + $0x110] sm:$0xff]
  %v56 = vld [vmem:[%s0 + $0x118] sm:$0xff]
  %v57 = vld [vmem:[%s0 + $0x120] sm:$0xff]
  %v58 = vld [vmem:[%s0 + $0x128] sm:$0xff]
  %v59 = vld [vmem:[%s0 + $0x130] sm:$0xff]
  %v60 = vld [vmem:[%s0 + $0x138] sm:$0xff]
  %v61 = vld [vmem:[%s0 + $0x140] sm:$0xff]
  %v62 = vld [vmem:[%s0 + $0x148] sm:$0xff]
  %v63 = vld [vmem:[%s0 + $0x150] sm:$0xff]
  %v64 = vld [vmem:[%s0 + $0x158] sm:$0xff]
  %v65 = vld [vmem:[%s0 + $0x160] sm:$0xff]
  %v66 = vld [vmem:[%s0 + $0x168] sm:$0xff]
  %v67 = vld [vmem:[%s0 + $0x170] sm:$0xff]
  %v68 = vld [vmem:[%s0 + $0x178] sm:$0xff]
  %v69 = vld [vmem:[%s0 + $0x180] sm:$0xff]
  %v70 = vld [vmem:[%s0 + $0x188] sm:$0xff]
  %v71 = vld [vmem:[%s0 + $0x190] sm:$0xff]
  %v72 = vld [vmem:[%s0 + $0x198] sm:$0xff]
  %v73 = vld [vmem:[%s0 + $0x1a0] sm:$0xff]
  %v74 = vld [vmem:[%s0 + $0x1a8] sm:$0xff]
  %v75 = vld [vmem:[%s0 + $0x1b0] sm:$0xff]
  %v76 = vld [vmem:[%s0 + $0x1b8] sm:$0xff]
  %v77 = vld [vmem:[%s0 + $0x1c0] sm:$0xff]
  %v78 = vld [vmem:[%s0 + $0x1c8] sm:$0xff]
  %v79 = vld [vmem:[%s0 + $0x1d0] sm:$0xff]
  %v80 = vld [vmem:[%s0 + $0x1d8] sm:$0xff]
  %v81 = vld [vmem:[%s0 + $0x1e0] sm:$0xff]
  %v82 = vld [vmem:[%s0 + $0x1e8] sm:$0xff]
  %v83 = vld [vmem:[%s0 + $0x1f0] sm:$0xff]
  %v84 = vld [vmem:[%s0 + $0x1f8] sm:$0xff]
  %v85 = vld [vmem:[%s0 + $0x200] sm:$0xff]
  %v86 = vld [vmem:[%s0 + $0x208] sm:$0xff]
  %v87 = vld [vmem:[%s0 + $0x210] sm:$0xff]
  %v88 = vld [vmem:[%s0 + $0x218] sm:$0xff]
  %v89 = vld [vmem:[%s0 + $0x220] sm:$0xff]
  %v90 = vld [vmem:[%s0 + $0x228] sm:$0xff]
  %v91 = vld [vmem:[%s0 + $0x230] sm:$0xff]
  %v92 = vld [vmem:[%s0 + $0x238] sm:$0xff]
  %v93 = vld [vmem:[%s0 + $0x240] sm:$0xff]
  %v94 = vld [vmem:[%s0 + $0x248] sm:$0xff]
  %v95 = vld [vmem:[%s0 + $0x250] sm:$0xff]
  %v96 = vld [vmem:[%s0 + $0x258] sm:$0xff]
  %v97 = vld [vmem:[%s0 + $0x260] sm:$0xff]
  %v98 = vld [vmem:[%s0 + $0x268] sm:$0xff]
  %v99 = vld [vmem:[%s0 + $0x270] sm:$0xff]
  %v100 = vld [vmem:[%s0 + $0x278] sm:$0xff]
  %v101 = vld [vmem:[%s0 + $0x280] sm:$0xff]
  %v102 = vld [vmem:[%s0 + $0x288] sm:$0xff]
  %v103 = vld [vmem:[%s0 + $0x290] sm:$0xff]
  %v104 = vld [vmem:[%s0 + $0x298] sm:$0xff]
  %v105 = vld [vmem:[%s0 + $0x2a0] sm:$0xff]
  %v106 = vld [vmem:[%s0 + $0x2a8] sm:$0xff]
  %v107 = vld [vmem:[%s0 + $0x2b0] sm:$0xff]
  %v108 = vld [vmem:[%s0 + $0x2b8] sm:$0xff]
  %v109 = vld [vmem:[%s0 + $0x2c0] sm:$0xff]
  %v110 = vld [vmem:[%s0 + $0x2c8] sm:$0xff]
  %v111 = vld [vmem:[%s0 + $0x2d0] sm:$0xff]
  %v112 = vld [vmem:[%s0 + $0x2d8] sm:$0xff]
  %v113 = vld [vmem:[%s0 + $0x2e0] sm:$0xff]
  %v114 = vld [vmem:[%s0 + $0x2e8] sm:$0xff]
  %v115 = vld [vmem:[%s0 + $0x2f0] sm:$0xff]
  %v116 = vld [vmem:[%s0 + $0x2f8] sm:$0xff]
  %v117 = vld [vmem:[%s0 + $0x300] sm:$0xff]
  %v118 = vld [vmem:[%s0 + $0x308] sm:$0xff]
  %v119 = vld [vmem:[%s0 + $0x310] sm:$0xff]
  %v120 = vld [vmem:[%s0 + $0x318] sm:$0xff]
  %v121 = vld [vmem:[%s0 + $0x320] sm:$0xff]
  %v122 = vld [vmem:[%s0 + $0x328] sm:$0xff]
  %v123 = vld [vmem:[%s0 + $0x330] sm:$0xff]
  %v124 = vld [vmem:[%s0 + $0x338] sm:$0xff]
  %v125 = vld [vmem:[%s0 + $0x340] sm:$0xff]
  %v126 = vld [vmem:[%s0 + $0x348] sm:$0xff]
  %v127 = vld [vmem:[%s0 + $0x350] sm:$0xff]
  %v128 = vld [vmem:[%s0 + $0x358] sm:$0xff]
  %v129 = vld [vmem:[%s0 + $0x360] sm:$0xff]
  %v130 = vld [vmem:[%s0 + $0x368] sm:$0xff]
  %v131 = vld [vmem:[%s0 + $0x370] sm:$0xff]
  %v132 = vld [vmem:[%s0 + $0x378] sm:$0xff]
  %v133 = vld [vmem:[%s0 + $0x380] sm:$0xff]
  %v134 = vld [vmem:[%s0 + $0x388] sm:$0xff]
  %v135 = vld [vmem:[%s0 + $0x390] sm:$0xff]
  %v136 = vld [vmem:[%s0 + $0x398] sm:$0xff]
  %v137 = vld [vmem:[%s0 + $0x3a0] sm:$0xff]
  %v138 = vld [vmem:[%s0 + $0x3a8] sm:$0xff]
  %v139 = vld [vmem:[%s0 + $0x3b0] sm:$0xff]
  %v140 = vld [vmem:[%s0 + $0x3b8] sm:$0xff]
  %v141 = vld [vmem:[%s0 + $0x3c0] sm:$0xff]
  %v142 = vld [vmem:[%s0 + $0x3c8] sm:$0xff]
  %v143 = vld [vmem:[%s0 + $0x3d0] sm:$0xff]
  %v144 = vld [vmem:[%s0 + $0x3d8] sm:$0xff]
  %v145 = vld [vmem:[%s0 + $0x3e0] sm:$0xff]
  %v146 = vld [vmem:[%s0 + $0x3e8] sm:$0xff]
  %v147 = vld [vmem:[%s0 + $0x3f0] sm:$0xff]
  %v148 = vld [vmem:[%s0 + $0x3f8] sm:$0xff]
  %v149 = vld [vmem:[%s1] sm:$0x1]
  %v151 = vlaneseq
  %v152 = vshrl.u32 %v151, 7
  %v153 = vsub.s32 0, %v152
  %v154 = vrot.slane %v149, %v153
  %v156 = vmul.f32 %v21, %v154
  %v157 = vmul.f32 %v22, %v154
  %v158 = vmul.f32 %v23, %v154
  %v159 = vmul.f32 %v24, %v154
  %v160 = vmul.f32 %v25, %v154
  %v161 = vmul.f32 %v26, %v154
  %v162 = vmul.f32 %v27, %v154
  %v163 = vmul.f32 %v28, %v154
  %v164 = vmul.f32 %v29, %v154
  %v165 = vmul.f32 %v30, %v154
  %v166 = vmul.f32 %v31, %v154
  %v167 = vmul.f32 %v32, %v154
  %v168 = vmul.f32 %v33, %v154
  %v169 = vmul.f32 %v34, %v154
  %v170 = vmul.f32 %v35, %v154
  %v171 = vmul.f32 %v36, %v154
  %v172 = vmul.f32 %v37, %v154
  %v173 = vmul.f32 %v38, %v154
  %v174 = vmul.f32 %v39, %v154
  %v175 = vmul.f32 %v40, %v154
  %v176 = vmul.f32 %v41, %v154
  %v177 = vmul.f32 %v42, %v154
  %v178 = vmul.f32 %v43, %v154
  %v179 = vmul.f32 %v44, %v154
  %v180 = vmul.f32 %v45, %v154
  %v181 = vmul.f32 %v46, %v154
  %v182 = vmul.f32 %v47, %v154
  %v183 = vmul.f32 %v48, %v154
  %v184 = vmul.f32 %v49, %v154
  %v185 = vmul.f32 %v50, %v154
  %v186 = vmul.f32 %v51, %v154
  %v187 = vmul.f32 %v52, %v154
  %v188 = vmul.f32 %v53, %v154
  %v189 = vmul.f32 %v54, %v154
  %v190 = vmul.f32 %v55, %v154
  %v191 = vmul.f32 %v56, %v154
  %v192 = vmul.f32 %v57, %v154
  %v193 = vmul.f32 %v58, %v154
  %v194 = vmul.f32 %v59, %v154
  %v195 = vmul.f32 %v60, %v154
  %v196 = vmul.f32 %v61, %v154
  %v197 = vmul.f32 %v62, %v154
  %v198 = vmul.f32 %v63, %v154
  %v199 = vmul.f32 %v64, %v154
  %v200 = vmul.f32 %v65, %v154
  %v201 = vmul.f32 %v66, %v154
  %v202 = vmul.f32 %v67, %v154
  %v203 = vmul.f32 %v68, %v154
  %v204 = vmul.f32 %v69, %v154
  %v205 = vmul.f32 %v70, %v154
  %v206 = vmul.f32 %v71, %v154
  %v207 = vmul.f32 %v72, %v154
  %v208 = vmul.f32 %v73, %v154
  %v209 = vmul.f32 %v74, %v154
  %v210 = vmul.f32 %v75, %v154
  %v211 = vmul.f32 %v76, %v154
  %v212 = vmul.f32 %v77, %v154
  %v213 = vmul.f32 %v78, %v154
  %v214 = vmul.f32 %v79, %v154
  %v215 = vmul.f32 %v80, %v154
  %v216 = vmul.f32 %v81, %v154
  %v217 = vmul.f32 %v82, %v154
  %v218 = vmul.f32 %v83, %v154
  %v219 = vmul.f32 %v84, %v154
  %v220 = vmul.f32 %v85, %v154
  %v221 = vmul.f32 %v86, %v154
  %v222 = vmul.f32 %v87, %v154
  %v223 = vmul.f32 %v88, %v154
  %v224 = vmul.f32 %v89, %v154
  %v225 = vmul.f32 %v90, %v154
  %v226 = vmul.f32 %v91, %v154
  %v227 = vmul.f32 %v92, %v154
  %v228 = vmul.f32 %v93, %v154
  %v229 = vmul.f32 %v94, %v154
  %v230 = vmul.f32 %v95, %v154
  %v231 = vmul.f32 %v96, %v154
  %v232 = vmul.f32 %v97, %v154
  %v233 = vmul.f32 %v98, %v154
  %v234 = vmul.f32 %v99, %v154
  %v235 = vmul.f32 %v100, %v154
  %v236 = vmul.f32 %v101, %v154
  %v237 = vmul.f32 %v102, %v154
  %v238 = vmul.f32 %v103, %v154
  %v239 = vmul.f32 %v104, %v154
  %v240 = vmul.f32 %v105, %v154
  %v241 = vmul.f32 %v106, %v154
  %v242 = vmul.f32 %v107, %v154
  %v243 = vmul.f32 %v108, %v154
  %v244 = vmul.f32 %v109, %v154
  %v245 = vmul.f32 %v110, %v154
  %v246 = vmul.f32 %v111, %v154
  %v247 = vmul.f32 %v112, %v154
  %v248 = vmul.f32 %v113, %v154
  %v249 = vmul.f32 %v114, %v154
  %v250 = vmul.f32 %v115, %v154
  %v251 = vmul.f32 %v116, %v154
  %v252 = vmul.f32 %v117, %v154
  %v253 = vmul.f32 %v118, %v154
  %v254 = vmul.f32 %v119, %v154
  %v255 = vmul.f32 %v120, %v154
  %v256 = vmul.f32 %v121, %v154
  %v257 = vmul.f32 %v122, %v154
  %v258 = vmul.f32 %v123, %v154
  %v259 = vmul.f32 %v124, %v154
  %v260 = vmul.f32 %v125, %v154
  %v261 = vmul.f32 %v126, %v154
  %v262 = vmul.f32 %v127, %v154
  %v263 = vmul.f32 %v128, %v154
  %v264 = vmul.f32 %v129, %v154
  %v265 = vmul.f32 %v130, %v154
  %v266 = vmul.f32 %v131, %v154
  %v267 = vmul.f32 %v132, %v154
  %v268 = vmul.f32 %v133, %v154
  %v269 = vmul.f32 %v134, %v154
  %v270 = vmul.f32 %v135, %v154
  %v271 = vmul.f32 %v136, %v154
  %v272 = vmul.f32 %v137, %v154
  %v273 = vmul.f32 %v138, %v154
  %v274 = vmul.f32 %v139, %v154
  %v275 = vmul.f32 %v140, %v154
  %v276 = vmul.f32 %v141, %v154
  %v277 = vmul.f32 %v142, %v154
  %v278 = vmul.f32 %v143, %v154
  %v279 = vmul.f32 %v144, %v154
  %v280 = vmul.f32 %v145, %v154
  %v281 = vmul.f32 %v146, %v154
  %v282 = vmul.f32 %v147, %v154
  %v283 = vmul.f32 %v148, %v154
  %v284 = vld [vmem:[%s2] sm:$0x1]
  %v286 = vlaneseq
  %v287 = vshrl.u32 %v286, 7
  %v288 = vsub.s32 0, %v287
  %v289 = vrot.slane %v284, %v288
  %v291 = vadd.f32 %v156, %v289
  %v292 = vadd.f32 %v157, %v289
  %v293 = vadd.f32 %v158, %v289
  %v294 = vadd.f32 %v159, %v289
  %v295 = vadd.f32 %v160, %v289
  %v296 = vadd.f32 %v161, %v289
  %v297 = vadd.f32 %v162, %v289
  %v298 = vadd.f32 %v163, %v289
  %v299 = vadd.f32 %v164, %v289
  %v300 = vadd.f32 %v165, %v289
  %v301 = vadd.f32 %v166, %v289
  %v302 = vadd.f32 %v167, %v289
  %v303 = vadd.f32 %v168, %v289
  %v304 = vadd.f32 %v169, %v289
  %v305 = vadd.f32 %v170, %v289
  %v306 = vadd.f32 %v171, %v289
  %v307 = vadd.f32 %v172, %v289
  %v308 = vadd.f32 %v173, %v289
  %v309 = vadd.f32 %v174, %v289
  %v310 = vadd.f32 %v175, %v289
  %v311 = vadd.f32 %v176, %v289
  %v312 = vadd.f32 %v177, %v289
  %v313 = vadd.f32 %v178, %v289
  %v314 = vadd.f32 %v179, %v289
  %v315 = vadd.f32 %v180, %v289
  %v316 = vadd.f32 %v181, %v289
  %v317 = vadd.f32 %v182, %v289
  %v318 = vadd.f32 %v183, %v289
  %v319 = vadd.f32 %v184, %v289
  %v320 = vadd.f32 %v185, %v289
  %v321 = vadd.f32 %v186, %v289
  %v322 = vadd.f32 %v187, %v289
  %v323 = vadd.f32 %v188, %v289
  %v324 = vadd.f32 %v189, %v289
  %v325 = vadd.f32 %v190, %v289
  %v326 = vadd.f32 %v191, %v289
  %v327 = vadd.f32 %v192, %v289
  %v328 = vadd.f32 %v193, %v289
  %v329 = vadd.f32 %v194, %v289
  %v330 = vadd.f32 %v195, %v289
  %v331 = vadd.f32 %v196, %v289
  %v332 = vadd.f32 %v197, %v289
  %v333 = vadd.f32 %v198, %v289
  %v334 = vadd.f32 %v199, %v289
  %v335 = vadd.f32 %v200, %v289
  %v336 = vadd.f32 %v201, %v289
  %v337 = vadd.f32 %v202, %v289
  %v338 = vadd.f32 %v203, %v289
  %v339 = vadd.f32 %v204, %v289
  %v340 = vadd.f32 %v205, %v289
  %v341 = vadd.f32 %v206, %v289
  %v342 = vadd.f32 %v207, %v289
  %v343 = vadd.f32 %v208, %v289
  %v344 = vadd.f32 %v209, %v289
  %v345 = vadd.f32 %v210, %v289
  %v346 = vadd.f32 %v211, %v289
  %v347 = vadd.f32 %v212, %v289
  %v348 = vadd.f32 %v213, %v289
  %v349 = vadd.f32 %v214, %v289
  %v350 = vadd.f32 %v215, %v289
  %v351 = vadd.f32 %v216, %v289
  %v352 = vadd.f32 %v217, %v289
  %v353 = vadd.f32 %v218, %v289
  %v354 = vadd.f32 %v219, %v289
  %v355 = vadd.f32 %v220, %v289
  %v356 = vadd.f32 %v221, %v289
  %v357 = vadd.f32 %v222, %v289
  %v358 = vadd.f32 %v223, %v289
  %v359 = vadd.f32 %v224, %v289
  %v360 = vadd.f32 %v225, %v289
  %v361 = vadd.f32 %v226, %v289
  %v362 = vadd.f32 %v227, %v289
  %v363 = vadd.f32 %v228, %v289
  %v364 = vadd.f32 %v229, %v289
  %v365 = vadd.f32 %v230, %v289
  %v366 = vadd.f32 %v231, %v289
  %v367 = vadd.f32 %v232, %v289
  %v368 = vadd.f32 %v233, %v289
  %v369 = vadd.f32 %v234, %v289
  %v370 = vadd.f32 %v235, %v289
  %v371 = vadd.f32 %v236, %v289
  %v372 = vadd.f32 %v237, %v289
  %v373 = vadd.f32 %v238, %v289
  %v374 = vadd.f32 %v239, %v289
  %v375 = vadd.f32 %v240, %v289
  %v376 = vadd.f32 %v241, %v289
  %v377 = vadd.f32 %v242, %v289
  %v378 = vadd.f32 %v243, %v289
  %v379 = vadd.f32 %v244, %v289
  %v380 = vadd.f32 %v245, %v289
  %v381 = vadd.f32 %v246, %v289
  %v382 = vadd.f32 %v247, %v289
  %v383 = vadd.f32 %v248, %v289
  %v384 = vadd.f32 %v249, %v289
  %v385 = vadd.f32 %v250, %v289
  %v386 = vadd.f32 %v251, %v289
  %v387 = vadd.f32 %v252, %v289
  %v388 = vadd.f32 %v253, %v289
  %v389 = vadd.f32 %v254, %v289
  %v390 = vadd.f32 %v255, %v289
  %v391 = vadd.f32 %v256, %v289
  %v392 = vadd.f32 %v257, %v289
  %v393 = vadd.f32 %v258, %v289
  %v394 = vadd.f32 %v259, %v289
  %v395 = vadd.f32 %v260, %v289
  %v396 = vadd.f32 %v261, %v289
  %v397 = vadd.f32 %v262, %v289
  %v398 = vadd.f32 %v263, %v289
  %v399 = vadd.f32 %v264, %v289
  %v400 = vadd.f32 %v265, %v289
  %v401 = vadd.f32 %v266, %v289
  %v402 = vadd.f32 %v267, %v289
  %v403 = vadd.f32 %v268, %v289
  %v404 = vadd.f32 %v269, %v289
  %v405 = vadd.f32 %v270, %v289
  %v406 = vadd.f32 %v271, %v289
  %v407 = vadd.f32 %v272, %v289
  %v408 = vadd.f32 %v273, %v289
  %v409 = vadd.f32 %v274, %v289
  %v410 = vadd.f32 %v275, %v289
  %v411 = vadd.f32 %v276, %v289
  %v412 = vadd.f32 %v277, %v289
  %v413 = vadd.f32 %v278, %v289
  %v414 = vadd.f32 %v279, %v289
  %v415 = vadd.f32 %v280, %v289
  %v416 = vadd.f32 %v281, %v289
  %v417 = vadd.f32 %v282, %v289
  %v418 = vadd.f32 %v283, %v289
  %v419 = vmax.f32 %v291, 0.0
  %v420 = vmax.f32 %v292, 0.0
  %v421 = vmax.f32 %v293, 0.0
  %v422 = vmax.f32 %v294, 0.0
  %v423 = vmax.f32 %v295, 0.0
  %v424 = vmax.f32 %v296, 0.0
  %v425 = vmax.f32 %v297, 0.0
  %v426 = vmax.f32 %v298, 0.0
  %v427 = vmax.f32 %v299, 0.0
  %v428 = vmax.f32 %v300, 0.0
  %v429 = vmax.f32 %v301, 0.0
  %v430 = vmax.f32 %v302, 0.0
  %v431 = vmax.f32 %v303, 0.0
  %v432 = vmax.f32 %v304, 0.0
  %v433 = vmax.f32 %v305, 0.0
  %v434 = vmax.f32 %v306, 0.0
  %v435 = vmax.f32 %v307, 0.0
  %v436 = vmax.f32 %v308, 0.0
  %v437 = vmax.f32 %v309, 0.0
  %v438 = vmax.f32 %v310, 0.0
  %v439 = vmax.f32 %v311, 0.0
  %v440 = vmax.f32 %v312, 0.0
  %v441 = vmax.f32 %v313, 0.0
  %v442 = vmax.f32 %v314, 0.0
  %v443 = vmax.f32 %v315, 0.0
  %v444 = vmax.f32 %v316, 0.0
  %v445 = vmax.f32 %v317, 0.0
  %v446 = vmax.f32 %v318, 0.0
  %v447 = vmax.f32 %v319, 0.0
  %v448 = vmax.f32 %v320, 0.0
  %v449 = vmax.f32 %v321, 0.0
  %v450 = vmax.f32 %v322, 0.0
  %v451 = vmax.f32 %v323, 0.0
  %v452 = vmax.f32 %v324, 0.0
  %v453 = vmax.f32 %v325, 0.0
  %v454 = vmax.f32 %v326, 0.0
  %v455 = vmax.f32 %v327, 0.0
  %v456 = vmax.f32 %v328, 0.0
  %v457 = vmax.f32 %v329, 0.0
  %v458 = vmax.f32 %v330, 0.0
  %v459 = vmax.f32 %v331, 0.0
  %v460 = vmax.f32 %v332, 0.0
  %v461 = vmax.f32 %v333, 0.0
  %v462 = vmax.f32 %v334, 0.0
  %v463 = vmax.f32 %v335, 0.0
  %v464 = vmax.f32 %v336, 0.0
  %v465 = vmax.f32 %v337, 0.0
  %v466 = vmax.f32 %v338, 0.0
  %v467 = vmax.f32 %v339, 0.0
  %v468 = vmax.f32 %v340, 0.0
  %v469 = vmax.f32 %v341, 0.0
  %v470 = vmax.f32 %v342, 0.0
  %v471 = vmax.f32 %v343, 0.0
  %v472 = vmax.f32 %v344, 0.0
  %v473 = vmax.f32 %v345, 0.0
  %v474 = vmax.f32 %v346, 0.0
  %v475 = vmax.f32 %v347, 0.0
  %v476 = vmax.f32 %v348, 0.0
  %v477 = vmax.f32 %v349, 0.0
  %v478 = vmax.f32 %v350, 0.0
  %v479 = vmax.f32 %v351, 0.0
  %v480 = vmax.f32 %v352, 0.0
  %v481 = vmax.f32 %v353, 0.0
  %v482 = vmax.f32 %v354, 0.0
  %v483 = vmax.f32 %v355, 0.0
  %v484 = vmax.f32 %v356, 0.0
  %v485 = vmax.f32 %v357, 0.0
  %v486 = vmax.f32 %v358, 0.0
  %v487 = vmax.f32 %v359, 0.0
  %v488 = vmax.f32 %v360, 0.0
  %v489 = vmax.f32 %v361, 0.0
  %v490 = vmax.f32 %v362, 0.0
  %v491 = vmax.f32 %v363, 0.0
  %v492 = vmax.f32 %v364, 0.0
  %v493 = vmax.f32 %v365, 0.0
  %v494 = vmax.f32 %v366, 0.0
  %v495 = vmax.f32 %v367, 0.0
  %v496 = vmax.f32 %v368, 0.0
  %v497 = vmax.f32 %v369, 0.0
  %v498 = vmax.f32 %v370, 0.0
  %v499 = vmax.f32 %v371, 0.0
  %v500 = vmax.f32 %v372, 0.0
  %v501 = vmax.f32 %v373, 0.0
  %v502 = vmax.f32 %v374, 0.0
  %v503 = vmax.f32 %v375, 0.0
  %v504 = vmax.f32 %v376, 0.0
  %v505 = vmax.f32 %v377, 0.0
  %v506 = vmax.f32 %v378, 0.0
  %v507 = vmax.f32 %v379, 0.0
  %v508 = vmax.f32 %v380, 0.0
  %v509 = vmax.f32 %v381, 0.0
  %v510 = vmax.f32 %v382, 0.0
  %v511 = vmax.f32 %v383, 0.0
  %v512 = vmax.f32 %v384, 0.0
  %v513 = vmax.f32 %v385, 0.0
  %v514 = vmax.f32 %v386, 0.0
  %v515 = vmax.f32 %v387, 0.0
  %v516 = vmax.f32 %v388, 0.0
  %v517 = vmax.f32 %v389, 0.0
  %v518 = vmax.f32 %v390, 0.0
  %v519 = vmax.f32 %v391, 0.0
  %v520 = vmax.f32 %v392, 0.0
  %v521 = vmax.f32 %v393, 0.0
  %v522 = vmax.f32 %v394, 0.0
  %v523 = vmax.f32 %v395, 0.0
  %v524 = vmax.f32 %v396, 0.0
  %v525 = vmax.f32 %v397, 0.0
  %v526 = vmax.f32 %v398, 0.0
  %v527 = vmax.f32 %v399, 0.0
  %v528 = vmax.f32 %v400, 0.0
  %v529 = vmax.f32 %v401, 0.0
  %v530 = vmax.f32 %v402, 0.0
  %v531 = vmax.f32 %v403, 0.0
  %v532 = vmax.f32 %v404, 0.0
  %v533 = vmax.f32 %v405, 0.0
  %v534 = vmax.f32 %v406, 0.0
  %v535 = vmax.f32 %v407, 0.0
  %v536 = vmax.f32 %v408, 0.0
  %v537 = vmax.f32 %v409, 0.0
  %v538 = vmax.f32 %v410, 0.0
  %v539 = vmax.f32 %v411, 0.0
  %v540 = vmax.f32 %v412, 0.0
  %v541 = vmax.f32 %v413, 0.0
  %v542 = vmax.f32 %v414, 0.0
  %v543 = vmax.f32 %v415, 0.0
  %v544 = vmax.f32 %v416, 0.0
  %v545 = vmax.f32 %v417, 0.0
  %v546 = vmax.f32 %v418, 0.0
  %v547 = vpack.c.bf16 %v420, %v419
  %v548 = vpack.c.bf16 %v422, %v421
  %v549 = vpack.c.bf16 %v424, %v423
  %v550 = vpack.c.bf16 %v426, %v425
  %v551 = vpack.c.bf16 %v428, %v427
  %v552 = vpack.c.bf16 %v430, %v429
  %v553 = vpack.c.bf16 %v432, %v431
  %v554 = vpack.c.bf16 %v434, %v433
  %v555 = vpack.c.bf16 %v436, %v435
  %v556 = vpack.c.bf16 %v438, %v437
  %v557 = vpack.c.bf16 %v440, %v439
  %v558 = vpack.c.bf16 %v442, %v441
  %v559 = vpack.c.bf16 %v444, %v443
  %v560 = vpack.c.bf16 %v446, %v445
  %v561 = vpack.c.bf16 %v448, %v447
  %v562 = vpack.c.bf16 %v450, %v449
  %v563 = vpack.c.bf16 %v452, %v451
  %v564 = vpack.c.bf16 %v454, %v453
  %v565 = vpack.c.bf16 %v456, %v455
  %v566 = vpack.c.bf16 %v458, %v457
  %v567 = vpack.c.bf16 %v460, %v459
  %v568 = vpack.c.bf16 %v462, %v461
  %v569 = vpack.c.bf16 %v464, %v463
  %v570 = vpack.c.bf16 %v466, %v465
  %v571 = vpack.c.bf16 %v468, %v467
  %v572 = vpack.c.bf16 %v470, %v469
  %v573 = vpack.c.bf16 %v472, %v471
  %v574 = vpack.c.bf16 %v474, %v473
  %v575 = vpack.c.bf16 %v476, %v475
  %v576 = vpack.c.bf16 %v478, %v477
  %v577 = vpack.c.bf16 %v480, %v479
  %v578 = vpack.c.bf16 %v482, %v481
  %v579 = vpack.c.bf16 %v484, %v483
  %v580 = vpack.c.bf16 %v486, %v485
  %v581 = vpack.c.bf16 %v488, %v487
  %v582 = vpack.c.bf16 %v490, %v489
  %v583 = vpack.c.bf16 %v492, %v491
  %v584 = vpack.c.bf16 %v494, %v493
  %v585 = vpack.c.bf16 %v496, %v495
  %v586 = vpack.c.bf16 %v498, %v497
  %v587 = vpack.c.bf16 %v500, %v499
  %v588 = vpack.c.bf16 %v502, %v501
  %v589 = vpack.c.bf16 %v504, %v503
  %v590 = vpack.c.bf16 %v506, %v505
  %v591 = vpack.c.bf16 %v508, %v507
  %v592 = vpack.c.bf16 %v510, %v509
  %v593 = vpack.c.bf16 %v512, %v511
  %v594 = vpack.c.bf16 %v514, %v513
  %v595 = vpack.c.bf16 %v516, %v515
  %v596 = vpack.c.bf16 %v518, %v517
  %v597 = vpack.c.bf16 %v520, %v519
  %v598 = vpack.c.bf16 %v522, %v521
  %v599 = vpack.c.bf16 %v524, %v523
  %v600 = vpack.c.bf16 %v526, %v525
  %v601 = vpack.c.bf16 %v528, %v527
  %v602 = vpack.c.bf16 %v530, %v529
  %v603 = vpack.c.bf16 %v532, %v531
  %v604 = vpack.c.bf16 %v534, %v533
  %v605 = vpack.c.bf16 %v536, %v535
  %v606 = vpack.c.bf16 %v538, %v537
  %v607 = vpack.c.bf16 %v540, %v539
  %v608 = vpack.c.bf16 %v542, %v541
  %v609 = vpack.c.bf16 %v544, %v543
  %v610 = vpack.c.bf16 %v546, %v545
  %v611 = vld [vmem:[%s3] sm:$0x3]
  %v612 = vld [vmem:[%s4] sm:$0x1]
  %v614 = vlaneseq
  %v615 = vshrl.u32 %v614, 7
  %v616 = vsub.s32 0, %v615
  %v617 = vrot.slane %v612, %v616
  %vm619 = vcmask 31744
  %v621 = vsel %vm619, %v547, 0
  %v624 = vsel %vm619, %v548, 0
  %v627 = vsel %vm619, %v549, 0
  %v630 = vsel %vm619, %v550, 0
  %v633 = vsel %vm619, %v551, 0
  %v636 = vsel %vm619, %v552, 0
  %v639 = vsel %vm619, %v553, 0
  %v642 = vsel %vm619, %v554, 0
  %v645 = vsel %vm619, %v555, 0
  %v648 = vsel %vm619, %v556, 0
  %v651 = vsel %vm619, %v557, 0
  %v654 = vsel %vm619, %v558, 0
  %v657 = vsel %vm619, %v559, 0
  %v660 = vsel %vm619, %v560, 0
  %v663 = vsel %vm619, %v561, 0
  %v666 = vsel %vm619, %v562, 0
  %v669 = vsel %vm619, %v563, 0
  %v672 = vsel %vm619, %v564, 0
  %v675 = vsel %vm619, %v565, 0
  %v678 = vsel %vm619, %v566, 0
  %v681 = vsel %vm619, %v567, 0
  %v684 = vsel %vm619, %v568, 0
  %v687 = vsel %vm619, %v569, 0
  %v690 = vsel %vm619, %v570, 0
  %v693 = vsel %vm619, %v571, 0
  %v696 = vsel %vm619, %v572, 0
  %v699 = vsel %vm619, %v573, 0
  %v702 = vsel %vm619, %v574, 0
  %v705 = vsel %vm619, %v575, 0
  %v708 = vsel %vm619, %v576, 0
  %v711 = vsel %vm619, %v577, 0
  %v714 = vsel %vm619, %v578, 0
  %v717 = vsel %vm619, %v579, 0
  %v720 = vsel %vm619, %v580, 0
  %v723 = vsel %vm619, %v581, 0
  %v726 = vsel %vm619, %v582, 0
  %v729 = vsel %vm619, %v583, 0
  %v732 = vsel %vm619, %v584, 0
  %v735 = vsel %vm619, %v585, 0
  %v738 = vsel %vm619, %v586, 0
  %v741 = vsel %vm619, %v587, 0
  %v744 = vsel %vm619, %v588, 0
  %v747 = vsel %vm619, %v589, 0
  %v750 = vsel %vm619, %v590, 0
  %v753 = vsel %vm619, %v591, 0
  %v756 = vsel %vm619, %v592, 0
  %v759 = vsel %vm619, %v593, 0
  %v762 = vsel %vm619, %v594, 0
  %v765 = vsel %vm619, %v595, 0
  %v768 = vsel %vm619, %v596, 0
  %v771 = vsel %vm619, %v597, 0
  %v774 = vsel %vm619, %v598, 0
  %v777 = vsel %vm619, %v599, 0
  %v780 = vsel %vm619, %v600, 0
  %v783 = vsel %vm619, %v601, 0
  %v786 = vsel %vm619, %v602, 0
  %v789 = vsel %vm619, %v603, 0
  %v792 = vsel %vm619, %v604, 0
  %v795 = vsel %vm619, %v605, 0
  %v798 = vsel %vm619, %v606, 0
  %v801 = vsel %vm619, %v607, 0
  %v804 = vsel %vm619, %v608, 0
  %v807 = vsel %vm619, %v609, 0
  %v810 = vsel %vm619, %v610, 0
  %vm812 = vcmask 1041408
  %v814 = vsel %vm812, %v611, 0
  %816 = vmatprep.subr.bf16.mxu0 0
  %817 = vmatpush1.bf16.msra.mxu0 0
  %818 = vmatprep.subr.bf16.mxu0 0
  %819 = vmatpush1.bf16.msra.mxu0 0
  %820 = vmatprep.subr.bf16.mxu0 0
  %821 = vmatpush1.bf16.msra.mxu0 0
  %822 = vmatprep.subr.bf16.mxu0 0
  %823 = vmatpush1.bf16.msra.mxu0 0
  %824 = vmatprep.subr.bf16.mxu0 0
  %825 = vmatpush1.bf16.msra.mxu0 0
  %826 = vmatprep.subr.bf16.mxu0 0
  %827 = vmatpush1.bf16.msra.mxu0 0
  %828 = vmatprep.subr.bf16.mxu0 0
  %829 = vmatpush1.bf16.msra.mxu0 0
  %830 = vmatprep.subr.bf16.mxu0 0
  %831 = vmatpush1.bf16.msra.mxu0 %v814
  %832 = vmatprep.subr.bf16.mxu0 0
  %833 = vmatpush2.bf16.msra.mxu0 0
  %834 = vmatprep.subr.bf16.mxu0 0
  %835 = vmatpush2.bf16.msra.mxu0 0
  %836 = vmatprep.subr.bf16.mxu0 0
  %837 = vmatpush2.bf16.msra.mxu0 0
  %838 = vmatprep.subr.bf16.mxu0 0
  %839 = vmatpush2.bf16.msra.mxu0 0
  %840 = vmatprep.subr.bf16.mxu0 0
  %841 = vmatpush2.bf16.msra.mxu0 0
  %842 = vmatprep.subr.bf16.mxu0 0
  %843 = vmatpush2.bf16.msra.mxu0 0
  %844 = vmatprep.subr.bf16.mxu0 0
  %845 = vmatpush2.bf16.msra.mxu0 0
  %846 = vmatprep.subr.bf16.mxu0 0
  %847 = vmatpush2.bf16.msra.mxu0 0
  %848 = vmatprep.mubr.bf16.mxu0 0
  %849 = vmatmul.mubr.bf16.gmra.mxu0 %v621
  %v850 = vpop.f32.mrf.mxu0
  %v851 = vadd.f32 %v617, %v850
  %v852 = vpop.f32.mrf.mxu0
  %v853 = vpop.f32.mrf.mxu0
  %v854 = vadd.f32 %v617, %v853
  %v855 = vpop.f32.mrf.mxu0
  %856 = vmatprep.mubr.bf16.mxu0 0
  %857 = vmatmul.mubr.bf16.gmra.mxu0 %v624
  %v858 = vpop.f32.mrf.mxu0
  %v859 = vadd.f32 %v617, %v858
  %v860 = vpop.f32.mrf.mxu0
  %v861 = vpop.f32.mrf.mxu0
  %v862 = vadd.f32 %v617, %v861
  %v863 = vpop.f32.mrf.mxu0
  %864 = vmatprep.mubr.bf16.mxu0 0
  %865 = vmatmul.mubr.bf16.gmra.mxu0 %v627
  %v866 = vpop.f32.mrf.mxu0
  %v867 = vadd.f32 %v617, %v866
  %v868 = vpop.f32.mrf.mxu0
  %v869 = vpop.f32.mrf.mxu0
  %v870 = vadd.f32 %v617, %v869
  %v871 = vpop.f32.mrf.mxu0
  %872 = vmatprep.mubr.bf16.mxu0 0
  %873 = vmatmul.mubr.bf16.gmra.mxu0 %v630
  %v874 = vpop.f32.mrf.mxu0
  %v875 = vadd.f32 %v617, %v874
  %v876 = vpop.f32.mrf.mxu0
  %v877 = vpop.f32.mrf.mxu0
  %v878 = vadd.f32 %v617, %v877
  %v879 = vpop.f32.mrf.mxu0
  %880 = vmatprep.mubr.bf16.mxu0 0
  %881 = vmatmul.mubr.bf16.gmra.mxu0 %v633
  %v882 = vpop.f32.mrf.mxu0
  %v883 = vadd.f32 %v617, %v882
  %v884 = vpop.f32.mrf.mxu0
  %v885 = vpop.f32.mrf.mxu0
  %v886 = vadd.f32 %v617, %v885
  %v887 = vpop.f32.mrf.mxu0
  %888 = vmatprep.mubr.bf16.mxu0 0
  %889 = vmatmul.mubr.bf16.gmra.mxu0 %v636
  %v890 = vpop.f32.mrf.mxu0
  %v891 = vadd.f32 %v617, %v890
  %v892 = vpop.f32.mrf.mxu0
  %v893 = vpop.f32.mrf.mxu0
  %v894 = vadd.f32 %v617, %v893
  %v895 = vpop.f32.mrf.mxu0
  %896 = vmatprep.mubr.bf16.mxu0 0
  %897 = vmatmul.mubr.bf16.gmra.mxu0 %v639
  %v898 = vpop.f32.mrf.mxu0
  %v899 = vadd.f32 %v617, %v898
  %v900 = vpop.f32.mrf.mxu0
  %v901 = vpop.f32.mrf.mxu0
  %v902 = vadd.f32 %v617, %v901
  %v903 = vpop.f32.mrf.mxu0
  %904 = vmatprep.mubr.bf16.mxu0 0
  %905 = vmatmul.mubr.bf16.gmra.mxu0 %v642
  %v906 = vpop.f32.mrf.mxu0
  %v907 = vadd.f32 %v617, %v906
  %v908 = vpop.f32.mrf.mxu0
  %v909 = vpop.f32.mrf.mxu0
  %v910 = vadd.f32 %v617, %v909
  %v911 = vpop.f32.mrf.mxu0
  %912 = vmatprep.mubr.bf16.mxu0 0
  %913 = vmatmul.mubr.bf16.gmra.mxu0 %v645
  %v914 = vpop.f32.mrf.mxu0
  %v915 = vadd.f32 %v617, %v914
  %v916 = vpop.f32.mrf.mxu0
  %v917 = vpop.f32.mrf.mxu0
  %v918 = vadd.f32 %v617, %v917
  %v919 = vpop.f32.mrf.mxu0
  %920 = vmatprep.mubr.bf16.mxu0 0
  %921 = vmatmul.mubr.bf16.gmra.mxu0 %v648
  %v922 = vpop.f32.mrf.mxu0
  %v923 = vadd.f32 %v617, %v922
  %v924 = vpop.f32.mrf.mxu0
  %v925 = vpop.f32.mrf.mxu0
  %v926 = vadd.f32 %v617, %v925
  %v927 = vpop.f32.mrf.mxu0
  %928 = vmatprep.mubr.bf16.mxu0 0
  %929 = vmatmul.mubr.bf16.gmra.mxu0 %v651
  %v930 = vpop.f32.mrf.mxu0
  %v931 = vadd.f32 %v617, %v930
  %v932 = vpop.f32.mrf.mxu0
  %v933 = vpop.f32.mrf.mxu0
  %v934 = vadd.f32 %v617, %v933
  %v935 = vpop.f32.mrf.mxu0
  %936 = vmatprep.mubr.bf16.mxu0 0
  %937 = vmatmul.mubr.bf16.gmra.mxu0 %v654
  %v938 = vpop.f32.mrf.mxu0
  %v939 = vadd.f32 %v617, %v938
  %v940 = vpop.f32.mrf.mxu0
  %v941 = vpop.f32.mrf.mxu0
  %v942 = vadd.f32 %v617, %v941
  %v943 = vpop.f32.mrf.mxu0
  %944 = vmatprep.mubr.bf16.mxu0 0
  %945 = vmatmul.mubr.bf16.gmra.mxu0 %v657
  %v946 = vpop.f32.mrf.mxu0
  %v947 = vadd.f32 %v617, %v946
  %v948 = vpop.f32.mrf.mxu0
  %v949 = vpop.f32.mrf.mxu0
  %v950 = vadd.f32 %v617, %v949
  %v951 = vpop.f32.mrf.mxu0
  %952 = vmatprep.mubr.bf16.mxu0 0
  %953 = vmatmul.mubr.bf16.gmra.mxu0 %v660
  %v954 = vpop.f32.mrf.mxu0
  %v955 = vadd.f32 %v617, %v954
  %v956 = vpop.f32.mrf.mxu0
  %v957 = vpop.f32.mrf.mxu0
  %v958 = vadd.f32 %v617, %v957
  %v959 = vpop.f32.mrf.mxu0
  %960 = vmatprep.mubr.bf16.mxu0 0
  %961 = vmatmul.mubr.bf16.gmra.mxu0 %v663
  %v962 = vpop.f32.mrf.mxu0
  %v963 = vadd.f32 %v617, %v962
  %v964 = vpop.f32.mrf.mxu0
  %v965 = vpop.f32.mrf.mxu0
  %v966 = vadd.f32 %v617, %v965
  %v967 = vpop.f32.mrf.mxu0
  %968 = vmatprep.mubr.bf16.mxu0 0
  %969 = vmatmul.mubr.bf16.gmra.mxu0 %v666
  %v970 = vpop.f32.mrf.mxu0
  %v971 = vadd.f32 %v617, %v970
  %v972 = vpop.f32.mrf.mxu0
  %v973 = vpop.f32.mrf.mxu0
  %v974 = vadd.f32 %v617, %v973
  %v975 = vpop.f32.mrf.mxu0
  %976 = vmatprep.mubr.bf16.mxu0 0
  %977 = vmatmul.mubr.bf16.gmra.mxu0 %v669
  %v978 = vpop.f32.mrf.mxu0
  %v979 = vadd.f32 %v617, %v978
  %v980 = vpop.f32.mrf.mxu0
  %v981 = vpop.f32.mrf.mxu0
  %v982 = vadd.f32 %v617, %v981
  %v983 = vpop.f32.mrf.mxu0
  %984 = vmatprep.mubr.bf16.mxu0 0
  %985 = vmatmul.mubr.bf16.gmra.mxu0 %v672
  %v986 = vpop.f32.mrf.mxu0
  %v987 = vadd.f32 %v617, %v986
  %v988 = vpop.f32.mrf.mxu0
  %v989 = vpop.f32.mrf.mxu0
  %v990 = vadd.f32 %v617, %v989
  %v991 = vpop.f32.mrf.mxu0
  %992 = vmatprep.mubr.bf16.mxu0 0
  %993 = vmatmul.mubr.bf16.gmra.mxu0 %v675
  %v994 = vpop.f32.mrf.mxu0
  %v995 = vadd.f32 %v617, %v994
  %v996 = vpop.f32.mrf.mxu0
  %v997 = vpop.f32.mrf.mxu0
  %v998 = vadd.f32 %v617, %v997
  %v999 = vpop.f32.mrf.mxu0
  %1000 = vmatprep.mubr.bf16.mxu0 0
  %1001 = vmatmul.mubr.bf16.gmra.mxu0 %v678
  %v1002 = vpop.f32.mrf.mxu0
  %v1003 = vadd.f32 %v617, %v1002
  %v1004 = vpop.f32.mrf.mxu0
  %v1005 = vpop.f32.mrf.mxu0
  %v1006 = vadd.f32 %v617, %v1005
  %v1007 = vpop.f32.mrf.mxu0
  %1008 = vmatprep.mubr.bf16.mxu0 0
  %1009 = vmatmul.mubr.bf16.gmra.mxu0 %v681
  %v1010 = vpop.f32.mrf.mxu0
  %v1011 = vadd.f32 %v617, %v1010
  %v1012 = vpop.f32.mrf.mxu0
  %v1013 = vpop.f32.mrf.mxu0
  %v1014 = vadd.f32 %v617, %v1013
  %v1015 = vpop.f32.mrf.mxu0
  %1016 = vmatprep.mubr.bf16.mxu0 0
  %1017 = vmatmul.mubr.bf16.gmra.mxu0 %v684
  %v1018 = vpop.f32.mrf.mxu0
  %v1019 = vadd.f32 %v617, %v1018
  %v1020 = vpop.f32.mrf.mxu0
  %v1021 = vpop.f32.mrf.mxu0
  %v1022 = vadd.f32 %v617, %v1021
  %v1023 = vpop.f32.mrf.mxu0
  %1024 = vmatprep.mubr.bf16.mxu0 0
  %1025 = vmatmul.mubr.bf16.gmra.mxu0 %v687
  %v1026 = vpop.f32.mrf.mxu0
  %v1027 = vadd.f32 %v617, %v1026
  %v1028 = vpop.f32.mrf.mxu0
  %v1029 = vpop.f32.mrf.mxu0
  %v1030 = vadd.f32 %v617, %v1029
  %v1031 = vpop.f32.mrf.mxu0
  %1032 = vmatprep.mubr.bf16.mxu0 0
  %1033 = vmatmul.mubr.bf16.gmra.mxu0 %v690
  %v1034 = vpop.f32.mrf.mxu0
  %v1035 = vadd.f32 %v617, %v1034
  %v1036 = vpop.f32.mrf.mxu0
  %v1037 = vpop.f32.mrf.mxu0
  %v1038 = vadd.f32 %v617, %v1037
  %v1039 = vpop.f32.mrf.mxu0
  %1040 = vmatprep.mubr.bf16.mxu0 0
  %1041 = vmatmul.mubr.bf16.gmra.mxu0 %v693
  %v1042 = vpop.f32.mrf.mxu0
  %v1043 = vadd.f32 %v617, %v1042
  %v1044 = vpop.f32.mrf.mxu0
  %v1045 = vpop.f32.mrf.mxu0
  %v1046 = vadd.f32 %v617, %v1045
  %v1047 = vpop.f32.mrf.mxu0
  %1048 = vmatprep.mubr.bf16.mxu0 0
  %1049 = vmatmul.mubr.bf16.gmra.mxu0 %v696
  %v1050 = vpop.f32.mrf.mxu0
  %v1051 = vadd.f32 %v617, %v1050
  %v1052 = vpop.f32.mrf.mxu0
  %v1053 = vpop.f32.mrf.mxu0
  %v1054 = vadd.f32 %v617, %v1053
  %v1055 = vpop.f32.mrf.mxu0
  %1056 = vmatprep.mubr.bf16.mxu0 0
  %1057 = vmatmul.mubr.bf16.gmra.mxu0 %v699
  %v1058 = vpop.f32.mrf.mxu0
  %v1059 = vadd.f32 %v617, %v1058
  %v1060 = vpop.f32.mrf.mxu0
  %v1061 = vpop.f32.mrf.mxu0
  %v1062 = vadd.f32 %v617, %v1061
  %v1063 = vpop.f32.mrf.mxu0
  %1064 = vmatprep.mubr.bf16.mxu0 0
  %1065 = vmatmul.mubr.bf16.gmra.mxu0 %v702
  %v1066 = vpop.f32.mrf.mxu0
  %v1067 = vadd.f32 %v617, %v1066
  %v1068 = vpop.f32.mrf.mxu0
  %v1069 = vpop.f32.mrf.mxu0
  %v1070 = vadd.f32 %v617, %v1069
  %v1071 = vpop.f32.mrf.mxu0
  %1072 = vmatprep.mubr.bf16.mxu0 0
  %1073 = vmatmul.mubr.bf16.gmra.mxu0 %v705
  %v1074 = vpop.f32.mrf.mxu0
  %v1075 = vadd.f32 %v617, %v1074
  %v1076 = vpop.f32.mrf.mxu0
  %v1077 = vpop.f32.mrf.mxu0
  %v1078 = vadd.f32 %v617, %v1077
  %v1079 = vpop.f32.mrf.mxu0
  %1080 = vmatprep.mubr.bf16.mxu0 0
  %1081 = vmatmul.mubr.bf16.gmra.mxu0 %v708
  %v1082 = vpop.f32.mrf.mxu0
  %v1083 = vadd.f32 %v617, %v1082
  %v1084 = vpop.f32.mrf.mxu0
  %v1085 = vpop.f32.mrf.mxu0
  %v1086 = vadd.f32 %v617, %v1085
  %v1087 = vpop.f32.mrf.mxu0
  %1088 = vmatprep.mubr.bf16.mxu0 0
  %1089 = vmatmul.mubr.bf16.gmra.mxu0 %v711
  %v1090 = vpop.f32.mrf.mxu0
  %v1091 = vadd.f32 %v617, %v1090
  %v1092 = vpop.f32.mrf.mxu0
  %v1093 = vpop.f32.mrf.mxu0
  %v1094 = vadd.f32 %v617, %v1093
  %v1095 = vpop.f32.mrf.mxu0
  %1096 = vmatprep.mubr.bf16.mxu0 0
  %1097 = vmatmul.mubr.bf16.gmra.mxu0 %v714
  %v1098 = vpop.f32.mrf.mxu0
  %v1099 = vadd.f32 %v617, %v1098
  %v1100 = vpop.f32.mrf.mxu0
  %v1101 = vpop.f32.mrf.mxu0
  %v1102 = vadd.f32 %v617, %v1101
  %v1103 = vpop.f32.mrf.mxu0
  %1104 = vmatprep.mubr.bf16.mxu0 0
  %1105 = vmatmul.mubr.bf16.gmra.mxu0 %v717
  %v1106 = vpop.f32.mrf.mxu0
  %v1107 = vadd.f32 %v617, %v1106
  %v1108 = vpop.f32.mrf.mxu0
  %v1109 = vpop.f32.mrf.mxu0
  %v1110 = vadd.f32 %v617, %v1109
  %v1111 = vpop.f32.mrf.mxu0
  %1112 = vmatprep.mubr.bf16.mxu0 0
  %1113 = vmatmul.mubr.bf16.gmra.mxu0 %v720
  %v1114 = vpop.f32.mrf.mxu0
  %v1115 = vadd.f32 %v617, %v1114
  %v1116 = vpop.f32.mrf.mxu0
  %v1117 = vpop.f32.mrf.mxu0
  %v1118 = vadd.f32 %v617, %v1117
  %v1119 = vpop.f32.mrf.mxu0
  %1120 = vmatprep.mubr.bf16.mxu0 0
  %1121 = vmatmul.mubr.bf16.gmra.mxu0 %v723
  %v1122 = vpop.f32.mrf.mxu0
  %v1123 = vadd.f32 %v617, %v1122
  %v1124 = vpop.f32.mrf.mxu0
  %v1125 = vpop.f32.mrf.mxu0
  %v1126 = vadd.f32 %v617, %v1125
  %v1127 = vpop.f32.mrf.mxu0
  %1128 = vmatprep.mubr.bf16.mxu0 0
  %1129 = vmatmul.mubr.bf16.gmra.mxu0 %v726
  %v1130 = vpop.f32.mrf.mxu0
  %v1131 = vadd.f32 %v617, %v1130
  %v1132 = vpop.f32.mrf.mxu0
  %v1133 = vpop.f32.mrf.mxu0
  %v1134 = vadd.f32 %v617, %v1133
  %v1135 = vpop.f32.mrf.mxu0
  %1136 = vmatprep.mubr.bf16.mxu0 0
  %1137 = vmatmul.mubr.bf16.gmra.mxu0 %v729
  %v1138 = vpop.f32.mrf.mxu0
  %v1139 = vadd.f32 %v617, %v1138
  %v1140 = vpop.f32.mrf.mxu0
  %v1141 = vpop.f32.mrf.mxu0
  %v1142 = vadd.f32 %v617, %v1141
  %v1143 = vpop.f32.mrf.mxu0
  %1144 = vmatprep.mubr.bf16.mxu0 0
  %1145 = vmatmul.mubr.bf16.gmra.mxu0 %v732
  %v1146 = vpop.f32.mrf.mxu0
  %v1147 = vadd.f32 %v617, %v1146
  %v1148 = vpop.f32.mrf.mxu0
  %v1149 = vpop.f32.mrf.mxu0
  %v1150 = vadd.f32 %v617, %v1149
  %v1151 = vpop.f32.mrf.mxu0
  %1152 = vmatprep.mubr.bf16.mxu0 0
  %1153 = vmatmul.mubr.bf16.gmra.mxu0 %v735
  %v1154 = vpop.f32.mrf.mxu0
  %v1155 = vadd.f32 %v617, %v1154
  %v1156 = vpop.f32.mrf.mxu0
  %v1157 = vpop.f32.mrf.mxu0
  %v1158 = vadd.f32 %v617, %v1157
  %v1159 = vpop.f32.mrf.mxu0
  %1160 = vmatprep.mubr.bf16.mxu0 0
  %1161 = vmatmul.mubr.bf16.gmra.mxu0 %v738
  %v1162 = vpop.f32.mrf.mxu0
  %v1163 = vadd.f32 %v617, %v1162
  %v1164 = vpop.f32.mrf.mxu0
  %v1165 = vpop.f32.mrf.mxu0
  %v1166 = vadd.f32 %v617, %v1165
  %v1167 = vpop.f32.mrf.mxu0
  %1168 = vmatprep.mubr.bf16.mxu0 0
  %1169 = vmatmul.mubr.bf16.gmra.mxu0 %v741
  %v1170 = vpop.f32.mrf.mxu0
  %v1171 = vadd.f32 %v617, %v1170
  %v1172 = vpop.f32.mrf.mxu0
  %v1173 = vpop.f32.mrf.mxu0
  %v1174 = vadd.f32 %v617, %v1173
  %v1175 = vpop.f32.mrf.mxu0
  %1176 = vmatprep.mubr.bf16.mxu0 0
  %1177 = vmatmul.mubr.bf16.gmra.mxu0 %v744
  %v1178 = vpop.f32.mrf.mxu0
  %v1179 = vadd.f32 %v617, %v1178
  %v1180 = vpop.f32.mrf.mxu0
  %v1181 = vpop.f32.mrf.mxu0
  %v1182 = vadd.f32 %v617, %v1181
  %v1183 = vpop.f32.mrf.mxu0
  %1184 = vmatprep.mubr.bf16.mxu0 0
  %1185 = vmatmul.mubr.bf16.gmra.mxu0 %v747
  %v1186 = vpop.f32.mrf.mxu0
  %v1187 = vadd.f32 %v617, %v1186
  %v1188 = vpop.f32.mrf.mxu0
  %v1189 = vpop.f32.mrf.mxu0
  %v1190 = vadd.f32 %v617, %v1189
  %v1191 = vpop.f32.mrf.mxu0
  %1192 = vmatprep.mubr.bf16.mxu0 0
  %1193 = vmatmul.mubr.bf16.gmra.mxu0 %v750
  %v1194 = vpop.f32.mrf.mxu0
  %v1195 = vadd.f32 %v617, %v1194
  %v1196 = vpop.f32.mrf.mxu0
  %v1197 = vpop.f32.mrf.mxu0
  %v1198 = vadd.f32 %v617, %v1197
  %v1199 = vpop.f32.mrf.mxu0
  %1200 = vmatprep.mubr.bf16.mxu0 0
  %1201 = vmatmul.mubr.bf16.gmra.mxu0 %v753
  %v1202 = vpop.f32.mrf.mxu0
  %v1203 = vadd.f32 %v617, %v1202
  %v1204 = vpop.f32.mrf.mxu0
  %v1205 = vpop.f32.mrf.mxu0
  %v1206 = vadd.f32 %v617, %v1205
  %v1207 = vpop.f32.mrf.mxu0
  %1208 = vmatprep.mubr.bf16.mxu0 0
  %1209 = vmatmul.mubr.bf16.gmra.mxu0 %v756
  %v1210 = vpop.f32.mrf.mxu0
  %v1211 = vadd.f32 %v617, %v1210
  %v1212 = vpop.f32.mrf.mxu0
  %v1213 = vpop.f32.mrf.mxu0
  %v1214 = vadd.f32 %v617, %v1213
  %v1215 = vpop.f32.mrf.mxu0
  %1216 = vmatprep.mubr.bf16.mxu0 0
  %1217 = vmatmul.mubr.bf16.gmra.mxu0 %v759
  %v1218 = vpop.f32.mrf.mxu0
  %v1219 = vadd.f32 %v617, %v1218
  %v1220 = vpop.f32.mrf.mxu0
  %v1221 = vpop.f32.mrf.mxu0
  %v1222 = vadd.f32 %v617, %v1221
  %v1223 = vpop.f32.mrf.mxu0
  %1224 = vmatprep.mubr.bf16.mxu0 0
  %1225 = vmatmul.mubr.bf16.gmra.mxu0 %v762
  %v1226 = vpop.f32.mrf.mxu0
  %v1227 = vadd.f32 %v617, %v1226
  %v1228 = vpop.f32.mrf.mxu0
  %v1229 = vpop.f32.mrf.mxu0
  %v1230 = vadd.f32 %v617, %v1229
  %v1231 = vpop.f32.mrf.mxu0
  %1232 = vmatprep.mubr.bf16.mxu0 0
  %1233 = vmatmul.mubr.bf16.gmra.mxu0 %v765
  %v1234 = vpop.f32.mrf.mxu0
  %v1235 = vadd.f32 %v617, %v1234
  %v1236 = vpop.f32.mrf.mxu0
  %v1237 = vpop.f32.mrf.mxu0
  %v1238 = vadd.f32 %v617, %v1237
  %v1239 = vpop.f32.mrf.mxu0
  %1240 = vmatprep.mubr.bf16.mxu0 0
  %1241 = vmatmul.mubr.bf16.gmra.mxu0 %v768
  %v1242 = vpop.f32.mrf.mxu0
  %v1243 = vadd.f32 %v617, %v1242
  %v1244 = vpop.f32.mrf.mxu0
  %v1245 = vpop.f32.mrf.mxu0
  %v1246 = vadd.f32 %v617, %v1245
  %v1247 = vpop.f32.mrf.mxu0
  %1248 = vmatprep.mubr.bf16.mxu0 0
  %1249 = vmatmul.mubr.bf16.gmra.mxu0 %v771
  %v1250 = vpop.f32.mrf.mxu0
  %v1251 = vadd.f32 %v617, %v1250
  %v1252 = vpop.f32.mrf.mxu0
  %v1253 = vpop.f32.mrf.mxu0
  %v1254 = vadd.f32 %v617, %v1253
  %v1255 = vpop.f32.mrf.mxu0
  %1256 = vmatprep.mubr.bf16.mxu0 0
  %1257 = vmatmul.mubr.bf16.gmra.mxu0 %v774
  %v1258 = vpop.f32.mrf.mxu0
  %v1259 = vadd.f32 %v617, %v1258
  %v1260 = vpop.f32.mrf.mxu0
  %v1261 = vpop.f32.mrf.mxu0
  %v1262 = vadd.f32 %v617, %v1261
  %v1263 = vpop.f32.mrf.mxu0
  %1264 = vmatprep.mubr.bf16.mxu0 0
  %1265 = vmatmul.mubr.bf16.gmra.mxu0 %v777
  %v1266 = vpop.f32.mrf.mxu0
  %v1267 = vadd.f32 %v617, %v1266
  %v1268 = vpop.f32.mrf.mxu0
  %v1269 = vpop.f32.mrf.mxu0
  %v1270 = vadd.f32 %v617, %v1269
  %v1271 = vpop.f32.mrf.mxu0
  %1272 = vmatprep.mubr.bf16.mxu0 0
  %1273 = vmatmul.mubr.bf16.gmra.mxu0 %v780
  %v1274 = vpop.f32.mrf.mxu0
  %v1275 = vadd.f32 %v617, %v1274
  %v1276 = vpop.f32.mrf.mxu0
  %v1277 = vpop.f32.mrf.mxu0
  %v1278 = vadd.f32 %v617, %v1277
  %v1279 = vpop.f32.mrf.mxu0
  %1280 = vmatprep.mubr.bf16.mxu0 0
  %1281 = vmatmul.mubr.bf16.gmra.mxu0 %v783
  %v1282 = vpop.f32.mrf.mxu0
  %v1283 = vadd.f32 %v617, %v1282
  %v1284 = vpop.f32.mrf.mxu0
  %v1285 = vpop.f32.mrf.mxu0
  %v1286 = vadd.f32 %v617, %v1285
  %v1287 = vpop.f32.mrf.mxu0
  %1288 = vmatprep.mubr.bf16.mxu0 0
  %1289 = vmatmul.mubr.bf16.gmra.mxu0 %v786
  %v1290 = vpop.f32.mrf.mxu0
  %v1291 = vadd.f32 %v617, %v1290
  %v1292 = vpop.f32.mrf.mxu0
  %v1293 = vpop.f32.mrf.mxu0
  %v1294 = vadd.f32 %v617, %v1293
  %v1295 = vpop.f32.mrf.mxu0
  %1296 = vmatprep.mubr.bf16.mxu0 0
  %1297 = vmatmul.mubr.bf16.gmra.mxu0 %v789
  %v1298 = vpop.f32.mrf.mxu0
  %v1299 = vadd.f32 %v617, %v1298
  %v1300 = vpop.f32.mrf.mxu0
  %v1301 = vpop.f32.mrf.mxu0
  %v1302 = vadd.f32 %v617, %v1301
  %v1303 = vpop.f32.mrf.mxu0
  %1304 = vmatprep.mubr.bf16.mxu0 0
  %1305 = vmatmul.mubr.bf16.gmra.mxu0 %v792
  %v1306 = vpop.f32.mrf.mxu0
  %v1307 = vadd.f32 %v617, %v1306
  %v1308 = vpop.f32.mrf.mxu0
  %v1309 = vpop.f32.mrf.mxu0
  %v1310 = vadd.f32 %v617, %v1309
  %v1311 = vpop.f32.mrf.mxu0
  %1312 = vmatprep.mubr.bf16.mxu0 0
  %1313 = vmatmul.mubr.bf16.gmra.mxu0 %v795
  %v1314 = vpop.f32.mrf.mxu0
  %v1315 = vadd.f32 %v617, %v1314
  %v1316 = vpop.f32.mrf.mxu0
  %v1317 = vpop.f32.mrf.mxu0
  %v1318 = vadd.f32 %v617, %v1317
  %v1319 = vpop.f32.mrf.mxu0
  %1320 = vmatprep.mubr.bf16.mxu0 0
  %1321 = vmatmul.mubr.bf16.gmra.mxu0 %v798
  %v1322 = vpop.f32.mrf.mxu0
  %v1323 = vadd.f32 %v617, %v1322
  %v1324 = vpop.f32.mrf.mxu0
  %v1325 = vpop.f32.mrf.mxu0
  %v1326 = vadd.f32 %v617, %v1325
  %v1327 = vpop.f32.mrf.mxu0
  %1328 = vmatprep.mubr.bf16.mxu0 0
  %1329 = vmatmul.mubr.bf16.gmra.mxu0 %v801
  %v1330 = vpop.f32.mrf.mxu0
  %v1331 = vadd.f32 %v617, %v1330
  %v1332 = vpop.f32.mrf.mxu0
  %v1333 = vpop.f32.mrf.mxu0
  %v1334 = vadd.f32 %v617, %v1333
  %v1335 = vpop.f32.mrf.mxu0
  %1336 = vmatprep.mubr.bf16.mxu0 0
  %1337 = vmatmul.mubr.bf16.gmra.mxu0 %v804
  %v1338 = vpop.f32.mrf.mxu0
  %v1339 = vadd.f32 %v617, %v1338
  %v1340 = vpop.f32.mrf.mxu0
  %v1341 = vpop.f32.mrf.mxu0
  %v1342 = vadd.f32 %v617, %v1341
  %v1343 = vpop.f32.mrf.mxu0
  %1344 = vmatprep.mubr.bf16.mxu0 0
  %1345 = vmatmul.mubr.bf16.gmra.mxu0 %v807
  %v1346 = vpop.f32.mrf.mxu0
  %v1347 = vadd.f32 %v617, %v1346
  %v1348 = vpop.f32.mrf.mxu0
  %v1349 = vpop.f32.mrf.mxu0
  %v1350 = vadd.f32 %v617, %v1349
  %v1351 = vpop.f32.mrf.mxu0
  %1352 = vmatprep.mubr.bf16.mxu0 0
  %1353 = vmatmul.mubr.bf16.gmra.mxu0 %v810
  %v1354 = vpop.f32.mrf.mxu0
  %v1355 = vadd.f32 %v617, %v1354
  %v1356 = vpop.f32.mrf.mxu0
  %v1357 = vpop.f32.mrf.mxu0
  %v1358 = vadd.f32 %v617, %v1357
  %v1359 = vpop.f32.mrf.mxu0
  %1360 = vdwg.mxu0
  %v1361 = vmax.f32 %v851, 0.0
  %v1362 = vmax.f32 %v854, 0.0
  %v1363 = vmax.f32 %v859, 0.0
  %v1364 = vmax.f32 %v862, 0.0
  %v1365 = vmax.f32 %v867, 0.0
  %v1366 = vmax.f32 %v870, 0.0
  %v1367 = vmax.f32 %v875, 0.0
  %v1368 = vmax.f32 %v878, 0.0
  %v1369 = vmax.f32 %v883, 0.0
  %v1370 = vmax.f32 %v886, 0.0
  %v1371 = vmax.f32 %v891, 0.0
  %v1372 = vmax.f32 %v894, 0.0
  %v1373 = vmax.f32 %v899, 0.0
  %v1374 = vmax.f32 %v902, 0.0
  %v1375 = vmax.f32 %v907, 0.0
  %v1376 = vmax.f32 %v910, 0.0
  %v1377 = vmax.f32 %v915, 0.0
  %v1378 = vmax.f32 %v918, 0.0
  %v1379 = vmax.f32 %v923, 0.0
  %v1380 = vmax.f32 %v926, 0.0
  %v1381 = vmax.f32 %v931, 0.0
  %v1382 = vmax.f32 %v934, 0.0
  %v1383 = vmax.f32 %v939, 0.0
  %v1384 = vmax.f32 %v942, 0.0
  %v1385 = vmax.f32 %v947, 0.0
  %v1386 = vmax.f32 %v950, 0.0
  %v1387 = vmax.f32 %v955, 0.0
  %v1388 = vmax.f32 %v958, 0.0
  %v1389 = vmax.f32 %v963, 0.0
  %v1390 = vmax.f32 %v966, 0.0
  %v1391 = vmax.f32 %v971, 0.0
  %v1392 = vmax.f32 %v974, 0.0
  %v1393 = vmax.f32 %v979, 0.0
  %v1394 = vmax.f32 %v982, 0.0
  %v1395 = vmax.f32 %v987, 0.0
  %v1396 = vmax.f32 %v990, 0.0
  %v1397 = vmax.f32 %v995, 0.0
  %v1398 = vmax.f32 %v998, 0.0
  %v1399 = vmax.f32 %v1003, 0.0
  %v1400 = vmax.f32 %v1006, 0.0
  %v1401 = vmax.f32 %v1011, 0.0
  %v1402 = vmax.f32 %v1014, 0.0
  %v1403 = vmax.f32 %v1019, 0.0
  %v1404 = vmax.f32 %v1022, 0.0
  %v1405 = vmax.f32 %v1027, 0.0
  %v1406 = vmax.f32 %v1030, 0.0
  %v1407 = vmax.f32 %v1035, 0.0
  %v1408 = vmax.f32 %v1038, 0.0
  %v1409 = vmax.f32 %v1043, 0.0
  %v1410 = vmax.f32 %v1046, 0.0
  %v1411 = vmax.f32 %v1051, 0.0
  %v1412 = vmax.f32 %v1054, 0.0
  %v1413 = vmax.f32 %v1059, 0.0
  %v1414 = vmax.f32 %v1062, 0.0
  %v1415 = vmax.f32 %v1067, 0.0
  %v1416 = vmax.f32 %v1070, 0.0
  %v1417 = vmax.f32 %v1075, 0.0
  %v1418 = vmax.f32 %v1078, 0.0
  %v1419 = vmax.f32 %v1083, 0.0
  %v1420 = vmax.f32 %v1086, 0.0
  %v1421 = vmax.f32 %v1091, 0.0
  %v1422 = vmax.f32 %v1094, 0.0
  %v1423 = vmax.f32 %v1099, 0.0
  %v1424 = vmax.f32 %v1102, 0.0
  %v1425 = vmax.f32 %v1107, 0.0
  %v1426 = vmax.f32 %v1110, 0.0
  %v1427 = vmax.f32 %v1115, 0.0
  %v1428 = vmax.f32 %v1118, 0.0
  %v1429 = vmax.f32 %v1123, 0.0
  %v1430 = vmax.f32 %v1126, 0.0
  %v1431 = vmax.f32 %v1131, 0.0
  %v1432 = vmax.f32 %v1134, 0.0
  %v1433 = vmax.f32 %v1139, 0.0
  %v1434 = vmax.f32 %v1142, 0.0
  %v1435 = vmax.f32 %v1147, 0.0
  %v1436 = vmax.f32 %v1150, 0.0
  %v1437 = vmax.f32 %v1155, 0.0
  %v1438 = vmax.f32 %v1158, 0.0
  %v1439 = vmax.f32 %v1163, 0.0
  %v1440 = vmax.f32 %v1166, 0.0
  %v1441 = vmax.f32 %v1171, 0.0
  %v1442 = vmax.f32 %v1174, 0.0
  %v1443 = vmax.f32 %v1179, 0.0
  %v1444 = vmax.f32 %v1182, 0.0
  %v1445 = vmax.f32 %v1187, 0.0
  %v1446 = vmax.f32 %v1190, 0.0
  %v1447 = vmax.f32 %v1195, 0.0
  %v1448 = vmax.f32 %v1198, 0.0
  %v1449 = vmax.f32 %v1203, 0.0
  %v1450 = vmax.f32 %v1206, 0.0
  %v1451 = vmax.f32 %v1211, 0.0
  %v1452 = vmax.f32 %v1214, 0.0
  %v1453 = vmax.f32 %v1219, 0.0
  %v1454 = vmax.f32 %v1222, 0.0
  %v1455 = vmax.f32 %v1227, 0.0
  %v1456 = vmax.f32 %v1230, 0.0
  %v1457 = vmax.f32 %v1235, 0.0
  %v1458 = vmax.f32 %v1238, 0.0
  %v1459 = vmax.f32 %v1243, 0.0
  %v1460 = vmax.f32 %v1246, 0.0
  %v1461 = vmax.f32 %v1251, 0.0
  %v1462 = vmax.f32 %v1254, 0.0
  %v1463 = vmax.f32 %v1259, 0.0
  %v1464 = vmax.f32 %v1262, 0.0
  %v1465 = vmax.f32 %v1267, 0.0
  %v1466 = vmax.f32 %v1270, 0.0
  %v1467 = vmax.f32 %v1275, 0.0
  %v1468 = vmax.f32 %v1278, 0.0
  %v1469 = vmax.f32 %v1283, 0.0
  %v1470 = vmax.f32 %v1286, 0.0
  %v1471 = vmax.f32 %v1291, 0.0
  %v1472 = vmax.f32 %v1294, 0.0
  %v1473 = vmax.f32 %v1299, 0.0
  %v1474 = vmax.f32 %v1302, 0.0
  %v1475 = vmax.f32 %v1307, 0.0
  %v1476 = vmax.f32 %v1310, 0.0
  %v1477 = vmax.f32 %v1315, 0.0
  %v1478 = vmax.f32 %v1318, 0.0
  %v1479 = vmax.f32 %v1323, 0.0
  %v1480 = vmax.f32 %v1326, 0.0
  %v1481 = vmax.f32 %v1331, 0.0
  %v1482 = vmax.f32 %v1334, 0.0
  %v1483 = vmax.f32 %v1339, 0.0
  %v1484 = vmax.f32 %v1342, 0.0
  %v1485 = vmax.f32 %v1347, 0.0
  %v1486 = vmax.f32 %v1350, 0.0
  %v1487 = vmax.f32 %v1355, 0.0
  %v1488 = vmax.f32 %v1358, 0.0
  %v1489 = vpack.c.bf16 %v1362, %v1361
  %v1490 = vpack.c.bf16 %v1364, %v1363
  %v1491 = vpack.c.bf16 %v1366, %v1365
  %v1492 = vpack.c.bf16 %v1368, %v1367
  %v1493 = vpack.c.bf16 %v1370, %v1369
  %v1494 = vpack.c.bf16 %v1372, %v1371
  %v1495 = vpack.c.bf16 %v1374, %v1373
  %v1496 = vpack.c.bf16 %v1376, %v1375
  %v1497 = vpack.c.bf16 %v1378, %v1377
  %v1498 = vpack.c.bf16 %v1380, %v1379
  %v1499 = vpack.c.bf16 %v1382, %v1381
  %v1500 = vpack.c.bf16 %v1384, %v1383
  %v1501 = vpack.c.bf16 %v1386, %v1385
  %v1502 = vpack.c.bf16 %v1388, %v1387
  %v1503 = vpack.c.bf16 %v1390, %v1389
  %v1504 = vpack.c.bf16 %v1392, %v1391
  %v1505 = vpack.c.bf16 %v1394, %v1393
  %v1506 = vpack.c.bf16 %v1396, %v1395
  %v1507 = vpack.c.bf16 %v1398, %v1397
  %v1508 = vpack.c.bf16 %v1400, %v1399
  %v1509 = vpack.c.bf16 %v1402, %v1401
  %v1510 = vpack.c.bf16 %v1404, %v1403
  %v1511 = vpack.c.bf16 %v1406, %v1405
  %v1512 = vpack.c.bf16 %v1408, %v1407
  %v1513 = vpack.c.bf16 %v1410, %v1409
  %v1514 = vpack.c.bf16 %v1412, %v1411
  %v1515 = vpack.c.bf16 %v1414, %v1413
  %v1516 = vpack.c.bf16 %v1416, %v1415
  %v1517 = vpack.c.bf16 %v1418, %v1417
  %v1518 = vpack.c.bf16 %v1420, %v1419
  %v1519 = vpack.c.bf16 %v1422, %v1421
  %v1520 = vpack.c.bf16 %v1424, %v1423
  %v1521 = vpack.c.bf16 %v1426, %v1425
  %v1522 = vpack.c.bf16 %v1428, %v1427
  %v1523 = vpack.c.bf16 %v1430, %v1429
  %v1524 = vpack.c.bf16 %v1432, %v1431
  %v1525 = vpack.c.bf16 %v1434, %v1433
  %v1526 = vpack.c.bf16 %v1436, %v1435
  %v1527 = vpack.c.bf16 %v1438, %v1437
  %v1528 = vpack.c.bf16 %v1440, %v1439
  %v1529 = vpack.c.bf16 %v1442, %v1441
  %v1530 = vpack.c.bf16 %v1444, %v1443
  %v1531 = vpack.c.bf16 %v1446, %v1445
  %v1532 = vpack.c.bf16 %v1448, %v1447
  %v1533 = vpack.c.bf16 %v1450, %v1449
  %v1534 = vpack.c.bf16 %v1452, %v1451
  %v1535 = vpack.c.bf16 %v1454, %v1453
  %v1536 = vpack.c.bf16 %v1456, %v1455
  %v1537 = vpack.c.bf16 %v1458, %v1457
  %v1538 = vpack.c.bf16 %v1460, %v1459
  %v1539 = vpack.c.bf16 %v1462, %v1461
  %v1540 = vpack.c.bf16 %v1464, %v1463
  %v1541 = vpack.c.bf16 %v1466, %v1465
  %v1542 = vpack.c.bf16 %v1468, %v1467
  %v1543 = vpack.c.bf16 %v1470, %v1469
  %v1544 = vpack.c.bf16 %v1472, %v1471
  %v1545 = vpack.c.bf16 %v1474, %v1473
  %v1546 = vpack.c.bf16 %v1476, %v1475
  %v1547 = vpack.c.bf16 %v1478, %v1477
  %v1548 = vpack.c.bf16 %v1480, %v1479
  %v1549 = vpack.c.bf16 %v1482, %v1481
  %v1550 = vpack.c.bf16 %v1484, %v1483
  %v1551 = vpack.c.bf16 %v1486, %v1485
  %v1552 = vpack.c.bf16 %v1488, %v1487
  %v1617 = vunpack.c.l.b16 %v1489
  %v1618 = vunpack.c.h.b16 %v1489
  %v1619 = vunpack.c.l.b16 %v1490
  %v1620 = vunpack.c.h.b16 %v1490
  %v1621 = vunpack.c.l.b16 %v1491
  %v1622 = vunpack.c.h.b16 %v1491
  %v1623 = vunpack.c.l.b16 %v1492
  %v1624 = vunpack.c.h.b16 %v1492
  %v1625 = vunpack.c.l.b16 %v1493
  %v1626 = vunpack.c.h.b16 %v1493
  %v1627 = vunpack.c.l.b16 %v1494
  %v1628 = vunpack.c.h.b16 %v1494
  %v1629 = vunpack.c.l.b16 %v1495
  %v1630 = vunpack.c.h.b16 %v1495
  %v1631 = vunpack.c.l.b16 %v1496
  %v1632 = vunpack.c.h.b16 %v1496
  %v1633 = vunpack.c.l.b16 %v1497
  %v1634 = vunpack.c.h.b16 %v1497
  %v1635 = vunpack.c.l.b16 %v1498
  %v1636 = vunpack.c.h.b16 %v1498
  %v1637 = vunpack.c.l.b16 %v1499
  %v1638 = vunpack.c.h.b16 %v1499
  %v1639 = vunpack.c.l.b16 %v1500
  %v1640 = vunpack.c.h.b16 %v1500
  %v1641 = vunpack.c.l.b16 %v1501
  %v1642 = vunpack.c.h.b16 %v1501
  %v1643 = vunpack.c.l.b16 %v1502
  %v1644 = vunpack.c.h.b16 %v1502
  %v1645 = vunpack.c.l.b16 %v1503
  %v1646 = vunpack.c.h.b16 %v1503
  %v1647 = vunpack.c.l.b16 %v1504
  %v1648 = vunpack.c.h.b16 %v1504
  %v1649 = vunpack.c.l.b16 %v1505
  %v1650 = vunpack.c.h.b16 %v1505
  %v1651 = vunpack.c.l.b16 %v1506
  %v1652 = vunpack.c.h.b16 %v1506
  %v1653 = vunpack.c.l.b16 %v1507
  %v1654 = vunpack.c.h.b16 %v1507
  %v1655 = vunpack.c.l.b16 %v1508
  %v1656 = vunpack.c.h.b16 %v1508
  %v1657 = vunpack.c.l.b16 %v1509
  %v1658 = vunpack.c.h.b16 %v1509
  %v1659 = vunpack.c.l.b16 %v1510
  %v1660 = vunpack.c.h.b16 %v1510
  %v1661 = vunpack.c.l.b16 %v1511
  %v1662 = vunpack.c.h.b16 %v1511
  %v1663 = vunpack.c.l.b16 %v1512
  %v1664 = vunpack.c.h.b16 %v1512
  %v1665 = vunpack.c.l.b16 %v1513
  %v1666 = vunpack.c.h.b16 %v1513
  %v1667 = vunpack.c.l.b16 %v1514
  %v1668 = vunpack.c.h.b16 %v1514
  %v1669 = vunpack.c.l.b16 %v1515
  %v1670 = vunpack.c.h.b16 %v1515
  %v1671 = vunpack.c.l.b16 %v1516
  %v1672 = vunpack.c.h.b16 %v1516
  %v1673 = vunpack.c.l.b16 %v1517
  %v1674 = vunpack.c.h.b16 %v1517
  %v1675 = vunpack.c.l.b16 %v1518
  %v1676 = vunpack.c.h.b16 %v1518
  %v1677 = vunpack.c.l.b16 %v1519
  %v1678 = vunpack.c.h.b16 %v1519
  %v1679 = vunpack.c.l.b16 %v1520
  %v1680 = vunpack.c.h.b16 %v1520
  %v1681 = vunpack.c.l.b16 %v1521
  %v1682 = vunpack.c.h.b16 %v1521
  %v1683 = vunpack.c.l.b16 %v1522
  %v1684 = vunpack.c.h.b16 %v1522
  %v1685 = vunpack.c.l.b16 %v1523
  %v1686 = vunpack.c.h.b16 %v1523
  %v1687 = vunpack.c.l.b16 %v1524
  %v1688 = vunpack.c.h.b16 %v1524
  %v1689 = vunpack.c.l.b16 %v1525
  %v1690 = vunpack.c.h.b16 %v1525
  %v1691 = vunpack.c.l.b16 %v1526
  %v1692 = vunpack.c.h.b16 %v1526
  %v1693 = vunpack.c.l.b16 %v1527
  %v1694 = vunpack.c.h.b16 %v1527
  %v1695 = vunpack.c.l.b16 %v1528
  %v1696 = vunpack.c.h.b16 %v1528
  %v1697 = vunpack.c.l.b16 %v1529
  %v1698 = vunpack.c.h.b16 %v1529
  %v1699 = vunpack.c.l.b16 %v1530
  %v1700 = vunpack.c.h.b16 %v1530
  %v1701 = vunpack.c.l.b16 %v1531
  %v1702 = vunpack.c.h.b16 %v1531
  %v1703 = vunpack.c.l.b16 %v1532
  %v1704 = vunpack.c.h.b16 %v1532
  %v1705 = vunpack.c.l.b16 %v1533
  %v1706 = vunpack.c.h.b16 %v1533
  %v1707 = vunpack.c.l.b16 %v1534
  %v1708 = vunpack.c.h.b16 %v1534
  %v1709 = vunpack.c.l.b16 %v1535
  %v1710 = vunpack.c.h.b16 %v1535
  %v1711 = vunpack.c.l.b16 %v1536
  %v1712 = vunpack.c.h.b16 %v1536
  %v1713 = vunpack.c.l.b16 %v1537
  %v1714 = vunpack.c.h.b16 %v1537
  %v1715 = vunpack.c.l.b16 %v1538
  %v1716 = vunpack.c.h.b16 %v1538
  %v1717 = vunpack.c.l.b16 %v1539
  %v1718 = vunpack.c.h.b16 %v1539
  %v1719 = vunpack.c.l.b16 %v1540
  %v1720 = vunpack.c.h.b16 %v1540
  %v1721 = vunpack.c.l.b16 %v1541
  %v1722 = vunpack.c.h.b16 %v1541
  %v1723 = vunpack.c.l.b16 %v1542
  %v1724 = vunpack.c.h.b16 %v1542
  %v1725 = vunpack.c.l.b16 %v1543
  %v1726 = vunpack.c.h.b16 %v1543
  %v1727 = vunpack.c.l.b16 %v1544
  %v1728 = vunpack.c.h.b16 %v1544
  %v1729 = vunpack.c.l.b16 %v1545
  %v1730 = vunpack.c.h.b16 %v1545
  %v1731 = vunpack.c.l.b16 %v1546
  %v1732 = vunpack.c.h.b16 %v1546
  %v1733 = vunpack.c.l.b16 %v1547
  %v1734 = vunpack.c.h.b16 %v1547
  %v1735 = vunpack.c.l.b16 %v1548
  %v1736 = vunpack.c.h.b16 %v1548
  %v1737 = vunpack.c.l.b16 %v1549
  %v1738 = vunpack.c.h.b16 %v1549
  %v1739 = vunpack.c.l.b16 %v1550
  %v1740 = vunpack.c.h.b16 %v1550
  %v1741 = vunpack.c.l.b16 %v1551
  %v1742 = vunpack.c.h.b16 %v1551
  %v1743 = vunpack.c.l.b16 %v1552
  %v1744 = vunpack.c.h.b16 %v1552
  %v1745 = vpack.c.b16 %v1617, %v1617
  %v1746 = vpack.c.b16 %v1618, %v1618
  %v1747 = vpack.c.b16 %v1619, %v1619
  %v1748 = vpack.c.b16 %v1620, %v1620
  %v1749 = vpack.c.b16 %v1621, %v1621
  %v1750 = vpack.c.b16 %v1622, %v1622
  %v1751 = vpack.c.b16 %v1623, %v1623
  %v1752 = vpack.c.b16 %v1624, %v1624
  %v1753 = vpack.c.b16 %v1625, %v1625
  %v1754 = vpack.c.b16 %v1626, %v1626
  %v1755 = vpack.c.b16 %v1627, %v1627
  %v1756 = vpack.c.b16 %v1628, %v1628
  %v1757 = vpack.c.b16 %v1629, %v1629
  %v1758 = vpack.c.b16 %v1630, %v1630
  %v1759 = vpack.c.b16 %v1631, %v1631
  %v1760 = vpack.c.b16 %v1632, %v1632
  %v1761 = vpack.c.b16 %v1633, %v1633
  %v1762 = vpack.c.b16 %v1634, %v1634
  %v1763 = vpack.c.b16 %v1635, %v1635
  %v1764 = vpack.c.b16 %v1636, %v1636
  %v1765 = vpack.c.b16 %v1637, %v1637
  %v1766 = vpack.c.b16 %v1638, %v1638
  %v1767 = vpack.c.b16 %v1639, %v1639
  %v1768 = vpack.c.b16 %v1640, %v1640
  %v1769 = vpack.c.b16 %v1641, %v1641
  %v1770 = vpack.c.b16 %v1642, %v1642
  %v1771 = vpack.c.b16 %v1643, %v1643
  %v1772 = vpack.c.b16 %v1644, %v1644
  %v1773 = vpack.c.b16 %v1645, %v1645
  %v1774 = vpack.c.b16 %v1646, %v1646
  %v1775 = vpack.c.b16 %v1647, %v1647
  %v1776 = vpack.c.b16 %v1648, %v1648
  %v1777 = vpack.c.b16 %v1649, %v1649
  %v1778 = vpack.c.b16 %v1650, %v1650
  %v1779 = vpack.c.b16 %v1651, %v1651
  %v1780 = vpack.c.b16 %v1652, %v1652
  %v1781 = vpack.c.b16 %v1653, %v1653
  %v1782 = vpack.c.b16 %v1654, %v1654
  %v1783 = vpack.c.b16 %v1655, %v1655
  %v1784 = vpack.c.b16 %v1656, %v1656
  %v1785 = vpack.c.b16 %v1657, %v1657
  %v1786 = vpack.c.b16 %v1658, %v1658
  %v1787 = vpack.c.b16 %v1659, %v1659
  %v1788 = vpack.c.b16 %v1660, %v1660
  %v1789 = vpack.c.b16 %v1661, %v1661
  %v1790 = vpack.c.b16 %v1662, %v1662
  %v1791 = vpack.c.b16 %v1663, %v1663
  %v1792 = vpack.c.b16 %v1664, %v1664
  %v1793 = vpack.c.b16 %v1665, %v1665
  %v1794 = vpack.c.b16 %v1666, %v1666
  %v1795 = vpack.c.b16 %v1667, %v1667
  %v1796 = vpack.c.b16 %v1668, %v1668
  %v1797 = vpack.c.b16 %v1669, %v1669
  %v1798 = vpack.c.b16 %v1670, %v1670
  %v1799 = vpack.c.b16 %v1671, %v1671
  %v1800 = vpack.c.b16 %v1672, %v1672
  %v1801 = vpack.c.b16 %v1673, %v1673
  %v1802 = vpack.c.b16 %v1674, %v1674
  %v1803 = vpack.c.b16 %v1675, %v1675
  %v1804 = vpack.c.b16 %v1676, %v1676
  %v1805 = vpack.c.b16 %v1677, %v1677
  %v1806 = vpack.c.b16 %v1678, %v1678
  %v1807 = vpack.c.b16 %v1679, %v1679
  %v1808 = vpack.c.b16 %v1680, %v1680
  %v1809 = vpack.c.b16 %v1681, %v1681
  %v1810 = vpack.c.b16 %v1682, %v1682
  %v1811 = vpack.c.b16 %v1683, %v1683
  %v1812 = vpack.c.b16 %v1684, %v1684
  %v1813 = vpack.c.b16 %v1685, %v1685
  %v1814 = vpack.c.b16 %v1686, %v1686
  %v1815 = vpack.c.b16 %v1687, %v1687
  %v1816 = vpack.c.b16 %v1688, %v1688
  %v1817 = vpack.c.b16 %v1689, %v1689
  %v1818 = vpack.c.b16 %v1690, %v1690
  %v1819 = vpack.c.b16 %v1691, %v1691
  %v1820 = vpack.c.b16 %v1692, %v1692
  %v1821 = vpack.c.b16 %v1693, %v1693
  %v1822 = vpack.c.b16 %v1694, %v1694
  %v1823 = vpack.c.b16 %v1695, %v1695
  %v1824 = vpack.c.b16 %v1696, %v1696
  %v1825 = vpack.c.b16 %v1697, %v1697
  %v1826 = vpack.c.b16 %v1698, %v1698
  %v1827 = vpack.c.b16 %v1699, %v1699
  %v1828 = vpack.c.b16 %v1700, %v1700
  %v1829 = vpack.c.b16 %v1701, %v1701
  %v1830 = vpack.c.b16 %v1702, %v1702
  %v1831 = vpack.c.b16 %v1703, %v1703
  %v1832 = vpack.c.b16 %v1704, %v1704
  %v1833 = vpack.c.b16 %v1705, %v1705
  %v1834 = vpack.c.b16 %v1706, %v1706
  %v1835 = vpack.c.b16 %v1707, %v1707
  %v1836 = vpack.c.b16 %v1708, %v1708
  %v1837 = vpack.c.b16 %v1709, %v1709
  %v1838 = vpack.c.b16 %v1710, %v1710
  %v1839 = vpack.c.b16 %v1711, %v1711
  %v1840 = vpack.c.b16 %v1712, %v1712
  %v1841 = vpack.c.b16 %v1713, %v1713
  %v1842 = vpack.c.b16 %v1714, %v1714
  %v1843 = vpack.c.b16 %v1715, %v1715
  %v1844 = vpack.c.b16 %v1716, %v1716
  %v1845 = vpack.c.b16 %v1717, %v1717
  %v1846 = vpack.c.b16 %v1718, %v1718
  %v1847 = vpack.c.b16 %v1719, %v1719
  %v1848 = vpack.c.b16 %v1720, %v1720
  %v1849 = vpack.c.b16 %v1721, %v1721
  %v1850 = vpack.c.b16 %v1722, %v1722
  %v1851 = vpack.c.b16 %v1723, %v1723
  %v1852 = vpack.c.b16 %v1724, %v1724
  %v1853 = vpack.c.b16 %v1725, %v1725
  %v1854 = vpack.c.b16 %v1726, %v1726
  %v1855 = vpack.c.b16 %v1727, %v1727
  %v1856 = vpack.c.b16 %v1728, %v1728
  %v1857 = vpack.c.b16 %v1729, %v1729
  %v1858 = vpack.c.b16 %v1730, %v1730
  %v1859 = vpack.c.b16 %v1731, %v1731
  %v1860 = vpack.c.b16 %v1732, %v1732
  %v1861 = vpack.c.b16 %v1733, %v1733
  %v1862 = vpack.c.b16 %v1734, %v1734
  %v1863 = vpack.c.b16 %v1735, %v1735
  %v1864 = vpack.c.b16 %v1736, %v1736
  %v1865 = vpack.c.b16 %v1737, %v1737
  %v1866 = vpack.c.b16 %v1738, %v1738
  %v1867 = vpack.c.b16 %v1739, %v1739
  %v1868 = vpack.c.b16 %v1740, %v1740
  %v1869 = vpack.c.b16 %v1741, %v1741
  %v1870 = vpack.c.b16 %v1742, %v1742
  %v1871 = vpack.c.b16 %v1743, %v1743
  %v1872 = vpack.c.b16 %v1744, %v1744
  %vm2001 = vcmask 125952
  %2002 = vst.msk [vmem:[%s5] sm:$0xf] %vm2001, %v1745
  %2003 = vst.msk [vmem:[%s5 + $0x4] sm:$0xf] %vm2001, %v1746
  %2004 = vst.msk [vmem:[%s5 + $0x8] sm:$0xf] %vm2001, %v1747
  %2005 = vst.msk [vmem:[%s5 + $0xc] sm:$0xf] %vm2001, %v1748
  %2006 = vst.msk [vmem:[%s5 + $0x10] sm:$0xf] %vm2001, %v1749
  %2007 = vst.msk [vmem:[%s5 + $0x14] sm:$0xf] %vm2001, %v1750
  %2008 = vst.msk [vmem:[%s5 + $0x18] sm:$0xf] %vm2001, %v1751
  %2009 = vst.msk [vmem:[%s5 + $0x1c] sm:$0xf] %vm2001, %v1752
  %2010 = vst.msk [vmem:[%s5 + $0x20] sm:$0xf] %vm2001, %v1753
  %2011 = vst.msk [vmem:[%s5 + $0x24] sm:$0xf] %vm2001, %v1754
  %2012 = vst.msk [vmem:[%s5 + $0x28] sm:$0xf] %vm2001, %v1755
  %2013 = vst.msk [vmem:[%s5 + $0x2c] sm:$0xf] %vm2001, %v1756
  %2014 = vst.msk [vmem:[%s5 + $0x30] sm:$0xf] %vm2001, %v1757
  %2015 = vst.msk [vmem:[%s5 + $0x34] sm:$0xf] %vm2001, %v1758
  %2016 = vst.msk [vmem:[%s5 + $0x38] sm:$0xf] %vm2001, %v1759
  %2017 = vst.msk [vmem:[%s5 + $0x3c] sm:$0xf] %vm2001, %v1760
  %2018 = vst.msk [vmem:[%s5 + $0x40] sm:$0xf] %vm2001, %v1761
  %2019 = vst.msk [vmem:[%s5 + $0x44] sm:$0xf] %vm2001, %v1762
  %2020 = vst.msk [vmem:[%s5 + $0x48] sm:$0xf] %vm2001, %v1763
  %2021 = vst.msk [vmem:[%s5 + $0x4c] sm:$0xf] %vm2001, %v1764
  %2022 = vst.msk [vmem:[%s5 + $0x50] sm:$0xf] %vm2001, %v1765
  %2023 = vst.msk [vmem:[%s5 + $0x54] sm:$0xf] %vm2001, %v1766
  %2024 = vst.msk [vmem:[%s5 + $0x58] sm:$0xf] %vm2001, %v1767
  %2025 = vst.msk [vmem:[%s5 + $0x5c] sm:$0xf] %vm2001, %v1768
  %2026 = vst.msk [vmem:[%s5 + $0x60] sm:$0xf] %vm2001, %v1769
  %2027 = vst.msk [vmem:[%s5 + $0x64] sm:$0xf] %vm2001, %v1770
  %2028 = vst.msk [vmem:[%s5 + $0x68] sm:$0xf] %vm2001, %v1771
  %2029 = vst.msk [vmem:[%s5 + $0x6c] sm:$0xf] %vm2001, %v1772
  %2030 = vst.msk [vmem:[%s5 + $0x70] sm:$0xf] %vm2001, %v1773
  %2031 = vst.msk [vmem:[%s5 + $0x74] sm:$0xf] %vm2001, %v1774
  %2032 = vst.msk [vmem:[%s5 + $0x78] sm:$0xf] %vm2001, %v1775
  %2033 = vst.msk [vmem:[%s5 + $0x7c] sm:$0xf] %vm2001, %v1776
  %2034 = vst.msk [vmem:[%s5 + $0x80] sm:$0xf] %vm2001, %v1777
  %2035 = vst.msk [vmem:[%s5 + $0x84] sm:$0xf] %vm2001, %v1778
  %2036 = vst.msk [vmem:[%s5 + $0x88] sm:$0xf] %vm2001, %v1779
  %2037 = vst.msk [vmem:[%s5 + $0x8c] sm:$0xf] %vm2001, %v1780
  %2038 = vst.msk [vmem:[%s5 + $0x90] sm:$0xf] %vm2001, %v1781
  %2039 = vst.msk [vmem:[%s5 + $0x94] sm:$0xf] %vm2001, %v1782
  %2040 = vst.msk [vmem:[%s5 + $0x98] sm:$0xf] %vm2001, %v1783
  %2041 = vst.msk [vmem:[%s5 + $0x9c] sm:$0xf] %vm2001, %v1784
  %2042 = vst.msk [vmem:[%s5 + $0xa0] sm:$0xf] %vm2001, %v1785
  %2043 = vst.msk [vmem:[%s5 + $0xa4] sm:$0xf] %vm2001, %v1786
  %2044 = vst.msk [vmem:[%s5 + $0xa8] sm:$0xf] %vm2001, %v1787
  %2045 = vst.msk [vmem:[%s5 + $0xac] sm:$0xf] %vm2001, %v1788
  %2046 = vst.msk [vmem:[%s5 + $0xb0] sm:$0xf] %vm2001, %v1789
  %2047 = vst.msk [vmem:[%s5 + $0xb4] sm:$0xf] %vm2001, %v1790
  %2048 = vst.msk [vmem:[%s5 + $0xb8] sm:$0xf] %vm2001, %v1791
  %2049 = vst.msk [vmem:[%s5 + $0xbc] sm:$0xf] %vm2001, %v1792
  %2050 = vst.msk [vmem:[%s5 + $0xc0] sm:$0xf] %vm2001, %v1793
  %2051 = vst.msk [vmem:[%s5 + $0xc4] sm:$0xf] %vm2001, %v1794
  %2052 = vst.msk [vmem:[%s5 + $0xc8] sm:$0xf] %vm2001, %v1795
  %2053 = vst.msk [vmem:[%s5 + $0xcc] sm:$0xf] %vm2001, %v1796
  %2054 = vst.msk [vmem:[%s5 + $0xd0] sm:$0xf] %vm2001, %v1797
  %2055 = vst.msk [vmem:[%s5 + $0xd4] sm:$0xf] %vm2001, %v1798
  %2056 = vst.msk [vmem:[%s5 + $0xd8] sm:$0xf] %vm2001, %v1799
  %2057 = vst.msk [vmem:[%s5 + $0xdc] sm:$0xf] %vm2001, %v1800
  %2058 = vst.msk [vmem:[%s5 + $0xe0] sm:$0xf] %vm2001, %v1801
  %2059 = vst.msk [vmem:[%s5 + $0xe4] sm:$0xf] %vm2001, %v1802
  %2060 = vst.msk [vmem:[%s5 + $0xe8] sm:$0xf] %vm2001, %v1803
  %2061 = vst.msk [vmem:[%s5 + $0xec] sm:$0xf] %vm2001, %v1804
  %2062 = vst.msk [vmem:[%s5 + $0xf0] sm:$0xf] %vm2001, %v1805
  %2063 = vst.msk [vmem:[%s5 + $0xf4] sm:$0xf] %vm2001, %v1806
  %2064 = vst.msk [vmem:[%s5 + $0xf8] sm:$0xf] %vm2001, %v1807
  %2065 = vst.msk [vmem:[%s5 + $0xfc] sm:$0xf] %vm2001, %v1808
  %2066 = vst.msk [vmem:[%s5 + $0x100] sm:$0xf] %vm2001, %v1809
  %2067 = vst.msk [vmem:[%s5 + $0x104] sm:$0xf] %vm2001, %v1810
  %2068 = vst.msk [vmem:[%s5 + $0x108] sm:$0xf] %vm2001, %v1811
  %2069 = vst.msk [vmem:[%s5 + $0x10c] sm:$0xf] %vm2001, %v1812
  %2070 = vst.msk [vmem:[%s5 + $0x110] sm:$0xf] %vm2001, %v1813
  %2071 = vst.msk [vmem:[%s5 + $0x114] sm:$0xf] %vm2001, %v1814
  %2072 = vst.msk [vmem:[%s5 + $0x118] sm:$0xf] %vm2001, %v1815
  %2073 = vst.msk [vmem:[%s5 + $0x11c] sm:$0xf] %vm2001, %v1816
  %2074 = vst.msk [vmem:[%s5 + $0x120] sm:$0xf] %vm2001, %v1817
  %2075 = vst.msk [vmem:[%s5 + $0x124] sm:$0xf] %vm2001, %v1818
  %2076 = vst.msk [vmem:[%s5 + $0x128] sm:$0xf] %vm2001, %v1819
  %2077 = vst.msk [vmem:[%s5 + $0x12c] sm:$0xf] %vm2001, %v1820
  %2078 = vst.msk [vmem:[%s5 + $0x130] sm:$0xf] %vm2001, %v1821
  %2079 = vst.msk [vmem:[%s5 + $0x134] sm:$0xf] %vm2001, %v1822
  %2080 = vst.msk [vmem:[%s5 + $0x138] sm:$0xf] %vm2001, %v1823
  %2081 = vst.msk [vmem:[%s5 + $0x13c] sm:$0xf] %vm2001, %v1824
  %2082 = vst.msk [vmem:[%s5 + $0x140] sm:$0xf] %vm2001, %v1825
  %2083 = vst.msk [vmem:[%s5 + $0x144] sm:$0xf] %vm2001, %v1826
  %2084 = vst.msk [vmem:[%s5 + $0x148] sm:$0xf] %vm2001, %v1827
  %2085 = vst.msk [vmem:[%s5 + $0x14c] sm:$0xf] %vm2001, %v1828
  %2086 = vst.msk [vmem:[%s5 + $0x150] sm:$0xf] %vm2001, %v1829
  %2087 = vst.msk [vmem:[%s5 + $0x154] sm:$0xf] %vm2001, %v1830
  %2088 = vst.msk [vmem:[%s5 + $0x158] sm:$0xf] %vm2001, %v1831
  %2089 = vst.msk [vmem:[%s5 + $0x15c] sm:$0xf] %vm2001, %v1832
  %2090 = vst.msk [vmem:[%s5 + $0x160] sm:$0xf] %vm2001, %v1833
  %2091 = vst.msk [vmem:[%s5 + $0x164] sm:$0xf] %vm2001, %v1834
  %2092 = vst.msk [vmem:[%s5 + $0x168] sm:$0xf] %vm2001, %v1835
  %2093 = vst.msk [vmem:[%s5 + $0x16c] sm:$0xf] %vm2001, %v1836
  %2094 = vst.msk [vmem:[%s5 + $0x170] sm:$0xf] %vm2001, %v1837
  %2095 = vst.msk [vmem:[%s5 + $0x174] sm:$0xf] %vm2001, %v1838
  %2096 = vst.msk [vmem:[%s5 + $0x178] sm:$0xf] %vm2001, %v1839
  %2097 = vst.msk [vmem:[%s5 + $0x17c] sm:$0xf] %vm2001, %v1840
  %2098 = vst.msk [vmem:[%s5 + $0x180] sm:$0xf] %vm2001, %v1841
  %2099 = vst.msk [vmem:[%s5 + $0x184] sm:$0xf] %vm2001, %v1842
  %2100 = vst.msk [vmem:[%s5 + $0x188] sm:$0xf] %vm2001, %v1843
  %2101 = vst.msk [vmem:[%s5 + $0x18c] sm:$0xf] %vm2001, %v1844
  %2102 = vst.msk [vmem:[%s5 + $0x190] sm:$0xf] %vm2001, %v1845
  %2103 = vst.msk [vmem:[%s5 + $0x194] sm:$0xf] %vm2001, %v1846
  %2104 = vst.msk [vmem:[%s5 + $0x198] sm:$0xf] %vm2001, %v1847
  %2105 = vst.msk [vmem:[%s5 + $0x19c] sm:$0xf] %vm2001, %v1848
  %2106 = vst.msk [vmem:[%s5 + $0x1a0] sm:$0xf] %vm2001, %v1849
  %2107 = vst.msk [vmem:[%s5 + $0x1a4] sm:$0xf] %vm2001, %v1850
  %2108 = vst.msk [vmem:[%s5 + $0x1a8] sm:$0xf] %vm2001, %v1851
  %2109 = vst.msk [vmem:[%s5 + $0x1ac] sm:$0xf] %vm2001, %v1852
  %2110 = vst.msk [vmem:[%s5 + $0x1b0] sm:$0xf] %vm2001, %v1853
  %2111 = vst.msk [vmem:[%s5 + $0x1b4] sm:$0xf] %vm2001, %v1854
  %2112 = vst.msk [vmem:[%s5 + $0x1b8] sm:$0xf] %vm2001, %v1855
  %2113 = vst.msk [vmem:[%s5 + $0x1bc] sm:$0xf] %vm2001, %v1856
  %2114 = vst.msk [vmem:[%s5 + $0x1c0] sm:$0xf] %vm2001, %v1857
  %2115 = vst.msk [vmem:[%s5 + $0x1c4] sm:$0xf] %vm2001, %v1858
  %2116 = vst.msk [vmem:[%s5 + $0x1c8] sm:$0xf] %vm2001, %v1859
  %2117 = vst.msk [vmem:[%s5 + $0x1cc] sm:$0xf] %vm2001, %v1860
  %2118 = vst.msk [vmem:[%s5 + $0x1d0] sm:$0xf] %vm2001, %v1861
  %2119 = vst.msk [vmem:[%s5 + $0x1d4] sm:$0xf] %vm2001, %v1862
  %2120 = vst.msk [vmem:[%s5 + $0x1d8] sm:$0xf] %vm2001, %v1863
  %2121 = vst.msk [vmem:[%s5 + $0x1dc] sm:$0xf] %vm2001, %v1864
  %2122 = vst.msk [vmem:[%s5 + $0x1e0] sm:$0xf] %vm2001, %v1865
  %2123 = vst.msk [vmem:[%s5 + $0x1e4] sm:$0xf] %vm2001, %v1866
  %2124 = vst.msk [vmem:[%s5 + $0x1e8] sm:$0xf] %vm2001, %v1867
  %2125 = vst.msk [vmem:[%s5 + $0x1ec] sm:$0xf] %vm2001, %v1868
  %2126 = vst.msk [vmem:[%s5 + $0x1f0] sm:$0xf] %vm2001, %v1869
  %2127 = vst.msk [vmem:[%s5 + $0x1f4] sm:$0xf] %vm2001, %v1870
  %2128 = vst.msk [vmem:[%s5 + $0x1f8] sm:$0xf] %vm2001, %v1871
  %2129 = vst.msk [vmem:[%s5 + $0x1fc] sm:$0xf] %vm2001, %v1872
  // Predicated region
  $region22: #{bottleneck_forward.2} parent=0 // pred_check
    _
  $region23: #{bottleneck_forward.2} parent=0 // pred_check_branch
    %2131 = sbr.rel (0) target = $region25
  $region24: #{bottleneck_forward.2} parent=0 // pred_region
    _
  $region25: #{bottleneck_forward.2} parent=0 // pred_fallthru
    _
  // Predicated region
  $region26: #{bottleneck_forward.2} parent=0 // pred_check
    _
  $region27: #{bottleneck_forward.2} parent=0 // pred_check_branch
    %2133 = sbr.rel (0) target = $region29
  $region28: #{bottleneck_forward.2} parent=0 // pred_region
    _
  $region29: #{bottleneck_forward.2} parent=0 // pred_fallthru
    _

// kernel: bottleneck_forward.3
$region0: #{bottleneck_forward.3}
  #allocation0 [shape = 'u32[]', space=smem, size = 0x4, offset = 0x4, fixed_abs, tag = 'smem constant byte address 0x4 - core index']
  #allocation1 [shape = 'u32[144,128]{1,0:T(1,128)}', space=vmem, size = 0x12000, scoped, tag = 'internal scratch']
  %s0 = inlined_call_operand.vmem [shape: bf16[2,10,10,10,16], index: 0, kind: input, shape index: {}, may-alias: {0,1,2}]
  %s1 = inlined_call_operand.vmem [shape: bf16[2,10,10,10,16], index: 1, kind: input, shape index: {}, may-alias: {0,1,2}]
  %s2 = inlined_call_operand.vmem [shape: bf16[2,10,10,10,16], index: 2, kind: input, shape index: {}, may-alias: {0,1,2}]
  %s3 = inlined_call_operand.vmem [shape: f32[2,8,8,8,4], index: 3, kind: input, shape index: {}]
  %s4 = inlined_call_operand.vmem [shape: bf16[432,4], index: 4, kind: input, shape index: {}]
  %s5 = inlined_call_operand.vmem [shape: f32[1,4], index: 5, kind: input, shape index: {}]
  %s6 = inlined_call_operand.vmem [shape: f32[2,8,8,8,8], index: 6, kind: output, shape index: {}]
  %s7 = sld [smem:[#allocation0]]
  $region57: #{bottleneck_forward.3} parent=0
    _
  %s9 = ssub.s32 1, %s7
  %s10 = scalar_select 0, %s9, %s7
  loop: start=0, step=1, limit=18
  $region2: #{bottleneck_forward.3} parent=0 // loop_pre_header
    _
  $region3: #{bottleneck_forward.3} parent=0 // loop_header
    %s12 = sphi 0, %s16
    %p13 = scmp.ge.s32.totalorder %s12, 18
    %s19 = sphi 0, %s31
    %s20 = sphi 0, %s27
    %s21 = sphi 0, %s19
    %s22 = sphi 0, %s20
    %s23 = sphi 0, %s21
    %s24 = sphi 0, %s22
    %s36 = sphi 0, %s38
    %s39 = sphi 0, %s36
    %s40 = sphi 0, %s39
    %s56 = sphi 0, %s40
    %s66 = sphi 0, %s68
    %s69 = sphi 0, %s66
    %s70 = sphi 0, %s69
    %s86 = sphi 0, %s70
    %s96 = sphi 0, %s98
    %s99 = sphi 0, %s96
    %s100 = sphi 0, %s99
    %s116 = sphi 0, %s100
    %s124 = sphi 0, %s126
    %s127 = sphi 0, %s124
    %s128 = sphi 0, %s127
    %s144 = sphi 0, %s128
    %s148 = sphi 0, %s148
    %s150 = sphi 0, %s148
    %s151 = sphi 0, %s150
    %s165 = sphi 0, %s151
    %s169 = sphi 0, %s169
    %s171 = sphi 0, %s169
    %s172 = sphi 0, %s171
    %s186 = sphi 0, %s172
    %s194 = sphi 0, %s196
    %s197 = sphi 0, %s194
    %s198 = sphi 0, %s197
    %s214 = sphi 0, %s198
  $region4: #{bottleneck_forward.3} parent=0 // loop_header_branch
    %15 = sbr.rel (%p13) target = $region8
  $region5: #{bottleneck_forward.3} parent=0 // loop_body
    %s17 = ssub.s32 %s12, 1
    %s18 = ssub.s32 %s12, 2
    %s25 = sadd.s32 1, %s20
    %p26 = scmp.ge.s32.totalorder %s25, 8
    %s27 = scalar_select %p26, 0, %s25
    %s28 = sadd.s32 1, %s19
    %s29 = scalar_select %p26, %s28, %s19
    %p30 = scmp.ge.s32.totalorder %s29, 2
    %s31 = scalar_select %p30, 0, %s29
    %s32 = ssub.s32 %s19, %s31
    %s33 = ssub.s32 %s20, %s27
    %s34 = sor.u32 %s32, %s33
    %p35 = scmp.eq.s32.totalorder %s34, 0
    %s37 = sadd.s32 %s36, 1
    %s38 = scalar_select %p35, %s36, %s37
    %p41 = pneg %p35
    %p42 = scmp.eq.s32.totalorder %s12, 15
    %p43 = por %p41, %p42
    %p44 = scmp.ne.s32.totalorder %s36, %s39
    %p45 = scmp.eq.s32.totalorder %s12, 0
    %p46 = por %p44, %p45
    %p47 = scmp.ne.s32.totalorder %s36, %s39
    %p48 = scmp.eq.s32.totalorder %s17, 15
    %p49 = por %p47, %p48
    %p50 = scmp.ne.s32.totalorder %s39, %s40
    %p51 = scmp.eq.s32.totalorder %s17, 0
    %p52 = por %p50, %p51
    %p53 = scmp.ne.s32.totalorder %s39, %s40
    %p54 = scmp.eq.s32.totalorder %s18, 15
    %p55 = por %p53, %p54
    %p57 = scmp.ne.s32.totalorder %s40, %s56
    %p58 = scmp.eq.s32.totalorder %s18, 0
    %p59 = por %p57, %p58
    %s60 = sadd.s32 %s20, 1
    %s61 = sadd.s32 %s27, 1
    %s62 = ssub.s32 %s19, %s31
    %s63 = ssub.s32 %s60, %s61
    %s64 = sor.u32 %s62, %s63
    %p65 = scmp.eq.s32.totalorder %s64, 0
    %s67 = sadd.s32 %s66, 1
    %s68 = scalar_select %p65, %s66, %s67
    %p71 = pneg %p65
    %p72 = scmp.eq.s32.totalorder %s12, 15
    %p73 = por %p71, %p72
    %p74 = scmp.ne.s32.totalorder %s66, %s69
    %p75 = scmp.eq.s32.totalorder %s12, 0
    %p76 = por %p74, %p75
    %p77 = scmp.ne.s32.totalorder %s66, %s69
    %p78 = scmp.eq.s32.totalorder %s17, 15
    %p79 = por %p77, %p78
    %p80 = scmp.ne.s32.totalorder %s69, %s70
    %p81 = scmp.eq.s32.totalorder %s17, 0
    %p82 = por %p80, %p81
    %p83 = scmp.ne.s32.totalorder %s69, %s70
    %p84 = scmp.eq.s32.totalorder %s18, 15
    %p85 = por %p83, %p84
    %p87 = scmp.ne.s32.totalorder %s70, %s86
    %p88 = scmp.eq.s32.totalorder %s18, 0
    %p89 = por %p87, %p88
    %s90 = sadd.s32 %s20, 2
    %s91 = sadd.s32 %s27, 2
    %s92 = ssub.s32 %s19, %s31
    %s93 = ssub.s32 %s90, %s91
    %s94 = sor.u32 %s92, %s93
    %p95 = scmp.eq.s32.totalorder %s94, 0
    %s97 = sadd.s32 %s96, 1
    %s98 = scalar_select %p95, %s96, %s97
    %p101 = pneg %p95
    %p102 = scmp.eq.s32.totalorder %s12, 15
    %p103 = por %p101, %p102
    %p104 = scmp.ne.s32.totalorder %s96, %s99
    %p105 = scmp.eq.s32.totalorder %s12, 0
    %p106 = por %p104, %p105
    %p107 = scmp.ne.s32.totalorder %s96, %s99
    %p108 = scmp.eq.s32.totalorder %s17, 15
    %p109 = por %p107, %p108
    %p110 = scmp.ne.s32.totalorder %s99, %s100
    %p111 = scmp.eq.s32.totalorder %s17, 0
    %p112 = por %p110, %p111
    %p113 = scmp.ne.s32.totalorder %s99, %s100
    %p114 = scmp.eq.s32.totalorder %s18, 15
    %p115 = por %p113, %p114
    %p117 = scmp.ne.s32.totalorder %s100, %s116
    %p118 = scmp.eq.s32.totalorder %s18, 0
    %p119 = por %p117, %p118
    %s120 = ssub.s32 %s19, %s31
    %s121 = ssub.s32 %s20, %s27
    %s122 = sor.u32 %s120, %s121
    %p123 = scmp.eq.s32.totalorder %s122, 0
    %s125 = sadd.s32 %s124, 1
    %s126 = scalar_select %p123, %s124, %s125
    %p129 = pneg %p123
    %p130 = scmp.eq.s32.totalorder %s12, 15
    %p131 = por %p129, %p130
    %p132 = scmp.ne.s32.totalorder %s124, %s127
    %p133 = scmp.eq.s32.totalorder %s12, 0
    %p134 = por %p132, %p133
    %p135 = scmp.ne.s32.totalorder %s124, %s127
    %p136 = scmp.eq.s32.totalorder %s17, 15
    %p137 = por %p135, %p136
    %p138 = scmp.ne.s32.totalorder %s127, %s128
    %p139 = scmp.eq.s32.totalorder %s17, 0
    %p140 = por %p138, %p139
    %p141 = scmp.ne.s32.totalorder %s127, %s128
    %p142 = scmp.eq.s32.totalorder %s18, 15
    %p143 = por %p141, %p142
    %p145 = scmp.ne.s32.totalorder %s128, %s144
    %p146 = scmp.eq.s32.totalorder %s18, 0
    %p147 = por %p145, %p146
    %s149 = sadd.s32 %s148, 1
    %p152 = scmp.eq.s32.totalorder %s12, 15
    %p153 = scmp.ne.s32.totalorder %s148, %s150
    %p154 = scmp.eq.s32.totalorder %s12, 0
    %p155 = por %p153, %p154
    %p156 = scmp.ne.s32.totalorder %s148, %s150
    %p157 = scmp.eq.s32.totalorder %s17, 15
    %p158 = por %p156, %p157
    %p159 = scmp.ne.s32.totalorder %s150, %s151
    %p160 = scmp.eq.s32.totalorder %s17, 0
    %p161 = por %p159, %p160
    %p162 = scmp.ne.s32.totalorder %s150, %s151
    %p163 = scmp.eq.s32.totalorder %s18, 15
    %p164 = por %p162, %p163
    %p166 = scmp.ne.s32.totalorder %s151, %s165
    %p167 = scmp.eq.s32.totalorder %s18, 0
    %p168 = por %p166, %p167
    %s170 = sadd.s32 %s169, 1
    %p173 = scmp.eq.s32.totalorder %s12, 15
    %p174 = scmp.ne.s32.totalorder %s169, %s171
    %p175 = scmp.eq.s32.totalorder %s12, 0
    %p176 = por %p174, %p175
    %p177 = scmp.ne.s32.totalorder %s169, %s171
    %p178 = scmp.eq.s32.totalorder %s17, 15
    %p179 = por %p177, %p178
    %p180 = scmp.ne.s32.totalorder %s171, %s172
    %p181 = scmp.eq.s32.totalorder %s17, 0
    %p182 = por %p180, %p181
    %p183 = scmp.ne.s32.totalorder %s171, %s172
    %p184 = scmp.eq.s32.totalorder %s18, 15
    %p185 = por %p183, %p184
    %p187 = scmp.ne.s32.totalorder %s172, %s186
    %p188 = scmp.eq.s32.totalorder %s18, 0
    %p189 = por %p187, %p188
    %s190 = ssub.s32 %s19, %s31
    %s191 = ssub.s32 %s20, %s27
    %s192 = sor.u32 %s190, %s191
    %p193 = scmp.eq.s32.totalorder %s192, 0
    %s195 = sadd.s32 %s194, 1
    %s196 = scalar_select %p193, %s194, %s195
    %p199 = pneg %p193
    %p200 = scmp.eq.s32.totalorder %s12, 15
    %p201 = por %p199, %p200
    %p202 = scmp.ne.s32.totalorder %s194, %s197
    %p203 = scmp.eq.s32.totalorder %s12, 0
    %p204 = por %p202, %p203
    %p205 = scmp.ne.s32.totalorder %s194, %s197
    %p206 = scmp.eq.s32.totalorder %s17, 15
    %p207 = por %p205, %p206
    %p208 = scmp.ne.s32.totalorder %s197, %s198
    %p209 = scmp.eq.s32.totalorder %s17, 0
    %p210 = por %p208, %p209
    %p211 = scmp.ne.s32.totalorder %s197, %s198
    %p212 = scmp.eq.s32.totalorder %s18, 15
    %p213 = por %p211, %p212
    %p215 = scmp.ne.s32.totalorder %s198, %s214
    %p216 = scmp.eq.s32.totalorder %s18, 0
    %p217 = por %p215, %p216
    %p218 = scmp.le.s32.totalorder 1, %s12
    %p219 = scmp.lt.s32.totalorder %s12, 17
    %p220 = pnand %p218, %p219
    %p221 = pneg %p220
    // Predicated region
    $region9: #{bottleneck_forward.3} parent=5 // pred_check
      _
    $region10: #{bottleneck_forward.3} parent=5 // pred_check_branch
      %223 = sbr.rel (%p220) target = $region12
    $region11: #{bottleneck_forward.3} parent=5 // pred_region
      %s224 = ssub.s32 %s12, 1
      // Predicated region
      $region13: #{bottleneck_forward.3} parent=11 // pred_check
        %p225 = pneg %p161
      $region14: #{bottleneck_forward.3} parent=11 // pred_check_branch
        %227 = sbr.rel (%p225) target = $region16
      $region15: #{bottleneck_forward.3} parent=11 // pred_region
        _
      $region16: #{bottleneck_forward.3} parent=11 // pred_fallthru
        _
      // Predicated region
      $region17: #{bottleneck_forward.3} parent=11 // pred_check
        %p228 = pneg %p182
      $region18: #{bottleneck_forward.3} parent=11 // pred_check_branch
        %230 = sbr.rel (%p228) target = $region20
      $region19: #{bottleneck_forward.3} parent=11 // pred_region
        _
      $region20: #{bottleneck_forward.3} parent=11 // pred_fallthru
        _
    $region12: #{bottleneck_forward.3} parent=5 // pred_fallthru
      _
    %p231 = scmp.lt.s32.totalorder %s12, 16
    // Predicated region
    $region21: #{bottleneck_forward.3} parent=5 // pred_check
      %p232 = pneg %p231
    $region22: #{bottleneck_forward.3} parent=5 // pred_check_branch
      %234 = sbr.rel (%p232) target = $region24
    $region23: #{bottleneck_forward.3} parent=5 // pred_region
      // Predicated region
      $region25: #{bottleneck_forward.3} parent=23 // pred_check
        %p235 = pneg %p46
      $region26: #{bottleneck_forward.3} parent=23 // pred_check_branch
        %237 = sbr.rel (%p235) target = $region28
      $region27: #{bottleneck_forward.3} parent=23 // pred_region
        %p238 = scmp.lt.s32.totalorder %s19, 1
        %s239 = scalar_select %p238, %s19, 1
        %p240 = scmp.lt.s32.totalorder %s20, 9
        %s241 = scalar_select %p240, %s20, 9
        %s242 = smul.addr %s241, 20
        %s243 = smul.addr %s239, 200
        %s244 = sadd.s32 %s242, %s243
        %s245 = smul.addr %s244, 4
        %s246 = scalar_lea.vmem %s0, %s245
      $region28: #{bottleneck_forward.3} parent=23 // pred_fallthru
        _
      // Predicated region
      $region29: #{bottleneck_forward.3} parent=23 // pred_check
        %p247 = pneg %p76
      $region30: #{bottleneck_forward.3} parent=23 // pred_check_branch
        %249 = sbr.rel (%p247) target = $region32
      $region31: #{bottleneck_forward.3} parent=23 // pred_region
        %s250 = sadd.s32 %s20, 1
        %p251 = scmp.lt.s32.totalorder %s19, 1
        %s252 = scalar_select %p251, %s19, 1
        %p253 = scmp.lt.s32.totalorder %s250, 9
        %s254 = scalar_select %p253, %s250, 9
        %s255 = smul.addr %s254, 20
        %s256 = smul.addr %s252, 200
        %s257 = sadd.s32 %s255, %s256
        %s258 = smul.addr %s257, 4
        %s259 = scalar_lea.vmem %s1, %s258
        %s260 = sadd.s32 %s20, 1
      $region32: #{bottleneck_forward.3} parent=23 // pred_fallthru
        _
      // Predicated region
      $region33: #{bottleneck_forward.3} parent=23 // pred_check
        %p261 = pneg %p106
      $region34: #{bottleneck_forward.3} parent=23 // pred_check_branch
        %263 = sbr.rel (%p261) target = $region36
      $region35: #{bottleneck_forward.3} parent=23 // pred_region
        %s264 = sadd.s32 %s20, 2
        %p265 = scmp.lt.s32.totalorder %s19, 1
        %s266 = scalar_select %p265, %s19, 1
        %p267 = scmp.lt.s32.totalorder %s264, 9
        %s268 = scalar_select %p267, %s264, 9
        %s269 = smul.addr %s268, 20
        %s270 = smul.addr %s266, 200
        %s271 = sadd.s32 %s269, %s270
        %s272 = smul.addr %s271, 4
        %s273 = scalar_lea.vmem %s2, %s272
        %s274 = sadd.s32 %s20, 2
      $region36: #{bottleneck_forward.3} parent=23 // pred_fallthru
        _
      // Predicated region
      $region37: #{bottleneck_forward.3} parent=23 // pred_check
        %p275 = pneg %p134
      $region38: #{bottleneck_forward.3} parent=23 // pred_check_branch
        %277 = sbr.rel (%p275) target = $region40
      $region39: #{bottleneck_forward.3} parent=23 // pred_region
        %p278 = scmp.lt.s32.totalorder %s19, 1
        %s279 = scalar_select %p278, %s19, 1
        %p280 = scmp.lt.s32.totalorder %s20, 7
        %s281 = scalar_select %p280, %s20, 7
        %s282 = smul.addr %s281, 8
        %s283 = smul.addr %s279, 64
        %s284 = sadd.s32 %s282, %s283
        %s285 = smul.addr %s284, 8
        %s286 = scalar_lea.vmem %s3, %s285
      $region40: #{bottleneck_forward.3} parent=23 // pred_fallthru
        _
    $region24: #{bottleneck_forward.3} parent=5 // pred_fallthru
      _
    %p287 = scmp.le.s32.totalorder 1, %s12
    %p288 = scmp.lt.s32.totalorder %s12, 17
    %p289 = pnand %p287, %p288
    %p290 = pneg %p289
    // Predicated region
    $region41: #{bottleneck_forward.3} parent=5 // pred_check
      _
    $region42: #{bottleneck_forward.3} parent=5 // pred_check_branch
      %292 = sbr.rel (%p289) target = $region44
    $region43: #{bottleneck_forward.3} parent=5 // pred_region
      %s293 = ssub.s32 %s12, 1
      %p294 = scmp.lt.s32.totalorder %s21, 1
      %s295 = scalar_select %p294, %s21, 1
      %p296 = scmp.lt.s32.totalorder %s22, 9
      %s297 = scalar_select %p296, %s22, 9
      %s298 = smul.addr %s297, 20
      %s299 = smul.addr %s295, 200
      %s300 = sadd.s32 %s298, %s299
      %s301 = smul.addr %s300, 4
      %s302 = scalar_lea.vmem %s0, %s301
      %p303 = pneg %p52
      %p304 = pneg %p49
      %s305 = sadd.s32 %s22, 1
      %p306 = scmp.lt.s32.totalorder %s21, 1
      %s307 = scalar_select %p306, %s21, 1
      %p308 = scmp.lt.s32.totalorder %s305, 9
      %s309 = scalar_select %p308, %s305, 9
      %s310 = smul.addr %s309, 20
      %s311 = smul.addr %s307, 200
      %s312 = sadd.s32 %s310, %s311
      %s313 = smul.addr %s312, 4
      %s314 = scalar_lea.vmem %s1, %s313
      %p315 = pneg %p82
      %p316 = pneg %p79
      %s317 = sadd.s32 %s22, 2
      %p318 = scmp.lt.s32.totalorder %s21, 1
      %s319 = scalar_select %p318, %s21, 1
      %p320 = scmp.lt.s32.totalorder %s317, 9
      %s321 = scalar_select %p320, %s317, 9
      %s322 = smul.addr %s321, 20
      %s323 = smul.addr %s319, 200
      %s324 = sadd.s32 %s322, %s323
      %s325 = smul.addr %s324, 4
      %s326 = scalar_lea.vmem %s2, %s325
      %p327 = pneg %p112
      %p328 = pneg %p109
      %p329 = scmp.lt.s32.totalorder %s21, 1
      %s330 = scalar_select %p329, %s21, 1
      %p331 = scmp.lt.s32.totalorder %s22, 7
      %s332 = scalar_select %p331, %s22, 7
      %s333 = smul.addr %s332, 8
      %s334 = smul.addr %s330, 64
      %s335 = sadd.s32 %s333, %s334
      %s336 = smul.addr %s335, 8
      %s337 = scalar_lea.vmem %s3, %s336
      %p338 = pneg %p140
      %p339 = pneg %p137
      %p340 = pneg %p161
      %p341 = pneg %p158
      %p342 = pneg %p182
      %p343 = pneg %p179
      %p344 = pneg %p210
      %p345 = pneg %p207
      %p346 = scmp.lt.s32.totalorder %s21, 1
      %s347 = scalar_select %p346, %s21, 1
      %p348 = scmp.lt.s32.totalorder %s22, 7
      %s349 = scalar_select %p348, %s22, 7
      %s350 = smul.addr %s349, 8
      %s351 = smul.addr %s347, 64
      %s352 = sadd.s32 %s350, %s351
      %s353 = smul.addr %s352, 8
      %s354 = scalar_lea.vmem %s6, %s353
      %p355 = scmp.lt.s32.totalorder %s21, 1
      %s356 = scalar_select %p355, %s21, 1
      %p357 = scmp.lt.s32.totalorder %s22, 9
      %s358 = scalar_select %p357, %s22, 9
      %s359 = smul.addr %s358, 20
      %s360 = smul.addr %s356, 200
      %s361 = sadd.s32 %s359, %s360
      %s362 = smul.addr %s361, 4
      %s363 = scalar_lea.vmem %s0, %s362
      %s364 = sadd.s32 %s22, 1
      %p365 = scmp.lt.s32.totalorder %s21, 1
      %s366 = scalar_select %p365, %s21, 1
      %p367 = scmp.lt.s32.totalorder %s364, 9
      %s368 = scalar_select %p367, %s364, 9
      %s369 = smul.addr %s368, 20
      %s370 = smul.addr %s366, 200
      %s371 = sadd.s32 %s369, %s370
      %s372 = smul.addr %s371, 4
      %s373 = scalar_lea.vmem %s1, %s372
      %s374 = sadd.s32 %s22, 1
      %s375 = sadd.s32 %s22, 2
      %p376 = scmp.lt.s32.totalorder %s21, 1
      %s377 = scalar_select %p376, %s21, 1
      %p378 = scmp.lt.s32.totalorder %s375, 9
      %s379 = scalar_select %p378, %s375, 9
      %s380 = smul.addr %s379, 20
      %s381 = smul.addr %s377, 200
      %s382 = sadd.s32 %s380, %s381
      %s383 = smul.addr %s382, 4
      %s384 = scalar_lea.vmem %s2, %s383
      %s385 = sadd.s32 %s22, 2
      %p386 = scmp.lt.s32.totalorder %s21, 1
      %s387 = scalar_select %p386, %s21, 1
      %p388 = scmp.lt.s32.totalorder %s22, 7
      %s389 = scalar_select %p388, %s22, 7
      %s390 = smul.addr %s389, 8
      %s391 = smul.addr %s387, 64
      %s392 = sadd.s32 %s390, %s391
      %s393 = smul.addr %s392, 8
      %s394 = scalar_lea.vmem %s3, %s393
      %p395 = scmp.lt.s32.totalorder %s21, 1
      %s396 = scalar_select %p395, %s21, 1
      %p397 = scmp.lt.s32.totalorder %s22, 7
      %s398 = scalar_select %p397, %s22, 7
      %s399 = smul.addr %s398, 8
      %s400 = smul.addr %s396, 64
      %s401 = sadd.s32 %s399, %s400
      %s402 = smul.addr %s401, 8
      %s403 = scalar_lea.vmem %s6, %s402
      %v405 = vld [vmem:[%s363] sm:$0xf]
      %v406 = vld [vmem:[%s363 + $0x4] sm:$0x1]
      %v407 = vld [vmem:[%s363 + $0x8] sm:$0xf]
      %v408 = vld [vmem:[%s363 + $0xc] sm:$0x1]
      %v409 = vld [vmem:[%s363 + $0x10] sm:$0xf]
      %v410 = vld [vmem:[%s363 + $0x14] sm:$0x1]
      %v411 = vld [vmem:[%s363 + $0x18] sm:$0xf]
      %v412 = vld [vmem:[%s363 + $0x1c] sm:$0x1]
      %v413 = vld [vmem:[%s363 + $0x20] sm:$0xf]
      %v414 = vld [vmem:[%s363 + $0x24] sm:$0x1]
      %v415 = vld [vmem:[%s363 + $0x28] sm:$0xf]
      %v416 = vld [vmem:[%s363 + $0x2c] sm:$0x1]
      %v417 = vld [vmem:[%s363 + $0x30] sm:$0xf]
      %v418 = vld [vmem:[%s363 + $0x34] sm:$0x1]
      %v419 = vld [vmem:[%s363 + $0x38] sm:$0xf]
      %v420 = vld [vmem:[%s363 + $0x3c] sm:$0x1]
      %v421 = vld [vmem:[%s363 + $0x40] sm:$0xf]
      %v422 = vld [vmem:[%s363 + $0x44] sm:$0x1]
      %v423 = vld [vmem:[%s363 + $0x48] sm:$0xf]
      %v424 = vld [vmem:[%s363 + $0x4c] sm:$0x1]
      %v425 = vld [vmem:[%s373] sm:$0xf]
      %v426 = vld [vmem:[%s373 + $0x4] sm:$0x1]
      %v427 = vld [vmem:[%s373 + $0x8] sm:$0xf]
      %v428 = vld [vmem:[%s373 + $0xc] sm:$0x1]
      %v429 = vld [vmem:[%s373 + $0x10] sm:$0xf]
      %v430 = vld [vmem:[%s373 + $0x14] sm:$0x1]
      %v431 = vld [vmem:[%s373 + $0x18] sm:$0xf]
      %v432 = vld [vmem:[%s373 + $0x1c] sm:$0x1]
      %v433 = vld [vmem:[%s373 + $0x20] sm:$0xf]
      %v434 = vld [vmem:[%s373 + $0x24] sm:$0x1]
      %v435 = vld [vmem:[%s373 + $0x28] sm:$0xf]
      %v436 = vld [vmem:[%s373 + $0x2c] sm:$0x1]
      %v437 = vld [vmem:[%s373 + $0x30] sm:$0xf]
      %v438 = vld [vmem:[%s373 + $0x34] sm:$0x1]
      %v439 = vld [vmem:[%s373 + $0x38] sm:$0xf]
      %v440 = vld [vmem:[%s373 + $0x3c] sm:$0x1]
      %v441 = vld [vmem:[%s373 + $0x40] sm:$0xf]
      %v442 = vld [vmem:[%s373 + $0x44] sm:$0x1]
      %v443 = vld [vmem:[%s373 + $0x48] sm:$0xf]
      %v444 = vld [vmem:[%s373 + $0x4c] sm:$0x1]
      %v445 = vld [vmem:[%s384] sm:$0xf]
      %v446 = vld [vmem:[%s384 + $0x4] sm:$0x1]
      %v447 = vld [vmem:[%s384 + $0x8] sm:$0xf]
      %v448 = vld [vmem:[%s384 + $0xc] sm:$0x1]
      %v449 = vld [vmem:[%s384 + $0x10] sm:$0xf]
      %v450 = vld [vmem:[%s384 + $0x14] sm:$0x1]
      %v451 = vld [vmem:[%s384 + $0x18] sm:$0xf]
      %v452 = vld [vmem:[%s384 + $0x1c] sm:$0x1]
      %v453 = vld [vmem:[%s384 + $0x20] sm:$0xf]
      %v454 = vld [vmem:[%s384 + $0x24] sm:$0x1]
      %v455 = vld [vmem:[%s384 + $0x28] sm:$0xf]
      %v456 = vld [vmem:[%s384 + $0x2c] sm:$0x1]
      %v457 = vld [vmem:[%s384 + $0x30] sm:$0xf]
      %v458 = vld [vmem:[%s384 + $0x34] sm:$0x1]
      %v459 = vld [vmem:[%s384 + $0x38] sm:$0xf]
      %v460 = vld [vmem:[%s384 + $0x3c] sm:$0x1]
      %v461 = vld [vmem:[%s384 + $0x40] sm:$0xf]
      %v462 = vld [vmem:[%s384 + $0x44] sm:$0x1]
      %v463 = vld [vmem:[%s384 + $0x48] sm:$0xf]
      %v464 = vld [vmem:[%s384 + $0x4c] sm:$0x1]
      %v481 = vunpack.c.l.b16 %v405
      %v482 = vunpack.c.l.b16 %v406
      %v483 = vunpack.c.l.b16 %v407
      %v484 = vunpack.c.l.b16 %v408
      %v485 = vunpack.c.l.b16 %v409
      %v486 = vunpack.c.l.b16 %v410
      %v487 = vunpack.c.l.b16 %v411
      %v488 = vunpack.c.l.b16 %v412
      %v489 = vunpack.c.l.b16 %v413
      %v490 = vunpack.c.l.b16 %v414
      %v491 = vunpack.c.l.b16 %v415
      %v492 = vunpack.c.l.b16 %v416
      %v493 = vunpack.c.l.b16 %v417
      %v494 = vunpack.c.l.b16 %v418
      %v495 = vunpack.c.l.b16 %v419
      %v496 = vunpack.c.l.b16 %v420
      %v497 = vpack.c.b16 %v482, %v481
      %v498 = vpack.c.b16 %v484, %v483
      %v499 = vpack.c.b16 %v486, %v485
      %v500 = vpack.c.b16 %v488, %v487
      %v501 = vpack.c.b16 %v490, %v489
      %v502 = vpack.c.b16 %v492, %v491
      %v503 = vpack.c.b16 %v494, %v493
      %v504 = vpack.c.b16 %v496, %v495
      %v506 = vshrl.u32 %v497, 16
      %v508 = vshll.u32 %v497, 16
      %v510 = vrot.slane %v508, 1
      %v511 = vor.u32 %v506, %v510
      %v513 = vshrl.u32 %v498, 16
      %v515 = vshll.u32 %v498, 16
      %v517 = vrot.slane %v515, 1
      %v518 = vor.u32 %v513, %v517
      %v520 = vshrl.u32 %v499, 16
      %v522 = vshll.u32 %v499, 16
      %v524 = vrot.slane %v522, 1
      %v525 = vor.u32 %v520, %v524
      %v527 = vshrl.u32 %v500, 16
      %v529 = vshll.u32 %v500, 16
      %v531 = vrot.slane %v529, 1
      %v532 = vor.u32 %v527, %v531
      %v534 = vshrl.u32 %v501, 16
      %v536 = vshll.u32 %v501, 16
      %v538 = vrot.slane %v536, 1
      %v539 = vor.u32 %v534, %v538
      %v541 = vshrl.u32 %v502, 16
      %v543 = vshll.u32 %v502, 16
      %v545 = vrot.slane %v543, 1
      %v546 = vor.u32 %v541, %v545
      %v548 = vshrl.u32 %v503, 16
      %v550 = vshll.u32 %v503, 16
      %v552 = vrot.slane %v550, 1
      %v553 = vor.u32 %v548, %v552
      %v555 = vshrl.u32 %v504, 16
      %v557 = vshll.u32 %v504, 16
      %v559 = vrot.slane %v557, 1
      %v560 = vor.u32 %v555, %v559
      %561 = vrot.lane.b32.xlu0 %v511, 16
      %v562 = vpop.permute.xlu0 %561
      %563 = vrot.lane.b32.xlu0 %v518, 16
      %v564 = vpop.permute.xlu0 %563
      %565 = vrot.lane.b32.xlu0 %v525, 16
      %v566 = vpop.permute.xlu0 %565
      %567 = vrot.lane.b32.xlu0 %v532, 16
      %v568 = vpop.permute.xlu0 %567
      %569 = vrot.lane.b32.xlu0 %v539, 16
      %v570 = vpop.permute.xlu0 %569
      %571 = vrot.lane.b32.xlu0 %v546, 16
      %v572 = vpop.permute.xlu0 %571
      %573 = vrot.lane.b32.xlu0 %v553, 16
      %v574 = vpop.permute.xlu0 %573
      %575 = vrot.lane.b32.xlu0 %v560, 16
      %v576 = vpop.permute.xlu0 %575
      %v577 = vrot.slane %v497, 1
      %v578 = vrot.slane %v498, 1
      %v579 = vrot.slane %v499, 1
      %v580 = vrot.slane %v500, 1
      %v581 = vrot.slane %v501, 1
      %v582 = vrot.slane %v502, 1
      %v583 = vrot.slane %v503, 1
      %v584 = vrot.slane %v504, 1
      %585 = vrot.lane.b32.xlu0 %v577, 32
      %v586 = vpop.permute.xlu0 %585
      %587 = vrot.lane.b32.xlu0 %v578, 32
      %v588 = vpop.permute.xlu0 %587
      %589 = vrot.lane.b32.xlu0 %v579, 32
      %v590 = vpop.permute.xlu0 %589
      %591 = vrot.lane.b32.xlu0 %v580, 32
      %v592 = vpop.permute.xlu0 %591
      %593 = vrot.lane.b32.xlu0 %v581, 32
      %v594 = vpop.permute.xlu0 %593
      %595 = vrot.lane.b32.xlu0 %v582, 32
      %v596 = vpop.permute.xlu0 %595
      %597 = vrot.lane.b32.xlu0 %v583, 32
      %v598 = vpop.permute.xlu0 %597
      %599 = vrot.lane.b32.xlu0 %v584, 32
      %v600 = vpop.permute.xlu0 %599
      %v602 = vunpack.c.l.b16 %v421
      %v603 = vpack.c.b16 %v483, %v483
      %v604 = vpack.c.b16 %v485, %v485
      %v605 = vpack.c.b16 %v487, %v487
      %v606 = vpack.c.b16 %v489, %v489
      %v607 = vpack.c.b16 %v491, %v491
      %v608 = vpack.c.b16 %v493, %v493
      %v609 = vpack.c.b16 %v495, %v495
      %v610 = vpack.c.b16 %v602, %v602
      %611 = vrot.lane.b32.xlu0 %v603, 48
      %v612 = vpop.permute.xlu0 %611
      %613 = vrot.lane.b32.xlu0 %v604, 48
      %v614 = vpop.permute.xlu0 %613
      %615 = vrot.lane.b32.xlu0 %v605, 48
      %v616 = vpop.permute.xlu0 %615
      %617 = vrot.lane.b32.xlu0 %v606, 48
      %v618 = vpop.permute.xlu0 %617
      %619 = vrot.lane.b32.xlu0 %v607, 48
      %v620 = vpop.permute.xlu0 %619
      %621 = vrot.lane.b32.xlu0 %v608, 48
      %v622 = vpop.permute.xlu0 %621
      %623 = vrot.lane.b32.xlu0 %v609, 48
      %v624 = vpop.permute.xlu0 %623
      %625 = vrot.lane.b32.xlu0 %v610, 48
      %v626 = vpop.permute.xlu0 %625
      %v628 = vunpack.c.l.b16 %v422
      %v629 = vpack.c.b16 %v628, %v602
      %v631 = vshrl.u32 %v629, 16
      %v633 = vshll.u32 %v629, 16
      %v635 = vrot.slane %v633, 1
      %v636 = vor.u32 %v631, %v635
      %637 = vrot.lane.b32.xlu0 %v518, 64
      %v638 = vpop.permute.xlu0 %637
      %639 = vrot.lane.b32.xlu0 %v525, 64
      %v640 = vpop.permute.xlu0 %639
      %641 = vrot.lane.b32.xlu0 %v532, 64
      %v642 = vpop.permute.xlu0 %641
      %643 = vrot.lane.b32.xlu0 %v539, 64
      %v644 = vpop.permute.xlu0 %643
      %645 = vrot.lane.b32.xlu0 %v546, 64
      %v646 = vpop.permute.xlu0 %645
      %647 = vrot.lane.b32.xlu0 %v553, 64
      %v648 = vpop.permute.xlu0 %647
      %649 = vrot.lane.b32.xlu0 %v560, 64
      %v650 = vpop.permute.xlu0 %649
      %651 = vrot.lane.b32.xlu0 %v636, 64
      %v652 = vpop.permute.xlu0 %651
      %v653 = vrot.slane %v629, 1
      %654 = vrot.lane.b32.xlu0 %v578, 80
      %v655 = vpop.permute.xlu0 %654
      %656 = vrot.lane.b32.xlu0 %v579, 80
      %v657 = vpop.permute.xlu0 %656
      %658 = vrot.lane.b32.xlu0 %v580, 80
      %v659 = vpop.permute.xlu0 %658
      %660 = vrot.lane.b32.xlu0 %v581, 80
      %v661 = vpop.permute.xlu0 %660
      %662 = vrot.lane.b32.xlu0 %v582, 80
      %v663 = vpop.permute.xlu0 %662
      %664 = vrot.lane.b32.xlu0 %v583, 80
      %v665 = vpop.permute.xlu0 %664
      %666 = vrot.lane.b32.xlu0 %v584, 80
      %v667 = vpop.permute.xlu0 %666
      %668 = vrot.lane.b32.xlu0 %v653, 80
      %v669 = vpop.permute.xlu0 %668
      %v671 = vunpack.c.l.b16 %v423
      %v672 = vpack.c.b16 %v671, %v671
      %673 = vrot.lane.b32.xlu0 %v604, 96
      %v674 = vpop.permute.xlu0 %673
      %675 = vrot.lane.b32.xlu0 %v605, 96
      %v676 = vpop.permute.xlu0 %675
      %677 = vrot.lane.b32.xlu0 %v606, 96
      %v678 = vpop.permute.xlu0 %677
      %679 = vrot.lane.b32.xlu0 %v607, 96
      %v680 = vpop.permute.xlu0 %679
      %681 = vrot.lane.b32.xlu0 %v608, 96
      %v682 = vpop.permute.xlu0 %681
      %683 = vrot.lane.b32.xlu0 %v609, 96
      %v684 = vpop.permute.xlu0 %683
      %685 = vrot.lane.b32.xlu0 %v610, 96
      %v686 = vpop.permute.xlu0 %685
      %687 = vrot.lane.b32.xlu0 %v672, 96
      %v688 = vpop.permute.xlu0 %687
      %v690 = vunpack.c.l.b16 %v424
      %v691 = vpack.c.b16 %v690, %v671
      %v693 = vshrl.u32 %v691, 16
      %v695 = vshll.u32 %v691, 16
      %v697 = vrot.slane %v695, 1
      %v698 = vor.u32 %v693, %v697
      %699 = vrot.lane.b32.xlu0 %v525, 112
      %v700 = vpop.permute.xlu0 %699
      %701 = vrot.lane.b32.xlu0 %v532, 112
      %v702 = vpop.permute.xlu0 %701
      %703 = vrot.lane.b32.xlu0 %v539, 112
      %v704 = vpop.permute.xlu0 %703
      %705 = vrot.lane.b32.xlu0 %v546, 112
      %v706 = vpop.permute.xlu0 %705
      %707 = vrot.lane.b32.xlu0 %v553, 112
      %v708 = vpop.permute.xlu0 %707
      %709 = vrot.lane.b32.xlu0 %v560, 112
      %v710 = vpop.permute.xlu0 %709
      %711 = vrot.lane.b32.xlu0 %v636, 112
      %v712 = vpop.permute.xlu0 %711
      %713 = vrot.lane.b32.xlu0 %v698, 112
      %v714 = vpop.permute.xlu0 %713
      %v715 = vrot.slane %v691, 1
      %v724 = vunpack.c.l.b16 %v425
      %v725 = vunpack.c.l.b16 %v427
      %v726 = vunpack.c.l.b16 %v429
      %v727 = vunpack.c.l.b16 %v431
      %v728 = vunpack.c.l.b16 %v433
      %v729 = vunpack.c.l.b16 %v435
      %v730 = vunpack.c.l.b16 %v437
      %v731 = vunpack.c.l.b16 %v439
      %v732 = vpack.c.b16 %v724, %v724
      %v733 = vpack.c.b16 %v725, %v725
      %v734 = vpack.c.b16 %v726, %v726
      %v735 = vpack.c.b16 %v727, %v727
      %v736 = vpack.c.b16 %v728, %v728
      %v737 = vpack.c.b16 %v729, %v729
      %v738 = vpack.c.b16 %v730, %v730
      %v739 = vpack.c.b16 %v731, %v731
      %740 = vrot.lane.b32.xlu0 %v732, 16
      %v741 = vpop.permute.xlu0 %740
      %742 = vrot.lane.b32.xlu0 %v733, 16
      %v743 = vpop.permute.xlu0 %742
      %744 = vrot.lane.b32.xlu0 %v734, 16
      %v745 = vpop.permute.xlu0 %744
      %746 = vrot.lane.b32.xlu0 %v735, 16
      %v747 = vpop.permute.xlu0 %746
      %748 = vrot.lane.b32.xlu0 %v736, 16
      %v749 = vpop.permute.xlu0 %748
      %750 = vrot.lane.b32.xlu0 %v737, 16
      %v751 = vpop.permute.xlu0 %750
      %752 = vrot.lane.b32.xlu0 %v738, 16
      %v753 = vpop.permute.xlu0 %752
      %754 = vrot.lane.b32.xlu0 %v739, 16
      %v755 = vpop.permute.xlu0 %754
      %v764 = vunpack.c.l.b16 %v426
      %v765 = vunpack.c.l.b16 %v428
      %v766 = vunpack.c.l.b16 %v430
      %v767 = vunpack.c.l.b16 %v432
      %v768 = vunpack.c.l.b16 %v434
      %v769 = vunpack.c.l.b16 %v436
      %v770 = vunpack.c.l.b16 %v438
      %v771 = vunpack.c.l.b16 %v440
      %v772 = vpack.c.b16 %v764, %v724
      %v773 = vpack.c.b16 %v765, %v725
      %v774 = vpack.c.b16 %v766, %v726
      %v775 = vpack.c.b16 %v767, %v727
      %v776 = vpack.c.b16 %v768, %v728
      %v777 = vpack.c.b16 %v769, %v729
      %v778 = vpack.c.b16 %v770, %v730
      %v779 = vpack.c.b16 %v771, %v731
      %v781 = vshrl.u32 %v772, 16
      %v783 = vshll.u32 %v772, 16
      %v785 = vrot.slane %v783, 1
      %v786 = vor.u32 %v781, %v785
      %v788 = vshrl.u32 %v773, 16
      %v790 = vshll.u32 %v773, 16
      %v792 = vrot.slane %v790, 1
      %v793 = vor.u32 %v788, %v792
      %v795 = vshrl.u32 %v774, 16
      %v797 = vshll.u32 %v774, 16
      %v799 = vrot.slane %v797, 1
      %v800 = vor.u32 %v795, %v799
      %v802 = vshrl.u32 %v775, 16
      %v804 = vshll.u32 %v775, 16
      %v806 = vrot.slane %v804, 1
      %v807 = vor.u32 %v802, %v806
      %v809 = vshrl.u32 %v776, 16
      %v811 = vshll.u32 %v776, 16
      %v813 = vrot.slane %v811, 1
      %v814 = vor.u32 %v809, %v813
      %v816 = vshrl.u32 %v777, 16
      %v818 = vshll.u32 %v777, 16
      %v820 = vrot.slane %v818, 1
      %v821 = vor.u32 %v816, %v820
      %v823 = vshrl.u32 %v778, 16
      %v825 = vshll.u32 %v778, 16
      %v827 = vrot.slane %v825, 1
      %v828 = vor.u32 %v823, %v827
      %v830 = vshrl.u32 %v779, 16
      %v832 = vshll.u32 %v779, 16
      %v834 = vrot.slane %v832, 1
      %v835 = vor.u32 %v830, %v834
      %836 = vrot.lane.b32.xlu0 %v786, 32
      %v837 = vpop.permute.xlu0 %836
      %838 = vrot.lane.b32.xlu0 %v793, 32
      %v839 = vpop.permute.xlu0 %838
      %840 = vrot.lane.b32.xlu0 %v800, 32
      %v841 = vpop.permute.xlu0 %840
      %842 = vrot.lane.b32.xlu0 %v807, 32
      %v843 = vpop.permute.xlu0 %842
      %844 = vrot.lane.b32.xlu0 %v814, 32
      %v845 = vpop.permute.xlu0 %844
      %846 = vrot.lane.b32.xlu0 %v821, 32
      %v847 = vpop.permute.xlu0 %846
      %848 = vrot.lane.b32.xlu0 %v828, 32
      %v849 = vpop.permute.xlu0 %848
      %850 = vrot.lane.b32.xlu0 %v835, 32
      %v851 = vpop.permute.xlu0 %850
      %v852 = vrot.slane %v772, 1
      %v853 = vrot.slane %v773, 1
      %v854 = vrot.slane %v774, 1
      %v855 = vrot.slane %v775, 1
      %v856 = vrot.slane %v776, 1
      %v857 = vrot.slane %v777, 1
      %v858 = vrot.slane %v778, 1
      %v859 = vrot.slane %v779, 1
      %860 = vrot.lane.b32.xlu0 %v852, 48
      %v861 = vpop.permute.xlu0 %860
      %862 = vrot.lane.b32.xlu0 %v853, 48
      %v863 = vpop.permute.xlu0 %862
      %864 = vrot.lane.b32.xlu0 %v854, 48
      %v865 = vpop.permute.xlu0 %864
      %866 = vrot.lane.b32.xlu0 %v855, 48
      %v867 = vpop.permute.xlu0 %866
      %868 = vrot.lane.b32.xlu0 %v856, 48
      %v869 = vpop.permute.xlu0 %868
      %870 = vrot.lane.b32.xlu0 %v857, 48
      %v871 = vpop.permute.xlu0 %870
      %872 = vrot.lane.b32.xlu0 %v858, 48
      %v873 = vpop.permute.xlu0 %872
      %874 = vrot.lane.b32.xlu0 %v859, 48
      %v875 = vpop.permute.xlu0 %874
      %v877 = vunpack.c.l.b16 %v441
      %v878 = vpack.c.b16 %v877, %v877
      %879 = vrot.lane.b32.xlu0 %v733, 64
      %v880 = vpop.permute.xlu0 %879
      %881 = vrot.lane.b32.xlu0 %v734, 64
      %v882 = vpop.permute.xlu0 %881
      %883 = vrot.lane.b32.xlu0 %v735, 64
      %v884 = vpop.permute.xlu0 %883
      %885 = vrot.lane.b32.xlu0 %v736, 64
      %v886 = vpop.permute.xlu0 %885
      %887 = vrot.lane.b32.xlu0 %v737, 64
      %v888 = vpop.permute.xlu0 %887
      %889 = vrot.lane.b32.xlu0 %v738, 64
      %v890 = vpop.permute.xlu0 %889
      %891 = vrot.lane.b32.xlu0 %v739, 64
      %v892 = vpop.permute.xlu0 %891
      %893 = vrot.lane.b32.xlu0 %v878, 64
      %v894 = vpop.permute.xlu0 %893
      %v896 = vunpack.c.l.b16 %v442
      %v897 = vpack.c.b16 %v896, %v877
      %v899 = vshrl.u32 %v897, 16
      %v901 = vshll.u32 %v897, 16
      %v903 = vrot.slane %v901, 1
      %v904 = vor.u32 %v899, %v903
      %905 = vrot.lane.b32.xlu0 %v793, 80
      %v906 = vpop.permute.xlu0 %905
      %907 = vrot.lane.b32.xlu0 %v800, 80
      %v908 = vpop.permute.xlu0 %907
      %909 = vrot.lane.b32.xlu0 %v807, 80
      %v910 = vpop.permute.xlu0 %909
      %911 = vrot.lane.b32.xlu0 %v814, 80
      %v912 = vpop.permute.xlu0 %911
      %913 = vrot.lane.b32.xlu0 %v821, 80
      %v914 = vpop.permute.xlu0 %913
      %915 = vrot.lane.b32.xlu0 %v828, 80
      %v916 = vpop.permute.xlu0 %915
      %917 = vrot.lane.b32.xlu0 %v835, 80
      %v918 = vpop.permute.xlu0 %917
      %919 = vrot.lane.b32.xlu0 %v904, 80
      %v920 = vpop.permute.xlu0 %919
      %v921 = vrot.slane %v897, 1
      %922 = vrot.lane.b32.xlu0 %v853, 96
      %v923 = vpop.permute.xlu0 %922
      %924 = vrot.lane.b32.xlu0 %v854, 96
      %v925 = vpop.permute.xlu0 %924
      %926 = vrot.lane.b32.xlu0 %v855, 96
      %v927 = vpop.permute.xlu0 %926
      %928 = vrot.lane.b32.xlu0 %v856, 96
      %v929 = vpop.permute.xlu0 %928
      %930 = vrot.lane.b32.xlu0 %v857, 96
      %v931 = vpop.permute.xlu0 %930
      %932 = vrot.lane.b32.xlu0 %v858, 96
      %v933 = vpop.permute.xlu0 %932
      %934 = vrot.lane.b32.xlu0 %v859, 96
      %v935 = vpop.permute.xlu0 %934
      %936 = vrot.lane.b32.xlu0 %v921, 96
      %v937 = vpop.permute.xlu0 %936
      %v939 = vunpack.c.l.b16 %v443
      %v940 = vpack.c.b16 %v939, %v939
      %941 = vrot.lane.b32.xlu0 %v734, 112
      %v942 = vpop.permute.xlu0 %941
      %943 = vrot.lane.b32.xlu0 %v735, 112
      %v944 = vpop.permute.xlu0 %943
      %945 = vrot.lane.b32.xlu0 %v736, 112
      %v946 = vpop.permute.xlu0 %945
      %947 = vrot.lane.b32.xlu0 %v737, 112
      %v948 = vpop.permute.xlu0 %947
      %949 = vrot.lane.b32.xlu0 %v738, 112
      %v950 = vpop.permute.xlu0 %949
      %951 = vrot.lane.b32.xlu0 %v739, 112
      %v952 = vpop.permute.xlu0 %951
      %953 = vrot.lane.b32.xlu0 %v878, 112
      %v954 = vpop.permute.xlu0 %953
      %955 = vrot.lane.b32.xlu0 %v940, 112
      %v956 = vpop.permute.xlu0 %955
      %vm957 = vcmask 130048
      %v960 = vsel %vm957, %v405, %v562
      %v963 = vsel %vm957, %v407, %v564
      %v966 = vsel %vm957, %v409, %v566
      %v969 = vsel %vm957, %v411, %v568
      %v972 = vsel %vm957, %v413, %v570
      %v975 = vsel %vm957, %v415, %v572
      %v978 = vsel %vm957, %v417, %v574
      %v981 = vsel %vm957, %v419, %v576
      %vm982 = vcmask 261120
      %v984 = vsel %vm982, %v960, %v586
      %v986 = vsel %vm982, %v963, %v588
      %v988 = vsel %vm982, %v966, %v590
      %v990 = vsel %vm982, %v969, %v592
      %v992 = vsel %vm982, %v972, %v594
      %v994 = vsel %vm982, %v975, %v596
      %v996 = vsel %vm982, %v978, %v598
      %v998 = vsel %vm982, %v981, %v600
      %vm999 = vcmask 392192
      %v1001 = vsel %vm999, %v984, %v612
      %v1003 = vsel %vm999, %v986, %v614
      %v1005 = vsel %vm999, %v988, %v616
      %v1007 = vsel %vm999, %v990, %v618
      %v1009 = vsel %vm999, %v992, %v620
      %v1011 = vsel %vm999, %v994, %v622
      %v1013 = vsel %vm999, %v996, %v624
      %v1015 = vsel %vm999, %v998, %v626
      %vm1016 = vcmask 523264
      %v1018 = vsel %vm1016, %v1001, %v638
      %v1020 = vsel %vm1016, %v1003, %v640
      %v1022 = vsel %vm1016, %v1005, %v642
      %v1024 = vsel %vm1016, %v1007, %v644
      %v1026 = vsel %vm1016, %v1009, %v646
      %v1028 = vsel %vm1016, %v1011, %v648
      %v1030 = vsel %vm1016, %v1013, %v650
      %v1032 = vsel %vm1016, %v1015, %v652
      %vm1033 = vcmask 654336
      %v1035 = vsel %vm1033, %v1018, %v655
      %v1037 = vsel %vm1033, %v1020, %v657
      %v1039 = vsel %vm1033, %v1022, %v659
      %v1041 = vsel %vm1033, %v1024, %v661
      %v1043 = vsel %vm1033, %v1026, %v663
      %v1045 = vsel %vm1033, %v1028, %v665
      %v1047 = vsel %vm1033, %v1030, %v667
      %v1049 = vsel %vm1033, %v1032, %v669
      %vm1050 = vcmask 785408
      %v1052 = vsel %vm1050, %v1035, %v674
      %v1054 = vsel %vm1050, %v1037, %v676
      %v1056 = vsel %vm1050, %v1039, %v678
      %v1058 = vsel %vm1050, %v1041, %v680
      %v1060 = vsel %vm1050, %v1043, %v682
      %v1062 = vsel %vm1050, %v1045, %v684
      %v1064 = vsel %vm1050, %v1047, %v686
      %v1066 = vsel %vm1050, %v1049, %v688
      %vm1067 = vcmask 916480
      %v1069 = vsel %vm1067, %v1052, %v700
      %v1071 = vsel %vm1067, %v1054, %v702
      %v1073 = vsel %vm1067, %v1056, %v704
      %v1075 = vsel %vm1067, %v1058, %v706
      %v1077 = vsel %vm1067, %v1060, %v708
      %v1079 = vsel %vm1067, %v1062, %v710
      %v1081 = vsel %vm1067, %v1064, %v712
      %v1083 = vsel %vm1067, %v1066, %v714
      %v1086 = vsel %vm957, %v579, %v741
      %v1089 = vsel %vm957, %v580, %v743
      %v1092 = vsel %vm957, %v581, %v745
      %v1095 = vsel %vm957, %v582, %v747
      %v1098 = vsel %vm957, %v583, %v749
      %v1101 = vsel %vm957, %v584, %v751
      %v1104 = vsel %vm957, %v653, %v753
      %v1107 = vsel %vm957, %v715, %v755
      %v1109 = vsel %vm982, %v1086, %v837
      %v1111 = vsel %vm982, %v1089, %v839
      %v1113 = vsel %vm982, %v1092, %v841
      %v1115 = vsel %vm982, %v1095, %v843
      %v1117 = vsel %vm982, %v1098, %v845
      %v1119 = vsel %vm982, %v1101, %v847
      %v1121 = vsel %vm982, %v1104, %v849
      %v1123 = vsel %vm982, %v1107, %v851
      %v1125 = vsel %vm999, %v1109, %v861
      %v1127 = vsel %vm999, %v1111, %v863
      %v1129 = vsel %vm999, %v1113, %v865
      %v1131 = vsel %vm999, %v1115, %v867
      %v1133 = vsel %vm999, %v1117, %v869
      %v1135 = vsel %vm999, %v1119, %v871
      %v1137 = vsel %vm999, %v1121, %v873
      %v1139 = vsel %vm999, %v1123, %v875
      %v1141 = vsel %vm1016, %v1125, %v880
      %v1143 = vsel %vm1016, %v1127, %v882
      %v1145 = vsel %vm1016, %v1129, %v884
      %v1147 = vsel %vm1016, %v1131, %v886
      %v1149 = vsel %vm1016, %v1133, %v888
      %v1151 = vsel %vm1016, %v1135, %v890
      %v1153 = vsel %vm1016, %v1137, %v892
      %v1155 = vsel %vm1016, %v1139, %v894
      %v1157 = vsel %vm1033, %v1141, %v906
      %v1159 = vsel %vm1033, %v1143, %v908
      %v1161 = vsel %vm1033, %v1145, %v910
      %v1163 = vsel %vm1033, %v1147, %v912
      %v1165 = vsel %vm1033, %v1149, %v914
      %v1167 = vsel %vm1033, %v1151, %v916
      %v1169 = vsel %vm1033, %v1153, %v918
      %v1171 = vsel %vm1033, %v1155, %v920
      %v1173 = vsel %vm1050, %v1157, %v923
      %v1175 = vsel %vm1050, %v1159, %v925
      %v1177 = vsel %vm1050, %v1161, %v927
      %v1179 = vsel %vm1050, %v1163, %v929
      %v1181 = vsel %vm1050, %v1165, %v931
      %v1183 = vsel %vm1050, %v1167, %v933
      %v1185 = vsel %vm1050, %v1169, %v935
      %v1187 = vsel %vm1050, %v1171, %v937
      %v1189 = vsel %vm1067, %v1173, %v942
      %v1191 = vsel %vm1067, %v1175, %v944
      %v1193 = vsel %vm1067, %v1177, %v946
      %v1195 = vsel %vm1067, %v1179, %v948
      %v1197 = vsel %vm1067, %v1181, %v950
      %v1199 = vsel %vm1067, %v1183, %v952
      %v1201 = vsel %vm1067, %v1185, %v954
      %v1203 = vsel %vm1067, %v1187, %v956
      %v1205 = vunpack.c.l.b16 %v444
      %v1206 = vpack.c.b16 %v1205, %v939
      %v1208 = vshrl.u32 %v1206, 16
      %v1210 = vshll.u32 %v1206, 16
      %v1212 = vrot.slane %v1210, 1
      %v1213 = vor.u32 %v1208, %v1212
      %1214 = vrot.lane.b32.xlu0 %v800, 16
      %v1215 = vpop.permute.xlu0 %1214
      %1216 = vrot.lane.b32.xlu0 %v807, 16
      %v1217 = vpop.permute.xlu0 %1216
      %1218 = vrot.lane.b32.xlu0 %v814, 16
      %v1219 = vpop.permute.xlu0 %1218
      %1220 = vrot.lane.b32.xlu0 %v821, 16
      %v1221 = vpop.permute.xlu0 %1220
      %1222 = vrot.lane.b32.xlu0 %v828, 16
      %v1223 = vpop.permute.xlu0 %1222
      %1224 = vrot.lane.b32.xlu0 %v835, 16
      %v1225 = vpop.permute.xlu0 %1224
      %1226 = vrot.lane.b32.xlu0 %v904, 16
      %v1227 = vpop.permute.xlu0 %1226
      %1228 = vrot.lane.b32.xlu0 %v1213, 16
      %v1229 = vpop.permute.xlu0 %1228
      %v1238 = vunpack.c.l.b16 %v445
      %v1239 = vunpack.c.l.b16 %v447
      %v1240 = vunpack.c.l.b16 %v449
      %v1241 = vunpack.c.l.b16 %v451
      %v1242 = vunpack.c.l.b16 %v453
      %v1243 = vunpack.c.l.b16 %v455
      %v1244 = vunpack.c.l.b16 %v457
      %v1245 = vunpack.c.l.b16 %v459
      %v1246 = vpack.c.b16 %v1238, %v1238
      %v1247 = vpack.c.b16 %v1239, %v1239
      %v1248 = vpack.c.b16 %v1240, %v1240
      %v1249 = vpack.c.b16 %v1241, %v1241
      %v1250 = vpack.c.b16 %v1242, %v1242
      %v1251 = vpack.c.b16 %v1243, %v1243
      %v1252 = vpack.c.b16 %v1244, %v1244
      %v1253 = vpack.c.b16 %v1245, %v1245
      %v1255 = vshrl.u32 %v1246, 16
      %v1257 = vrot.slane %v1255, 7
      %v1258 = vshll.u32 %v1246, 16
      %v1260 = vor.u32 %v1257, %v1258
      %v1262 = vshrl.u32 %v1247, 16
      %v1264 = vrot.slane %v1262, 7
      %v1265 = vshll.u32 %v1247, 16
      %v1267 = vor.u32 %v1264, %v1265
      %v1269 = vshrl.u32 %v1248, 16
      %v1271 = vrot.slane %v1269, 7
      %v1272 = vshll.u32 %v1248, 16
      %v1274 = vor.u32 %v1271, %v1272
      %v1276 = vshrl.u32 %v1249, 16
      %v1278 = vrot.slane %v1276, 7
      %v1279 = vshll.u32 %v1249, 16
      %v1281 = vor.u32 %v1278, %v1279
      %v1283 = vshrl.u32 %v1250, 16
      %v1285 = vrot.slane %v1283, 7
      %v1286 = vshll.u32 %v1250, 16
      %v1288 = vor.u32 %v1285, %v1286
      %v1290 = vshrl.u32 %v1251, 16
      %v1292 = vrot.slane %v1290, 7
      %v1293 = vshll.u32 %v1251, 16
      %v1295 = vor.u32 %v1292, %v1293
      %v1297 = vshrl.u32 %v1252, 16
      %v1299 = vrot.slane %v1297, 7
      %v1300 = vshll.u32 %v1252, 16
      %v1302 = vor.u32 %v1299, %v1300
      %v1304 = vshrl.u32 %v1253, 16
      %v1306 = vrot.slane %v1304, 7
      %v1307 = vshll.u32 %v1253, 16
      %v1309 = vor.u32 %v1306, %v1307
      %1310 = vrot.lane.b32.xlu0 %v1260, 32
      %v1311 = vpop.permute.xlu0 %1310
      %1312 = vrot.lane.b32.xlu0 %v1267, 32
      %v1313 = vpop.permute.xlu0 %1312
      %1314 = vrot.lane.b32.xlu0 %v1274, 32
      %v1315 = vpop.permute.xlu0 %1314
      %1316 = vrot.lane.b32.xlu0 %v1281, 32
      %v1317 = vpop.permute.xlu0 %1316
      %1318 = vrot.lane.b32.xlu0 %v1288, 32
      %v1319 = vpop.permute.xlu0 %1318
      %1320 = vrot.lane.b32.xlu0 %v1295, 32
      %v1321 = vpop.permute.xlu0 %1320
      %1322 = vrot.lane.b32.xlu0 %v1302, 32
      %v1323 = vpop.permute.xlu0 %1322
      %1324 = vrot.lane.b32.xlu0 %v1309, 32
      %v1325 = vpop.permute.xlu0 %1324
      %v1334 = vunpack.c.l.b16 %v446
      %v1335 = vunpack.c.l.b16 %v448
      %v1336 = vunpack.c.l.b16 %v450
      %v1337 = vunpack.c.l.b16 %v452
      %v1338 = vunpack.c.l.b16 %v454
      %v1339 = vunpack.c.l.b16 %v456
      %v1340 = vunpack.c.l.b16 %v458
      %v1341 = vunpack.c.l.b16 %v460
      %v1342 = vpack.c.b16 %v1334, %v1238
      %v1343 = vpack.c.b16 %v1335, %v1239
      %v1344 = vpack.c.b16 %v1336, %v1240
      %v1345 = vpack.c.b16 %v1337, %v1241
      %v1346 = vpack.c.b16 %v1338, %v1242
      %v1347 = vpack.c.b16 %v1339, %v1243
      %v1348 = vpack.c.b16 %v1340, %v1244
      %v1349 = vpack.c.b16 %v1341, %v1245
      %1350 = vrot.lane.b32.xlu0 %v1342, 48
      %v1351 = vpop.permute.xlu0 %1350
      %1352 = vrot.lane.b32.xlu0 %v1343, 48
      %v1353 = vpop.permute.xlu0 %1352
      %1354 = vrot.lane.b32.xlu0 %v1344, 48
      %v1355 = vpop.permute.xlu0 %1354
      %1356 = vrot.lane.b32.xlu0 %v1345, 48
      %v1357 = vpop.permute.xlu0 %1356
      %1358 = vrot.lane.b32.xlu0 %v1346, 48
      %v1359 = vpop.permute.xlu0 %1358
      %1360 = vrot.lane.b32.xlu0 %v1347, 48
      %v1361 = vpop.permute.xlu0 %1360
      %1362 = vrot.lane.b32.xlu0 %v1348, 48
      %v1363 = vpop.permute.xlu0 %1362
      %1364 = vrot.lane.b32.xlu0 %v1349, 48
      %v1365 = vpop.permute.xlu0 %1364
      %v1367 = vshrl.u32 %v1342, 16
      %v1369 = vshll.u32 %v1342, 16
      %v1371 = vrot.slane %v1369, 1
      %v1372 = vor.u32 %v1367, %v1371
      %v1374 = vshrl.u32 %v1343, 16
      %v1376 = vshll.u32 %v1343, 16
      %v1378 = vrot.slane %v1376, 1
      %v1379 = vor.u32 %v1374, %v1378
      %v1381 = vshrl.u32 %v1344, 16
      %v1383 = vshll.u32 %v1344, 16
      %v1385 = vrot.slane %v1383, 1
      %v1386 = vor.u32 %v1381, %v1385
      %v1388 = vshrl.u32 %v1345, 16
      %v1390 = vshll.u32 %v1345, 16
      %v1392 = vrot.slane %v1390, 1
      %v1393 = vor.u32 %v1388, %v1392
      %v1395 = vshrl.u32 %v1346, 16
      %v1397 = vshll.u32 %v1346, 16
      %v1399 = vrot.slane %v1397, 1
      %v1400 = vor.u32 %v1395, %v1399
      %v1402 = vshrl.u32 %v1347, 16
      %v1404 = vshll.u32 %v1347, 16
      %v1406 = vrot.slane %v1404, 1
      %v1407 = vor.u32 %v1402, %v1406
      %v1409 = vshrl.u32 %v1348, 16
      %v1411 = vshll.u32 %v1348, 16
      %v1413 = vrot.slane %v1411, 1
      %v1414 = vor.u32 %v1409, %v1413
      %v1416 = vshrl.u32 %v1349, 16
      %v1418 = vshll.u32 %v1349, 16
      %v1420 = vrot.slane %v1418, 1
      %v1421 = vor.u32 %v1416, %v1420
      %1422 = vrot.lane.b32.xlu0 %v1372, 64
      %v1423 = vpop.permute.xlu0 %1422
      %1424 = vrot.lane.b32.xlu0 %v1379, 64
      %v1425 = vpop.permute.xlu0 %1424
      %1426 = vrot.lane.b32.xlu0 %v1386, 64
      %v1427 = vpop.permute.xlu0 %1426
      %1428 = vrot.lane.b32.xlu0 %v1393, 64
      %v1429 = vpop.permute.xlu0 %1428
      %1430 = vrot.lane.b32.xlu0 %v1400, 64
      %v1431 = vpop.permute.xlu0 %1430
      %1432 = vrot.lane.b32.xlu0 %v1407, 64
      %v1433 = vpop.permute.xlu0 %1432
      %1434 = vrot.lane.b32.xlu0 %v1414, 64
      %v1435 = vpop.permute.xlu0 %1434
      %1436 = vrot.lane.b32.xlu0 %v1421, 64
      %v1437 = vpop.permute.xlu0 %1436
      %v1439 = vunpack.c.l.b16 %v461
      %v1440 = vpack.c.b16 %v1439, %v1439
      %v1442 = vshrl.u32 %v1440, 16
      %v1444 = vrot.slane %v1442, 7
      %v1445 = vshll.u32 %v1440, 16
      %v1447 = vor.u32 %v1444, %v1445
      %1448 = vrot.lane.b32.xlu0 %v1267, 80
      %v1449 = vpop.permute.xlu0 %1448
      %1450 = vrot.lane.b32.xlu0 %v1274, 80
      %v1451 = vpop.permute.xlu0 %1450
      %1452 = vrot.lane.b32.xlu0 %v1281, 80
      %v1453 = vpop.permute.xlu0 %1452
      %1454 = vrot.lane.b32.xlu0 %v1288, 80
      %v1455 = vpop.permute.xlu0 %1454
      %1456 = vrot.lane.b32.xlu0 %v1295, 80
      %v1457 = vpop.permute.xlu0 %1456
      %1458 = vrot.lane.b32.xlu0 %v1302, 80
      %v1459 = vpop.permute.xlu0 %1458
      %1460 = vrot.lane.b32.xlu0 %v1309, 80
      %v1461 = vpop.permute.xlu0 %1460
      %1462 = vrot.lane.b32.xlu0 %v1447, 80
      %v1463 = vpop.permute.xlu0 %1462
      %v1465 = vunpack.c.l.b16 %v462
      %v1466 = vpack.c.b16 %v1465, %v1439
      %1467 = vrot.lane.b32.xlu0 %v1343, 96
      %v1468 = vpop.permute.xlu0 %1467
      %1469 = vrot.lane.b32.xlu0 %v1344, 96
      %v1470 = vpop.permute.xlu0 %1469
      %1471 = vrot.lane.b32.xlu0 %v1345, 96
      %v1472 = vpop.permute.xlu0 %1471
      %1473 = vrot.lane.b32.xlu0 %v1346, 96
      %v1474 = vpop.permute.xlu0 %1473
      %1475 = vrot.lane.b32.xlu0 %v1347, 96
      %v1476 = vpop.permute.xlu0 %1475
      %1477 = vrot.lane.b32.xlu0 %v1348, 96
      %v1478 = vpop.permute.xlu0 %1477
      %1479 = vrot.lane.b32.xlu0 %v1349, 96
      %v1480 = vpop.permute.xlu0 %1479
      %1481 = vrot.lane.b32.xlu0 %v1466, 96
      %v1482 = vpop.permute.xlu0 %1481
      %v1484 = vshrl.u32 %v1466, 16
      %v1486 = vshll.u32 %v1466, 16
      %v1488 = vrot.slane %v1486, 1
      %v1489 = vor.u32 %v1484, %v1488
      %1490 = vrot.lane.b32.xlu0 %v1379, 112
      %v1491 = vpop.permute.xlu0 %1490
      %1492 = vrot.lane.b32.xlu0 %v1386, 112
      %v1493 = vpop.permute.xlu0 %1492
      %1494 = vrot.lane.b32.xlu0 %v1393, 112
      %v1495 = vpop.permute.xlu0 %1494
      %1496 = vrot.lane.b32.xlu0 %v1400, 112
      %v1497 = vpop.permute.xlu0 %1496
      %1498 = vrot.lane.b32.xlu0 %v1407, 112
      %v1499 = vpop.permute.xlu0 %1498
      %1500 = vrot.lane.b32.xlu0 %v1414, 112
      %v1501 = vpop.permute.xlu0 %1500
      %1502 = vrot.lane.b32.xlu0 %v1421, 112
      %v1503 = vpop.permute.xlu0 %1502
      %1504 = vrot.lane.b32.xlu0 %v1489, 112
      %v1505 = vpop.permute.xlu0 %1504
      %v1507 = vunpack.c.l.b16 %v463
      %v1508 = vpack.c.b16 %v1507, %v1507
      %v1510 = vshrl.u32 %v1508, 16
      %v1512 = vrot.slane %v1510, 7
      %v1513 = vshll.u32 %v1508, 16
      %v1515 = vor.u32 %v1512, %v1513
      %v1517 = vunpack.c.l.b16 %v464
      %v1518 = vpack.c.b16 %v1517, %v1507
      %1519 = vrot.lane.b32.xlu0 %v1344, 16
      %v1520 = vpop.permute.xlu0 %1519
      %1521 = vrot.lane.b32.xlu0 %v1345, 16
      %v1522 = vpop.permute.xlu0 %1521
      %1523 = vrot.lane.b32.xlu0 %v1346, 16
      %v1524 = vpop.permute.xlu0 %1523
      %1525 = vrot.lane.b32.xlu0 %v1347, 16
      %v1526 = vpop.permute.xlu0 %1525
      %1527 = vrot.lane.b32.xlu0 %v1348, 16
      %v1528 = vpop.permute.xlu0 %1527
      %1529 = vrot.lane.b32.xlu0 %v1349, 16
      %v1530 = vpop.permute.xlu0 %1529
      %1531 = vrot.lane.b32.xlu0 %v1466, 16
      %v1532 = vpop.permute.xlu0 %1531
      %1533 = vrot.lane.b32.xlu0 %v1518, 16
      %v1534 = vpop.permute.xlu0 %1533
      %v1536 = vshrl.u32 %v1518, 16
      %v1538 = vshll.u32 %v1518, 16
      %v1540 = vrot.slane %v1538, 1
      %v1541 = vor.u32 %v1536, %v1540
      %1542 = vrot.lane.b32.xlu0 %v1386, 32
      %v1543 = vpop.permute.xlu0 %1542
      %1544 = vrot.lane.b32.xlu0 %v1393, 32
      %v1545 = vpop.permute.xlu0 %1544
      %1546 = vrot.lane.b32.xlu0 %v1400, 32
      %v1547 = vpop.permute.xlu0 %1546
      %1548 = vrot.lane.b32.xlu0 %v1407, 32
      %v1549 = vpop.permute.xlu0 %1548
      %1550 = vrot.lane.b32.xlu0 %v1414, 32
      %v1551 = vpop.permute.xlu0 %1550
      %1552 = vrot.lane.b32.xlu0 %v1421, 32
      %v1553 = vpop.permute.xlu0 %1552
      %1554 = vrot.lane.b32.xlu0 %v1489, 32
      %v1555 = vpop.permute.xlu0 %1554
      %1556 = vrot.lane.b32.xlu0 %v1541, 32
      %v1557 = vpop.permute.xlu0 %1556
      %v1559 = vsel %vm957, %v774, %v1215
      %v1561 = vsel %vm957, %v775, %v1217
      %v1563 = vsel %vm957, %v776, %v1219
      %v1565 = vsel %vm957, %v777, %v1221
      %v1567 = vsel %vm957, %v778, %v1223
      %v1569 = vsel %vm957, %v779, %v1225
      %v1571 = vsel %vm957, %v897, %v1227
      %v1573 = vsel %vm957, %v1206, %v1229
      %v1575 = vsel %vm982, %v1559, %v1311
      %v1577 = vsel %vm982, %v1561, %v1313
      %v1579 = vsel %vm982, %v1563, %v1315
      %v1581 = vsel %vm982, %v1565, %v1317
      %v1583 = vsel %vm982, %v1567, %v1319
      %v1585 = vsel %vm982, %v1569, %v1321
      %v1587 = vsel %vm982, %v1571, %v1323
      %v1589 = vsel %vm982, %v1573, %v1325
      %v1591 = vsel %vm999, %v1575, %v1351
      %v1593 = vsel %vm999, %v1577, %v1353
      %v1595 = vsel %vm999, %v1579, %v1355
      %v1597 = vsel %vm999, %v1581, %v1357
      %v1599 = vsel %vm999, %v1583, %v1359
      %v1601 = vsel %vm999, %v1585, %v1361
      %v1603 = vsel %vm999, %v1587, %v1363
      %v1605 = vsel %vm999, %v1589, %v1365
      %v1607 = vsel %vm1016, %v1591, %v1423
      %v1609 = vsel %vm1016, %v1593, %v1425
      %v1611 = vsel %vm1016, %v1595, %v1427
      %v1613 = vsel %vm1016, %v1597, %v1429
      %v1615 = vsel %vm1016, %v1599, %v1431
      %v1617 = vsel %vm1016, %v1601, %v1433
      %v1619 = vsel %vm1016, %v1603, %v1435
      %v1621 = vsel %vm1016, %v1605, %v1437
      %v1623 = vsel %vm1033, %v1607, %v1449
      %v1625 = vsel %vm1033, %v1609, %v1451
      %v1627 = vsel %vm1033, %v1611, %v1453
      %v1629 = vsel %vm1033, %v1613, %v1455
      %v1631 = vsel %vm1033, %v1615, %v1457
      %v1633 = vsel %vm1033, %v1617, %v1459
      %v1635 = vsel %vm1033, %v1619, %v1461
      %v1637 = vsel %vm1033, %v1621, %v1463
      %v1639 = vsel %vm1050, %v1623, %v1468
      %v1641 = vsel %vm1050, %v1625, %v1470
      %v1643 = vsel %vm1050, %v1627, %v1472
      %v1645 = vsel %vm1050, %v1629, %v1474
      %v1647 = vsel %vm1050, %v1631, %v1476
      %v1649 = vsel %vm1050, %v1633, %v1478
      %v1651 = vsel %vm1050, %v1635, %v1480
      %v1653 = vsel %vm1050, %v1637, %v1482
      %v1655 = vsel %vm1067, %v1639, %v1491
      %v1657 = vsel %vm1067, %v1641, %v1493
      %v1659 = vsel %vm1067, %v1643, %v1495
      %v1661 = vsel %vm1067, %v1645, %v1497
      %v1663 = vsel %vm1067, %v1647, %v1499
      %v1665 = vsel %vm1067, %v1649, %v1501
      %v1667 = vsel %vm1067, %v1651, %v1503
      %v1669 = vsel %vm1067, %v1653, %v1505
      %v1672 = vsel %vm957, %v1274, %v1520
      %v1675 = vsel %vm957, %v1281, %v1522
      %v1678 = vsel %vm957, %v1288, %v1524
      %v1681 = vsel %vm957, %v1295, %v1526
      %v1684 = vsel %vm957, %v1302, %v1528
      %v1687 = vsel %vm957, %v1309, %v1530
      %v1690 = vsel %vm957, %v1447, %v1532
      %v1693 = vsel %vm957, %v1515, %v1534
      %v1695 = vsel %vm982, %v1672, %v1543
      %v1697 = vsel %vm982, %v1675, %v1545
      %v1699 = vsel %vm982, %v1678, %v1547
      %v1701 = vsel %vm982, %v1681, %v1549
      %v1703 = vsel %vm982, %v1684, %v1551
      %v1705 = vsel %vm982, %v1687, %v1553
      %v1707 = vsel %vm982, %v1690, %v1555
      %v1709 = vsel %vm982, %v1693, %v1557
      %v1710 = vshrl.u32 %v1655, 16
      %v1712 = vshll.u32 %v1655, 16
      %v1714 = vrot.slane %v1712, 1
      %v1715 = vor.u32 %v1710, %v1714
      %v1716 = vshrl.u32 %v1695, 16
      %v1718 = vshll.u32 %v1695, 16
      %v1720 = vrot.slane %v1718, 1
      %v1721 = vor.u32 %v1716, %v1720
      %v1722 = vshrl.u32 %v1657, 16
      %v1724 = vshll.u32 %v1657, 16
      %v1726 = vrot.slane %v1724, 1
      %v1727 = vor.u32 %v1722, %v1726
      %v1728 = vshrl.u32 %v1697, 16
      %v1730 = vshll.u32 %v1697, 16
      %v1732 = vrot.slane %v1730, 1
      %v1733 = vor.u32 %v1728, %v1732
      %v1734 = vshrl.u32 %v1659, 16
      %v1736 = vshll.u32 %v1659, 16
      %v1738 = vrot.slane %v1736, 1
      %v1739 = vor.u32 %v1734, %v1738
      %v1740 = vshrl.u32 %v1699, 16
      %v1742 = vshll.u32 %v1699, 16
      %v1744 = vrot.slane %v1742, 1
      %v1745 = vor.u32 %v1740, %v1744
      %v1746 = vshrl.u32 %v1661, 16
      %v1748 = vshll.u32 %v1661, 16
      %v1750 = vrot.slane %v1748, 1
      %v1751 = vor.u32 %v1746, %v1750
      %v1752 = vshrl.u32 %v1701, 16
      %v1754 = vshll.u32 %v1701, 16
      %v1756 = vrot.slane %v1754, 1
      %v1757 = vor.u32 %v1752, %v1756
      %v1758 = vshrl.u32 %v1663, 16
      %v1760 = vshll.u32 %v1663, 16
      %v1762 = vrot.slane %v1760, 1
      %v1763 = vor.u32 %v1758, %v1762
      %v1764 = vshrl.u32 %v1703, 16
      %v1766 = vshll.u32 %v1703, 16
      %v1768 = vrot.slane %v1766, 1
      %v1769 = vor.u32 %v1764, %v1768
      %v1770 = vshrl.u32 %v1665, 16
      %v1772 = vshll.u32 %v1665, 16
      %v1774 = vrot.slane %v1772, 1
      %v1775 = vor.u32 %v1770, %v1774
      %v1776 = vshrl.u32 %v1705, 16
      %v1778 = vshll.u32 %v1705, 16
      %v1780 = vrot.slane %v1778, 1
      %v1781 = vor.u32 %v1776, %v1780
      %v1782 = vshrl.u32 %v1667, 16
      %v1784 = vshll.u32 %v1667, 16
      %v1786 = vrot.slane %v1784, 1
      %v1787 = vor.u32 %v1782, %v1786
      %v1788 = vshrl.u32 %v1707, 16
      %v1790 = vshll.u32 %v1707, 16
      %v1792 = vrot.slane %v1790, 1
      %v1793 = vor.u32 %v1788, %v1792
      %v1794 = vshrl.u32 %v1669, 16
      %v1796 = vshll.u32 %v1669, 16
      %v1798 = vrot.slane %v1796, 1
      %v1799 = vor.u32 %v1794, %v1798
      %v1800 = vshrl.u32 %v1709, 16
      %v1802 = vshll.u32 %v1709, 16
      %v1804 = vrot.slane %v1802, 1
      %v1805 = vor.u32 %v1800, %v1804
      %v1822 = vunpack.c.l.b16 %v1069
      %v1823 = vunpack.c.l.b16 %v1189
      %v1824 = vunpack.c.l.b16 %v1715
      %v1825 = vunpack.c.l.b16 %v1721
      %v1826 = vunpack.c.l.b16 %v1071
      %v1827 = vunpack.c.l.b16 %v1191
      %v1828 = vunpack.c.l.b16 %v1727
      %v1829 = vunpack.c.l.b16 %v1733
      %v1830 = vunpack.c.l.b16 %v1073
      %v1831 = vunpack.c.l.b16 %v1193
      %v1832 = vunpack.c.l.b16 %v1739
      %v1833 = vunpack.c.l.b16 %v1745
      %v1834 = vunpack.c.l.b16 %v1075
      %v1835 = vunpack.c.l.b16 %v1195
      %v1836 = vunpack.c.l.b16 %v1751
      %v1837 = vunpack.c.l.b16 %v1757
      %v1838 = vunpack.c.l.b16 %v1077
      %v1839 = vunpack.c.l.b16 %v1197
      %v1840 = vunpack.c.l.b16 %v1763
      %v1841 = vunpack.c.l.b16 %v1769
      %v1842 = vunpack.c.l.b16 %v1079
      %v1843 = vunpack.c.l.b16 %v1199
      %v1844 = vunpack.c.l.b16 %v1775
      %v1845 = vunpack.c.l.b16 %v1781
      %v1846 = vunpack.c.l.b16 %v1081
      %v1847 = vunpack.c.l.b16 %v1201
      %v1848 = vunpack.c.l.b16 %v1787
      %v1849 = vunpack.c.l.b16 %v1793
      %v1850 = vunpack.c.l.b16 %v1083
      %v1851 = vunpack.c.l.b16 %v1203
      %v1852 = vunpack.c.l.b16 %v1799
      %v1853 = vunpack.c.l.b16 %v1805
      %v1854 = vld [vmem:[%s4] sm:$0xf]
      %v1855 = vld [vmem:[%s4 + $0x4] sm:$0xf]
      %v1856 = vld [vmem:[%s4 + $0x8] sm:$0xf]
      %v1857 = vld [vmem:[%s4 + $0xc] sm:$0xf]
      %v1858 = vld [vmem:[%s4 + $0x10] sm:$0xf]
      %v1859 = vld [vmem:[%s4 + $0x14] sm:$0xf]
      %v1860 = vld [vmem:[%s4 + $0x18] sm:$0xf]
      %v1861 = vld [vmem:[%s4 + $0x1c] sm:$0xf]
      %v1862 = vld [vmem:[%s4 + $0x20] sm:$0xf]
      %v1863 = vld [vmem:[%s4 + $0x24] sm:$0xf]
      %v1864 = vld [vmem:[%s4 + $0x28] sm:$0xf]
      %v1865 = vld [vmem:[%s4 + $0x2c] sm:$0xf]
      %v1866 = vld [vmem:[%s4 + $0x30] sm:$0xf]
      %v1867 = vld [vmem:[%s4 + $0x34] sm:$0xf]
      %v1868 = vld [vmem:[%s4 + $0x38] sm:$0xf]
      %v1869 = vld [vmem:[%s4 + $0x3c] sm:$0xf]
      %v1870 = vld [vmem:[%s4 + $0x40] sm:$0xf]
      %v1871 = vld [vmem:[%s4 + $0x44] sm:$0xf]
      %v1872 = vld [vmem:[%s4 + $0x48] sm:$0xf]
      %v1873 = vld [vmem:[%s4 + $0x4c] sm:$0xf]
      %v1874 = vld [vmem:[%s4 + $0x50] sm:$0xf]
      %v1875 = vld [vmem:[%s4 + $0x54] sm:$0xf]
      %v1876 = vld [vmem:[%s4 + $0x58] sm:$0xf]
      %v1877 = vld [vmem:[%s4 + $0x5c] sm:$0xf]
      %v1878 = vld [vmem:[%s4 + $0x60] sm:$0xf]
      %v1879 = vld [vmem:[%s4 + $0x64] sm:$0xf]
      %v1880 = vld [vmem:[%s4 + $0x68] sm:$0xf]
      %v1881 = vld [vmem:[%s4 + $0x6c] sm:$0xf]
      %v1882 = vld [vmem:[%s4 + $0x70] sm:$0xf]
      %v1883 = vld [vmem:[%s4 + $0x74] sm:$0xf]
      %v1884 = vld [vmem:[%s4 + $0x78] sm:$0xf]
      %v1885 = vld [vmem:[%s4 + $0x7c] sm:$0xf]
      %v1886 = vld [vmem:[%s4 + $0x80] sm:$0xf]
      %v1887 = vld [vmem:[%s4 + $0x84] sm:$0xf]
      %v1888 = vld [vmem:[%s4 + $0x88] sm:$0xf]
      %v1889 = vld [vmem:[%s4 + $0x8c] sm:$0xf]
      %v1890 = vld [vmem:[%s4 + $0x90] sm:$0xf]
      %v1891 = vld [vmem:[%s4 + $0x94] sm:$0xf]
      %v1892 = vld [vmem:[%s4 + $0x98] sm:$0xf]
      %v1893 = vld [vmem:[%s4 + $0x9c] sm:$0xf]
      %v1894 = vld [vmem:[%s4 + $0xa0] sm:$0xf]
      %v1895 = vld [vmem:[%s4 + $0xa4] sm:$0xf]
      %v1896 = vld [vmem:[%s4 + $0xa8] sm:$0xf]
      %v1897 = vld [vmem:[%s4 + $0xac] sm:$0xf]
      %v1898 = vld [vmem:[%s4 + $0xb0] sm:$0xf]
      %v1899 = vld [vmem:[%s4 + $0xb4] sm:$0xf]
      %v1900 = vld [vmem:[%s4 + $0xb8] sm:$0xf]
      %v1901 = vld [vmem:[%s4 + $0xbc] sm:$0xf]
      %v1902 = vld [vmem:[%s4 + $0xc0] sm:$0xf]
      %v1903 = vld [vmem:[%s4 + $0xc4] sm:$0xf]
      %v1904 = vld [vmem:[%s4 + $0xc8] sm:$0xf]
      %v1905 = vld [vmem:[%s4 + $0xcc] sm:$0xf]
      %v1906 = vld [vmem:[%s4 + $0xd0] sm:$0xf]
      %v1907 = vld [vmem:[%s4 + $0xd4] sm:$0xf]
      %v1908 = vld [vmem:[%s5] sm:$0x1]
      %v1910 = vlaneseq
      %v1911 = vshrl.u32 %v1910, 7
      %v1912 = vsub.s32 0, %v1911
      %v1913 = vrot.slane %v1908, %v1912
      %v1915 = vpack.c.b16 %v1826, %v1822
      %v1916 = vpack.c.b16 %v1827, %v1823
      %v1917 = vpack.c.b16 %v1828, %v1824
      %v1918 = vpack.c.b16 %v1829, %v1825
      %v1919 = vpack.c.b16 %v1834, %v1830
      %v1920 = vpack.c.b16 %v1835, %v1831
      %v1921 = vpack.c.b16 %v1836, %v1832
      %v1922 = vpack.c.b16 %v1837, %v1833
      %v1923 = vpack.c.b16 %v1842, %v1838
      %v1924 = vpack.c.b16 %v1843, %v1839
      %v1925 = vpack.c.b16 %v1844, %v1840
      %v1926 = vpack.c.b16 %v1845, %v1841
      %v1927 = vpack.c.b16 %v1850, %v1846
      %v1928 = vpack.c.b16 %v1851, %v1847
      %v1929 = vpack.c.b16 %v1852, %v1848
      %v1930 = vpack.c.b16 %v1853, %v1849
      %v1997 = vunpack.c.l.b16 %v1854
      %v1998 = vunpack.c.l.b16 %v1855
      %v1999 = vunpack.c.l.b16 %v1856
      %v2000 = vunpack.c.l.b16 %v1857
      %v2001 = vunpack.c.l.b16 %v1858
      %v2002 = vunpack.c.l.b16 %v1859
      %v2003 = vunpack.c.l.b16 %v1860
      %v2004 = vunpack.c.l.b16 %v1861
      %v2005 = vunpack.c.l.b16 %v1862
      %v2006 = vunpack.c.l.b16 %v1863
      %v2007 = vunpack.c.l.b16 %v1864
      %v2008 = vunpack.c.l.b16 %v1865
      %v2009 = vunpack.c.l.b16 %v1866
      %v2010 = vunpack.c.l.b16 %v1867
      %v2011 = vunpack.c.l.b16 %v1868
      %v2012 = vunpack.c.l.b16 %v1869
      %v2013 = vunpack.c.l.b16 %v1870
      %v2014 = vunpack.c.l.b16 %v1871
      %v2015 = vunpack.c.l.b16 %v1872
      %v2016 = vunpack.c.l.b16 %v1873
      %v2017 = vunpack.c.l.b16 %v1874
      %v2018 = vunpack.c.l.b16 %v1875
      %v2019 = vunpack.c.l.b16 %v1876
      %v2020 = vunpack.c.l.b16 %v1877
      %v2021 = vunpack.c.l.b16 %v1878
      %v2022 = vunpack.c.l.b16 %v1879
      %v2023 = vunpack.c.l.b16 %v1880
      %v2024 = vunpack.c.l.b16 %v1881
      %v2025 = vunpack.c.l.b16 %v1882
      %v2026 = vunpack.c.l.b16 %v1883
      %v2027 = vunpack.c.l.b16 %v1884
      %v2028 = vunpack.c.l.b16 %v1885
      %v2029 = vunpack.c.l.b16 %v1886
      %v2030 = vunpack.c.l.b16 %v1887
      %v2031 = vunpack.c.l.b16 %v1888
      %v2032 = vunpack.c.l.b16 %v1889
      %v2033 = vunpack.c.l.b16 %v1890
      %v2034 = vunpack.c.l.b16 %v1891
      %v2035 = vunpack.c.l.b16 %v1892
      %v2036 = vunpack.c.l.b16 %v1893
      %v2037 = vunpack.c.l.b16 %v1894
      %v2038 = vunpack.c.l.b16 %v1895
      %v2039 = vunpack.c.l.b16 %v1896
      %v2040 = vunpack.c.l.b16 %v1897
      %v2041 = vunpack.c.l.b16 %v1898
      %v2042 = vunpack.c.l.b16 %v1899
      %v2043 = vunpack.c.l.b16 %v1900
      %v2044 = vunpack.c.l.b16 %v1901
      %v2045 = vunpack.c.l.b16 %v1902
      %v2046 = vunpack.c.l.b16 %v1903
      %v2047 = vunpack.c.l.b16 %v1904
      %v2048 = vunpack.c.l.b16 %v1905
      %v2049 = vunpack.c.l.b16 %v1906
      %v2050 = vunpack.c.l.b16 %v1907
      %v2051 = vpack.c.b16 %v1998, %v1997
      %v2052 = vpack.c.b16 %v2000, %v1999
      %v2053 = vpack.c.b16 %v2002, %v2001
      %v2054 = vpack.c.b16 %v2004, %v2003
      %v2055 = vpack.c.b16 %v2006, %v2005
      %v2056 = vpack.c.b16 %v2008, %v2007
      %v2057 = vpack.c.b16 %v2010, %v2009
      %v2058 = vpack.c.b16 %v2012, %v2011
      %v2059 = vpack.c.b16 %v2014, %v2013
      %v2060 = vpack.c.b16 %v2016, %v2015
      %v2061 = vpack.c.b16 %v2018, %v2017
      %v2062 = vpack.c.b16 %v2020, %v2019
      %v2063 = vpack.c.b16 %v2022, %v2021
      %v2064 = vpack.c.b16 %v2024, %v2023
      %v2065 = vpack.c.b16 %v2026, %v2025
      %v2066 = vpack.c.b16 %v2028, %v2027
      %v2067 = vpack.c.b16 %v2030, %v2029
      %v2068 = vpack.c.b16 %v2032, %v2031
      %v2069 = vpack.c.b16 %v2034, %v2033
      %v2070 = vpack.c.b16 %v2036, %v2035
      %v2071 = vpack.c.b16 %v2038, %v2037
      %v2072 = vpack.c.b16 %v2040, %v2039
      %v2073 = vpack.c.b16 %v2042, %v2041
      %v2074 = vpack.c.b16 %v2044, %v2043
      %v2075 = vpack.c.b16 %v2046, %v2045
      %v2076 = vpack.c.b16 %v2048, %v2047
      %v2077 = vpack.c.b16 %v2050, %v2049
      %v2106 = vsel %vm999, %v1918, 0
      %v2109 = vsel %vm999, %v1922, 0
      %v2112 = vsel %vm999, %v1926, 0
      %v2115 = vsel %vm999, %v1930, 0
      %2117 = vmatprep.subr.bf16.mxu0 0
      %2118 = vmatpush1.bf16.msra.mxu0 %v2058
      %2119 = vmatprep.subr.bf16.mxu0 0
      %2120 = vmatpush1.bf16.msra.mxu0 %v2057
      %2121 = vmatprep.subr.bf16.mxu0 0
      %2122 = vmatpush1.bf16.msra.mxu0 %v2056
      %2123 = vmatprep.subr.bf16.mxu0 0
      %2124 = vmatpush1.bf16.msra.mxu0 %v2055
      %2125 = vmatprep.subr.bf16.mxu0 0
      %2126 = vmatpush1.bf16.msra.mxu0 %v2054
      %2127 = vmatprep.subr.bf16.mxu0 0
      %2128 = vmatpush1.bf16.msra.mxu0 %v2053
      %2129 = vmatprep.subr.bf16.mxu0 0
      %2130 = vmatpush1.bf16.msra.mxu0 %v2052
      %2131 = vmatprep.subr.bf16.mxu0 0
      %2132 = vmatpush1.bf16.msra.mxu0 %v2051
      %2133 = vmatprep.subr.bf16.mxu0 0
      %2134 = vmatpush2.bf16.msra.mxu0 %v2066
      %2135 = vmatprep.subr.bf16.mxu0 0
      %2136 = vmatpush2.bf16.msra.mxu0 %v2065
      %2137 = vmatprep.subr.bf16.mxu0 0
      %2138 = vmatpush2.bf16.msra.mxu0 %v2064
      %2139 = vmatprep.subr.bf16.mxu0 0
      %2140 = vmatpush2.bf16.msra.mxu0 %v2063
      %2141 = vmatprep.subr.bf16.mxu0 0
      %2142 = vmatpush2.bf16.msra.mxu0 %v2062
      %2143 = vmatprep.subr.bf16.mxu0 0
      %2144 = vmatpush2.bf16.msra.mxu0 %v2061
      %2145 = vmatprep.subr.bf16.mxu0 0
      %2146 = vmatpush2.bf16.msra.mxu0 %v2060
      %2147 = vmatprep.subr.bf16.mxu0 0
      %2148 = vmatpush2.bf16.msra.mxu0 %v2059
      %2149 = vmatprep.mubr.bf16.mxu0 %v1916
      %2150 = vmatmul.mubr.bf16.gmra.mxu0 %v1915
      %v2151 = vpop.f32.mrf.mxu0
      %v2152 = vadd.f32 %v1913, %v2151
      %v2153 = vpop.f32.mrf.mxu0
      %v2154 = vpop.f32.mrf.mxu0
      %v2155 = vadd.f32 %v1913, %v2154
      %v2156 = vpop.f32.mrf.mxu0
      %2157 = vmatprep.mubr.bf16.mxu0 %v1920
      %2158 = vmatmul.mubr.bf16.gmra.mxu0 %v1919
      %v2159 = vpop.f32.mrf.mxu0
      %v2160 = vadd.f32 %v1913, %v2159
      %v2161 = vpop.f32.mrf.mxu0
      %v2162 = vpop.f32.mrf.mxu0
      %v2163 = vadd.f32 %v1913, %v2162
      %v2164 = vpop.f32.mrf.mxu0
      %2165 = vmatprep.mubr.bf16.mxu0 %v1924
      %2166 = vmatmul.mubr.bf16.gmra.mxu0 %v1923
      %v2167 = vpop.f32.mrf.mxu0
      %v2168 = vadd.f32 %v1913, %v2167
      %v2169 = vpop.f32.mrf.mxu0
      %v2170 = vpop.f32.mrf.mxu0
      %v2171 = vadd.f32 %v1913, %v2170
      %v2172 = vpop.f32.mrf.mxu0
      %2173 = vmatprep.mubr.bf16.mxu0 %v1928
      %2174 = vmatmul.mubr.bf16.gmra.mxu0 %v1927
      %v2175 = vpop.f32.mrf.mxu0
      %v2176 = vadd.f32 %v1913, %v2175
      %v2177 = vpop.f32.mrf.mxu0
      %v2178 = vpop.f32.mrf.mxu0
      %v2179 = vadd.f32 %v1913, %v2178
      %v2180 = vpop.f32.mrf.mxu0
      %2181 = vdwg.mxu0
      %2182 = vmatprep.subr.bf16.mxu0 0
      %2183 = vmatpush1.bf16.msra.mxu0 %v2074
      %2184 = vmatprep.subr.bf16.mxu0 0
      %2185 = vmatpush1.bf16.msra.mxu0 %v2073
      %2186 = vmatprep.subr.bf16.mxu0 0
      %2187 = vmatpush1.bf16.msra.mxu0 %v2072
      %2188 = vmatprep.subr.bf16.mxu0 0
      %2189 = vmatpush1.bf16.msra.mxu0 %v2071
      %2190 = vmatprep.subr.bf16.mxu0 0
      %2191 = vmatpush1.bf16.msra.mxu0 %v2070
      %2192 = vmatprep.subr.bf16.mxu0 0
      %2193 = vmatpush1.bf16.msra.mxu0 %v2069
      %2194 = vmatprep.subr.bf16.mxu0 0
      %2195 = vmatpush1.bf16.msra.mxu0 %v2068
      %2196 = vmatprep.subr.bf16.mxu0 0
      %2197 = vmatpush1.bf16.msra.mxu0 %v2067
      %2198 = vmatprep.subr.bf16.mxu0 0
      %2199 = vmatpush2.bf16.msra.mxu0 0
      %2200 = vmatprep.subr.bf16.mxu0 0
      %2201 = vmatpush2.bf16.msra.mxu0 0
      %2202 = vmatprep.subr.bf16.mxu0 0
      %2203 = vmatpush2.bf16.msra.mxu0 0
      %2204 = vmatprep.subr.bf16.mxu0 0
      %2205 = vmatpush2.bf16.msra.mxu0 0
      %2206 = vmatprep.subr.bf16.mxu0 0
      %2207 = vmatpush2.bf16.msra.mxu0 0
      %2208 = vmatprep.subr.bf16.mxu0 0
      %2209 = vmatpush2.bf16.msra.mxu0 %v2077
      %2210 = vmatprep.subr.bf16.mxu0 0
      %2211 = vmatpush2.bf16.msra.mxu0 %v2076
      %2212 = vmatprep.subr.bf16.mxu0 0
      %2213 = vmatpush2.bf16.msra.mxu0 %v2075
      %2214 = vmatprep.mubr.bf16.mxu0 %v2106
      %2215 = vmatmul.mubr.bf16.gmra.mxu0 %v1917
      %v2216 = vpop.f32.mrf.mxu0
      %v2217 = vadd.f32 %v2152, %v2216
      %v2218 = vpop.f32.mrf.mxu0
      %v2219 = vpop.f32.mrf.mxu0
      %v2220 = vadd.f32 %v2155, %v2219
      %v2221 = vpop.f32.mrf.mxu0
      %2222 = vmatprep.mubr.bf16.mxu0 %v2109
      %2223 = vmatmul.mubr.bf16.gmra.mxu0 %v1921
      %v2224 = vpop.f32.mrf.mxu0
      %v2225 = vadd.f32 %v2160, %v2224
      %v2226 = vpop.f32.mrf.mxu0
      %v2227 = vpop.f32.mrf.mxu0
      %v2228 = vadd.f32 %v2163, %v2227
      %v2229 = vpop.f32.mrf.mxu0
      %2230 = vmatprep.mubr.bf16.mxu0 %v2112
      %2231 = vmatmul.mubr.bf16.gmra.mxu0 %v1925
      %v2232 = vpop.f32.mrf.mxu0
      %v2233 = vadd.f32 %v2168, %v2232
      %v2234 = vpop.f32.mrf.mxu0
      %v2235 = vpop.f32.mrf.mxu0
      %v2236 = vadd.f32 %v2171, %v2235
      %v2237 = vpop.f32.mrf.mxu0
      %2238 = vmatprep.mubr.bf16.mxu0 %v2115
      %2239 = vmatmul.mubr.bf16.gmra.mxu0 %v1929
      %v2240 = vpop.f32.mrf.mxu0
      %v2241 = vadd.f32 %v2176, %v2240
      %v2242 = vpop.f32.mrf.mxu0
      %v2243 = vpop.f32.mrf.mxu0
      %v2244 = vadd.f32 %v2179, %v2243
      %v2245 = vpop.f32.mrf.mxu0
      %2246 = vdwg.mxu0
      %v2247 = vld [vmem:[%s394] sm:$0xff]
      %v2248 = vld [vmem:[%s394 + $0x8] sm:$0xff]
      %v2249 = vld [vmem:[%s394 + $0x10] sm:$0xff]
      %v2250 = vld [vmem:[%s394 + $0x18] sm:$0xff]
      %v2251 = vld [vmem:[%s394 + $0x20] sm:$0xff]
      %v2252 = vld [vmem:[%s394 + $0x28] sm:$0xff]
      %v2253 = vld [vmem:[%s394 + $0x30] sm:$0xff]
      %v2254 = vld [vmem:[%s394 + $0x38] sm:$0xff]
      %2263 = vrot.lane.b32.xlu0 %v2247, 4
      %v2264 = vpop.permute.xlu0 %2263
      %2265 = vrot.lane.b32.xlu0 %v2248, 4
      %v2266 = vpop.permute.xlu0 %2265
      %2267 = vrot.lane.b32.xlu0 %v2249, 4
      %v2268 = vpop.permute.xlu0 %2267
      %2269 = vrot.lane.b32.xlu0 %v2250, 4
      %v2270 = vpop.permute.xlu0 %2269
      %2271 = vrot.lane.b32.xlu0 %v2251, 4
      %v2272 = vpop.permute.xlu0 %2271
      %2273 = vrot.lane.b32.xlu0 %v2252, 4
      %v2274 = vpop.permute.xlu0 %2273
      %2275 = vrot.lane.b32.xlu0 %v2253, 4
      %v2276 = vpop.permute.xlu0 %2275
      %2277 = vrot.lane.b32.xlu0 %v2254, 4
      %v2278 = vpop.permute.xlu0 %2277
      %vm2287 = vcmask 31744
      %v2288 = vsel %vm2287, %v2217, %v2264
      %v2289 = vsel %vm2287, %v2220, %v2266
      %v2290 = vsel %vm2287, %v2225, %v2268
      %v2291 = vsel %vm2287, %v2228, %v2270
      %v2292 = vsel %vm2287, %v2233, %v2272
      %v2293 = vsel %vm2287, %v2236, %v2274
      %v2294 = vsel %vm2287, %v2241, %v2276
      %v2295 = vsel %vm2287, %v2244, %v2278
      %vm2296 = vcmask 64512
      %2297 = vst.msk [vmem:[%s403] sm:$0xff] %vm2296, %v2288
      %2298 = vst.msk [vmem:[%s403 + $0x8] sm:$0xff] %vm2296, %v2289
      %2299 = vst.msk [vmem:[%s403 + $0x10] sm:$0xff] %vm2296, %v2290
      %2300 = vst.msk [vmem:[%s403 + $0x18] sm:$0xff] %vm2296, %v2291
      %2301 = vst.msk [vmem:[%s403 + $0x20] sm:$0xff] %vm2296, %v2292
      %2302 = vst.msk [vmem:[%s403 + $0x28] sm:$0xff] %vm2296, %v2293
      %2303 = vst.msk [vmem:[%s403 + $0x30] sm:$0xff] %vm2296, %v2294
      %2304 = vst.msk [vmem:[%s403 + $0x38] sm:$0xff] %vm2296, %v2295
      %p2305 = scmp.lt.s32.totalorder %s21, 1
      %s2306 = scalar_select %p2305, %s21, 1
      %p2307 = scmp.lt.s32.totalorder %s22, 7
      %s2308 = scalar_select %p2307, %s22, 7
      %s2309 = smul.addr %s2308, 8
      %s2310 = smul.addr %s2306, 64
      %s2311 = sadd.s32 %s2309, %s2310
      %s2312 = smul.addr %s2311, 8
      %s2313 = scalar_lea.vmem %s6, %s2312
      // Predicated region
      $region45: #{bottleneck_forward.3} parent=43 // pred_check
        %p2314 = pneg %p207
      $region46: #{bottleneck_forward.3} parent=43 // pred_check_branch
        %2316 = sbr.rel (%p2314) target = $region48
      $region47: #{bottleneck_forward.3} parent=43 // pred_region
        _
      $region48: #{bottleneck_forward.3} parent=43 // pred_fallthru
        _
    $region44: #{bottleneck_forward.3} parent=5 // pred_fallthru
      _
    %p2317 = scmp.le.s32.totalorder 2, %s12
    // Predicated region
    $region49: #{bottleneck_forward.3} parent=5 // pred_check
      %p2318 = pneg %p2317
    $region50: #{bottleneck_forward.3} parent=5 // pred_check_branch
      %2320 = sbr.rel (%p2318) target = $region52
    $region51: #{bottleneck_forward.3} parent=5 // pred_region
      %s2321 = ssub.s32 %s12, 2
      // Predicated region
      $region53: #{bottleneck_forward.3} parent=51 // pred_check
        %p2322 = pneg %p213
      $region54: #{bottleneck_forward.3} parent=51 // pred_check_branch
        %2324 = sbr.rel (%p2322) target = $region56
      $region55: #{bottleneck_forward.3} parent=51 // pred_region
        %p2325 = scmp.lt.s32.totalorder %s23, 1
        %s2326 = scalar_select %p2325, %s23, 1
        %p2327 = scmp.lt.s32.totalorder %s24, 7
        %s2328 = scalar_select %p2327, %s24, 7
        %s2329 = smul.addr %s2328, 8
        %s2330 = smul.addr %s2326, 64
        %s2331 = sadd.s32 %s2329, %s2330
        %s2332 = smul.addr %s2331, 8
        %s2333 = scalar_lea.vmem %s6, %s2332
      $region56: #{bottleneck_forward.3} parent=51 // pred_fallthru
        _
    $region52: #{bottleneck_forward.3} parent=5 // pred_fallthru
      _
  $region6: #{bottleneck_forward.3} parent=0 // loop_footer
    %s16 = sadd.s32 1, %s12
  $region7: #{bottleneck_forward.3} parent=0 // loop_footer_branch
    %11 = sbr.rel target = $region3
  $region8: #{bottleneck_forward.3} parent=0 // loop_exit
    _

</llo_original>
